<compile_context>
chip_gen: v6e
topology: v6e:2x2x1
jax: 0.10.0
libtpu: 0.0.40
codegen_flags: <defaults>
</compile_context>

<pallas_src>
import functools

import jax
import jax.numpy as jnp
from jax import lax
from jax.experimental import pallas as pl
from jax.experimental.pallas import tpu as pltpu

F32 = jnp.float32
GN_EPS = 1e-5
GN_GROUPS = 8


def _round_up(x, m):
    return (x + m - 1) // m * m


# ---------------------------------------------------------------------------
# Fused DoubleConv kernel: one batch sample per grid step.
# ---------------------------------------------------------------------------
def _double_conv_kernel(p1_ref, w1_ref, s1_ref, b1_ref, m1_ref,
                        w2t_ref, s2_ref, b2_ref, m2_ref,
                        o_ref, pad_scr, p2_scr,
                        *, H, W, c_mid, c_out, hw_pad):
    hw = H * W

    # ---- conv1: patches pre-extracted in the wrapper -> single MXU matmul ----
    h = jnp.dot(p1_ref[...], w1_ref[...], preferred_element_type=F32)      # (HW, C_mid)

    # ---- GroupNorm(8) + ReLU, channel-last.  m1 = same-group mask / count. ----
    csum = jnp.sum(h, axis=0, keepdims=True)                               # (1, C_mid)
    csq = jnp.sum(h * h, axis=0, keepdims=True)                            # (1, C_mid)
    mean = jnp.dot(csum, m1_ref[...], preferred_element_type=F32)          # E[x]
    msq = jnp.dot(csq, m1_ref[...], preferred_element_type=F32)            # E[x^2]
    var = jnp.maximum(msq - mean * mean, 0.0)                              # biased, clamped
    scale = lax.rsqrt(var + GN_EPS) * s1_ref[...]                          # (1, C_mid)
    shift = b1_ref[...] - mean * scale
    h = jnp.maximum(h * scale + shift, 0.0)                                # (HW, C_mid)

    # ---- conv2 im2col: padded VMEM scratch + per-tap ref stores (no lane concats) ----
    pad_scr[...] = jnp.zeros_like(pad_scr)                                 # zero 1-px border
    pad_scr[1:H + 1, 1:W + 1, :] = h.reshape(H, W, c_mid)
    for t in range(9):
        dy, dx = t // 3, t % 3
        p2_scr[:, t * c_mid:(t + 1) * c_mid] = (
            pad_scr[dy:dy + H, dx:dx + W, :].reshape(hw, c_mid))

    # ---- conv2: (C_out, 9*C_mid) @ (HW, 9*C_mid)^T -> channel-first (C_out, HW) ----
    h2 = lax.dot_general(w2t_ref[...], p2_scr[...], (((1,), (1,)), ((), ())),
                         preferred_element_type=F32)                       # (C_out, HW)

    # ---- GroupNorm(8) + ReLU, channel-first ----
    csum2 = jnp.sum(h2, axis=1, keepdims=True)                             # (C_out, 1)
    csq2 = jnp.sum(h2 * h2, axis=1, keepdims=True)
    mean2 = jnp.dot(m2_ref[...], csum2, preferred_element_type=F32)
    msq2 = jnp.dot(m2_ref[...], csq2, preferred_element_type=F32)
    var2 = jnp.maximum(msq2 - mean2 * mean2, 0.0)
    scale2 = lax.rsqrt(var2 + GN_EPS) * s2_ref[...]                        # (C_out, 1)
    shift2 = b2_ref[...] - mean2 * scale2
    h2 = jnp.maximum(h2 * scale2 + shift2, 0.0)

    if hw == hw_pad:
        o_ref[...] = h2                                                    # unmasked lane-dense store
    else:
        # TODO(synk): slower masked-store fallback when H*W is not a multiple of 128.
        o_ref[...] = jnp.zeros_like(o_ref)
        o_ref[:, :hw] = h2


def _group_mask_over_count(c, groups, count):
    g = jnp.arange(c, dtype=jnp.int32) // (c // groups)
    return (g[:, None] == g[None, :]).astype(F32) / float(count)           # (C, C)


def double_conv(x, w1_oihw, g1_w, g1_b, w2_oihw, g2_w, g2_b, *, groups=GN_GROUPS):
    """DoubleConv forward.  x: (B, C_in, H, W) NCHW; conv weights in torch OIHW layout;
    GroupNorm affine params as 1-D (C,) arrays.  Returns (B, C_out, H, W) f32."""
    B, C_in, H, W = x.shape
    C_mid = w1_oihw.shape[0]
    C_out = w2_oihw.shape[0]
    assert C_mid % groups == 0 and C_out % groups == 0
    HW = H * W
    HWp = _round_up(HW, 128)

    # ---- layout plumbing (XLA side) ----
    # conv1 im2col hoisted out of the kernel: (B, HW, 9*C_in), lane order (ky, kx, c_in).
    x_cl = jnp.transpose(x, (0, 2, 3, 1)).astype(F32)                      # (B, H, W, C_in)
    xp = jnp.pad(x_cl, ((0, 0), (1, 1), (1, 1), (0, 0)))                   # (B, H+2, W+2, C_in)
    taps = [xp[:, dy:dy + H, dx:dx + W, :] for dy in range(3) for dx in range(3)]
    patches1 = jnp.concatenate(taps, axis=-1).reshape(B, HW, 9 * C_in)

    # conv1 weight matrix: rows ordered (ky, kx, c_in) to match the patch order.
    w1 = jnp.transpose(w1_oihw, (2, 3, 1, 0)).reshape(9 * C_in, C_mid).astype(F32)
    # conv2 weight matrix, pre-transposed: (C_out, 9*C_mid), cols ordered (ky, kx, c_mid).
    w2t = jnp.transpose(w2_oihw, (0, 2, 3, 1)).reshape(C_out, 9 * C_mid).astype(F32)

    s1 = g1_w.reshape(1, C_mid).astype(F32)
    b1 = g1_b.reshape(1, C_mid).astype(F32)
    s2 = g2_w.reshape(C_out, 1).astype(F32)
    b2 = g2_b.reshape(C_out, 1).astype(F32)
    m1 = _group_mask_over_count(C_mid, groups, HW * (C_mid // groups))     # (C_mid, C_mid)
    m2 = _group_mask_over_count(C_out, groups, HW * (C_out // groups))     # (C_out, C_out)

    kernel = functools.partial(_double_conv_kernel, H=H, W=W,
                               c_mid=C_mid, c_out=C_out, hw_pad=HWp)
    wspec = lambda r, c: pl.BlockSpec((r, c), lambda b: (0, 0))

    out = pl.pallas_call(
        kernel,
        out_shape=jax.ShapeDtypeStruct((B, C_out, HWp), F32),
        grid=(B,),
        in_specs=[
            pl.BlockSpec((None, HW, 9 * C_in), lambda b: (b, 0, 0)),
            wspec(9 * C_in, C_mid), wspec(1, C_mid), wspec(1, C_mid),
            wspec(C_mid, C_mid),
            wspec(C_out, 9 * C_mid), wspec(C_out, 1), wspec(C_out, 1),
            wspec(C_out, C_out),
        ],
        out_specs=pl.BlockSpec((None, C_out, HWp), lambda b: (b, 0, 0)),
        scratch_shapes=[
            pltpu.VMEM((H + 2, W + 2, C_mid), F32),    # zero-padded GN1 output
            pltpu.VMEM((HW, 9 * C_mid), F32),          # conv2 im2col patches
        ],
        compiler_params=pltpu.CompilerParams(
            dimension_semantics=("parallel",),
            vmem_limit_bytes=64 * 1024 * 1024),
    )(patches1, w1, s1, b1, m1, w2t, s2, b2, m2)
    return out[:, :, :HW].reshape(B, C_out, H, W)


# ---------------------------------------------------------------------------
# Pure-JAX reference (mirrors the PyTorch module) for a correctness check.
# ---------------------------------------------------------------------------
def double_conv_ref(x, w1, g1w, g1b, w2, g2w, g2b, groups=GN_GROUPS, eps=GN_EPS):
    def conv(h, w):
        return lax.conv_general_dilated(
            h, w, window_strides=(1, 1), padding=((1, 1), (1, 1)),
            dimension_numbers=("NCHW", "OIHW", "NCHW"),
            precision=lax.Precision.HIGHEST)

    def gn_relu(h, gamma, beta):
        b, c, hh, ww = h.shape
        hg = h.reshape(b, groups, c // groups, hh, ww)
        mean = jnp.mean(hg, axis=(2, 3, 4), keepdims=True)
        var = jnp.var(hg, axis=(2, 3, 4), keepdims=True)          # biased, matches torch
        hn = ((hg - mean) * lax.rsqrt(var + eps)).reshape(b, c, hh, ww)
        return jax.nn.relu(hn * gamma.reshape(1, c, 1, 1) + beta.reshape(1, c, 1, 1))

    h = gn_relu(conv(x, w1), g1w, g1b)
    return gn_relu(conv(h, w2), g2w, g2b)


if __name__ == "__main__":
    key = jax.random.PRNGKey(0)
    ks = iter(jax.random.split(key, 8))

    B, C_in, H, W = 2, 4, 16, 16
    C_mid, C_out = 32, 32                       # mid_channels defaults to out_channels

    x = jax.random.normal(next(ks), (B, C_in, H, W), F32)
    w1 = 0.2 * jax.random.normal(next(ks), (C_mid, C_in, 3, 3), F32)   # Conv2d, bias=False
    w2 = 0.2 * jax.random.normal(next(ks), (C_out, C_mid, 3, 3), F32)
    g1w = 1.0 + 0.1 * jax.random.normal(next(ks), (C_mid,), F32)       # GroupNorm affine
    g1b = 0.1 * jax.random.normal(next(ks), (C_mid,), F32)
    g2w = 1.0 + 0.1 * jax.random.normal(next(ks), (C_out,), F32)
    g2b = 0.1 * jax.random.normal(next(ks), (C_out,), F32)

    fwd = jax.jit(double_conv)
    out = fwd(x, w1, g1w, g1b, w2, g2w, g2b)
    jax.block_until_ready(out)

    assert out.shape == (B, C_out, H, W), out.shape
    assert out.dtype == jnp.float32

    ref = double_conv_ref(x, w1, g1w, g1b, w2, g2w, g2b)
    max_err = jnp.max(jnp.abs(out - ref))
    # loose tolerance to accommodate MXU f32 multi-pass vs XLA HIGHEST conv accumulation
    assert jnp.allclose(out, ref, atol=1e-2, rtol=1e-2), f"max abs err {max_err}"

    print("KERNEL_OK")
</pallas_src>

<mosaic_0001>
module attributes {stable_mosaic.version = 11 : i64} {
  func.func @_double_conv_kernel(%arg0: i32, %arg1: memref<1x256x36xf32, #tpu.memory_space<vmem>>, %arg2: memref<36x32xf32, #tpu.memory_space<vmem>>, %arg3: memref<1x32xf32, #tpu.memory_space<vmem>>, %arg4: memref<1x32xf32, #tpu.memory_space<vmem>>, %arg5: memref<32x32xf32, #tpu.memory_space<vmem>>, %arg6: memref<32x288xf32, #tpu.memory_space<vmem>>, %arg7: memref<32x1xf32, #tpu.memory_space<vmem>>, %arg8: memref<32x1xf32, #tpu.memory_space<vmem>>, %arg9: memref<32x32xf32, #tpu.memory_space<vmem>>, %arg10: memref<1x32x256xf32, #tpu.memory_space<vmem>>, %arg11: memref<18x18x32xf32, #tpu.memory_space<vmem>>, %arg12: memref<256x288xf32, #tpu.memory_space<vmem>>) attributes {dimension_semantics = [#tpu.dimension_semantics<parallel>], iteration_bounds = array<i64: 2>, scalar_prefetch = 0 : i64, scratch_operands = 2 : i64, tpu.core_type = #tpu.core_type<tc>, window_params = [{transform_indices = @transform_0, window_bounds = array<i64: 1, 256, 36>}, {pipeline_mode = #tpu.pipeline_mode<synchronous>, transform_indices = @transform_1, window_bounds = array<i64: 36, 32>}, {pipeline_mode = #tpu.pipeline_mode<synchronous>, transform_indices = @transform_2, window_bounds = array<i64: 1, 32>}, {pipeline_mode = #tpu.pipeline_mode<synchronous>, transform_indices = @transform_3, window_bounds = array<i64: 1, 32>}, {pipeline_mode = #tpu.pipeline_mode<synchronous>, transform_indices = @transform_4, window_bounds = array<i64: 32, 32>}, {pipeline_mode = #tpu.pipeline_mode<synchronous>, transform_indices = @transform_5, window_bounds = array<i64: 32, 288>}, {pipeline_mode = #tpu.pipeline_mode<synchronous>, transform_indices = @transform_6, window_bounds = array<i64: 32, 1>}, {pipeline_mode = #tpu.pipeline_mode<synchronous>, transform_indices = @transform_7, window_bounds = array<i64: 32, 1>}, {pipeline_mode = #tpu.pipeline_mode<synchronous>, transform_indices = @transform_8, window_bounds = array<i64: 32, 32>}, {transform_indices = @transform_9, window_bounds = array<i64: 1, 32, 256>}]} {
    %c0 = arith.constant 0 : index
    %c0_0 = arith.constant 0 : index
    %c0_1 = arith.constant 0 : index
    %0 = vector.load %arg1[%c0, %c0_0, %c0_1] : memref<1x256x36xf32, #tpu.memory_space<vmem>>, vector<1x256x36xf32>
    %1 = vector.shape_cast %0 : vector<1x256x36xf32> to vector<256x36xf32>
    %c0_2 = arith.constant 0 : index
    %c0_3 = arith.constant 0 : index
    %2 = vector.load %arg2[%c0_2, %c0_3] : memref<36x32xf32, #tpu.memory_space<vmem>>, vector<36x32xf32>
    %cst = arith.constant dense<0.000000e+00> : vector<256x32xf32>
    %3 = tpu.matmul %1, %2, %cst {dimension_numbers = #tpu.dot_dimension_numbers<[1], [0], [0], [1], [0, 0, 1, 1], [], []>} : vector<256x36xf32>, vector<36x32xf32>, vector<256x32xf32> -> vector<256x32xf32>
    %cst_4 = arith.constant dense<0.000000e+00> : vector<32xf32>
    %4 = vector.multi_reduction <add>, %3, %cst_4 [0] : vector<256x32xf32> to vector<32xf32>
    %5 = vector.shape_cast %4 : vector<32xf32> to vector<1x32xf32>
    %6 = arith.mulf %3, %3 : vector<256x32xf32>
    %cst_5 = arith.constant dense<0.000000e+00> : vector<32xf32>
    %7 = vector.multi_reduction <add>, %6, %cst_5 [0] : vector<256x32xf32> to vector<32xf32>
    %8 = vector.shape_cast %7 : vector<32xf32> to vector<1x32xf32>
    %c0_6 = arith.constant 0 : index
    %c0_7 = arith.constant 0 : index
    %9 = vector.load %arg5[%c0_6, %c0_7] : memref<32x32xf32, #tpu.memory_space<vmem>>, vector<32x32xf32>
    %cst_8 = arith.constant dense<0.000000e+00> : vector<1x32xf32>
    %10 = tpu.matmul %5, %9, %cst_8 {dimension_numbers = #tpu.dot_dimension_numbers<[1], [0], [0], [1], [0, 0, 1, 1], [], []>} : vector<1x32xf32>, vector<32x32xf32>, vector<1x32xf32> -> vector<1x32xf32>
    %c0_9 = arith.constant 0 : index
    %c0_10 = arith.constant 0 : index
    %11 = vector.load %arg5[%c0_9, %c0_10] : memref<32x32xf32, #tpu.memory_space<vmem>>, vector<32x32xf32>
    %cst_11 = arith.constant dense<0.000000e+00> : vector<1x32xf32>
    %12 = tpu.matmul %8, %11, %cst_11 {dimension_numbers = #tpu.dot_dimension_numbers<[1], [0], [0], [1], [0, 0, 1, 1], [], []>} : vector<1x32xf32>, vector<32x32xf32>, vector<1x32xf32> -> vector<1x32xf32>
    %13 = arith.mulf %10, %10 : vector<1x32xf32>
    %14 = arith.subf %12, %13 : vector<1x32xf32>
    %cst_12 = arith.constant 0.000000e+00 : f32
    %15 = vector.broadcast %cst_12 : f32 to vector<1x32xf32>
    %16 = arith.maximumf %14, %15 : vector<1x32xf32>
    %cst_13 = arith.constant 9.99999974E-6 : f32
    %17 = vector.broadcast %cst_13 : f32 to vector<1x32xf32>
    %18 = arith.addf %16, %17 : vector<1x32xf32>
    %19 = math.rsqrt %18 : vector<1x32xf32>
    %c0_14 = arith.constant 0 : index
    %c0_15 = arith.constant 0 : index
    %20 = vector.load %arg3[%c0_14, %c0_15] : memref<1x32xf32, #tpu.memory_space<vmem>>, vector<1x32xf32>
    %21 = arith.mulf %19, %20 : vector<1x32xf32>
    %c0_16 = arith.constant 0 : index
    %c0_17 = arith.constant 0 : index
    %22 = vector.load %arg4[%c0_16, %c0_17] : memref<1x32xf32, #tpu.memory_space<vmem>>, vector<1x32xf32>
    %23 = arith.mulf %10, %21 : vector<1x32xf32>
    %24 = arith.subf %22, %23 : vector<1x32xf32>
    %25 = vector.broadcast %21 : vector<1x32xf32> to vector<256x32xf32>
    %26 = arith.mulf %3, %25 : vector<256x32xf32>
    %27 = vector.broadcast %24 : vector<1x32xf32> to vector<256x32xf32>
    %28 = arith.addf %26, %27 : vector<256x32xf32>
    %cst_18 = arith.constant 0.000000e+00 : f32
    %29 = vector.broadcast %cst_18 : f32 to vector<256x32xf32>
    %30 = arith.maximumf %28, %29 : vector<256x32xf32>
    %cst_19 = arith.constant 0.000000e+00 : f32
    %31 = vector.broadcast %cst_19 : f32 to vector<18x18x32xf32>
    %c0_20 = arith.constant 0 : index
    %c0_21 = arith.constant 0 : index
    %c0_22 = arith.constant 0 : index
    %32 = vector.load %arg11[%c0_20, %c0_21, %c0_22] : memref<18x18x32xf32, #tpu.memory_space<vmem>>, vector<18x18x32xf32>
    tpu.vector_store %arg11[%c0_20, %c0_21, %c0_22], %31 {strides = array<i32>} : memref<18x18x32xf32, #tpu.memory_space<vmem>>, vector<18x18x32xf32>,
    %33 = vector.shape_cast %30 : vector<256x32xf32> to vector<16x16x32xf32>
    %c1 = arith.constant 1 : index
    %c1_23 = arith.constant 1 : index
    %c0_24 = arith.constant 0 : index
    %34 = vector.load %arg11[%c1, %c1_23, %c0_24] : memref<18x18x32xf32, #tpu.memory_space<vmem>>, vector<16x16x32xf32>
    tpu.vector_store %arg11[%c1, %c1_23, %c0_24], %33 {strides = array<i32>} : memref<18x18x32xf32, #tpu.memory_space<vmem>>, vector<16x16x32xf32>,
    %c0_25 = arith.constant 0 : index
    %c0_26 = arith.constant 0 : index
    %c0_27 = arith.constant 0 : index
    %35 = vector.load %arg11[%c0_25, %c0_26, %c0_27] : memref<18x18x32xf32, #tpu.memory_space<vmem>>, vector<16x16x32xf32>
    %36 = vector.shape_cast %35 : vector<16x16x32xf32> to vector<256x32xf32>
    %c0_28 = arith.constant 0 : index
    %c0_29 = arith.constant 0 : index
    %37 = vector.load %arg12[%c0_28, %c0_29] : memref<256x288xf32, #tpu.memory_space<vmem>>, vector<256x32xf32>
    tpu.vector_store %arg12[%c0_28, %c0_29], %36 {strides = array<i32>} : memref<256x288xf32, #tpu.memory_space<vmem>>, vector<256x32xf32>,
    %c0_30 = arith.constant 0 : index
    %c1_31 = arith.constant 1 : index
    %c0_32 = arith.constant 0 : index
    %38 = vector.load %arg11[%c0_30, %c1_31, %c0_32] : memref<18x18x32xf32, #tpu.memory_space<vmem>>, vector<16x16x32xf32>
    %39 = vector.shape_cast %38 : vector<16x16x32xf32> to vector<256x32xf32>
    %c0_33 = arith.constant 0 : index
    %c32 = arith.constant 32 : index
    %40 = vector.load %arg12[%c0_33, %c32] : memref<256x288xf32, #tpu.memory_space<vmem>>, vector<256x32xf32>
    tpu.vector_store %arg12[%c0_33, %c32], %39 {strides = array<i32>} : memref<256x288xf32, #tpu.memory_space<vmem>>, vector<256x32xf32>,
    %c0_34 = arith.constant 0 : index
    %c2 = arith.constant 2 : index
    %c0_35 = arith.constant 0 : index
    %41 = vector.load %arg11[%c0_34, %c2, %c0_35] : memref<18x18x32xf32, #tpu.memory_space<vmem>>, vector<16x16x32xf32>
    %42 = vector.shape_cast %41 : vector<16x16x32xf32> to vector<256x32xf32>
    %c0_36 = arith.constant 0 : index
    %c64 = arith.constant 64 : index
    %43 = vector.load %arg12[%c0_36, %c64] : memref<256x288xf32, #tpu.memory_space<vmem>>, vector<256x32xf32>
    tpu.vector_store %arg12[%c0_36, %c64], %42 {strides = array<i32>} : memref<256x288xf32, #tpu.memory_space<vmem>>, vector<256x32xf32>,
    %c1_37 = arith.constant 1 : index
    %c0_38 = arith.constant 0 : index
    %c0_39 = arith.constant 0 : index
    %44 = vector.load %arg11[%c1_37, %c0_38, %c0_39] : memref<18x18x32xf32, #tpu.memory_space<vmem>>, vector<16x16x32xf32>
    %45 = vector.shape_cast %44 : vector<16x16x32xf32> to vector<256x32xf32>
    %c0_40 = arith.constant 0 : index
    %c96 = arith.constant 96 : index
    %46 = vector.load %arg12[%c0_40, %c96] : memref<256x288xf32, #tpu.memory_space<vmem>>, vector<256x32xf32>
    tpu.vector_store %arg12[%c0_40, %c96], %45 {strides = array<i32>} : memref<256x288xf32, #tpu.memory_space<vmem>>, vector<256x32xf32>,
    %c1_41 = arith.constant 1 : index
    %c1_42 = arith.constant 1 : index
    %c0_43 = arith.constant 0 : index
    %47 = vector.load %arg11[%c1_41, %c1_42, %c0_43] : memref<18x18x32xf32, #tpu.memory_space<vmem>>, vector<16x16x32xf32>
    %48 = vector.shape_cast %47 : vector<16x16x32xf32> to vector<256x32xf32>
    %c0_44 = arith.constant 0 : index
    %c128 = arith.constant 128 : index
    %49 = vector.load %arg12[%c0_44, %c128] : memref<256x288xf32, #tpu.memory_space<vmem>>, vector<256x32xf32>
    tpu.vector_store %arg12[%c0_44, %c128], %48 {strides = array<i32>} : memref<256x288xf32, #tpu.memory_space<vmem>>, vector<256x32xf32>,
    %c1_45 = arith.constant 1 : index
    %c2_46 = arith.constant 2 : index
    %c0_47 = arith.constant 0 : index
    %50 = vector.load %arg11[%c1_45, %c2_46, %c0_47] : memref<18x18x32xf32, #tpu.memory_space<vmem>>, vector<16x16x32xf32>
    %51 = vector.shape_cast %50 : vector<16x16x32xf32> to vector<256x32xf32>
    %c0_48 = arith.constant 0 : index
    %c160 = arith.constant 160 : index
    %52 = vector.load %arg12[%c0_48, %c160] : memref<256x288xf32, #tpu.memory_space<vmem>>, vector<256x32xf32>
    tpu.vector_store %arg12[%c0_48, %c160], %51 {strides = array<i32>} : memref<256x288xf32, #tpu.memory_space<vmem>>, vector<256x32xf32>,
    %c2_49 = arith.constant 2 : index
    %c0_50 = arith.constant 0 : index
    %c0_51 = arith.constant 0 : index
    %53 = vector.load %arg11[%c2_49, %c0_50, %c0_51] : memref<18x18x32xf32, #tpu.memory_space<vmem>>, vector<16x16x32xf32>
    %54 = vector.shape_cast %53 : vector<16x16x32xf32> to vector<256x32xf32>
    %c0_52 = arith.constant 0 : index
    %c192 = arith.constant 192 : index
    %55 = vector.load %arg12[%c0_52, %c192] : memref<256x288xf32, #tpu.memory_space<vmem>>, vector<256x32xf32>
    tpu.vector_store %arg12[%c0_52, %c192], %54 {strides = array<i32>} : memref<256x288xf32, #tpu.memory_space<vmem>>, vector<256x32xf32>,
    %c2_53 = arith.constant 2 : index
    %c1_54 = arith.constant 1 : index
    %c0_55 = arith.constant 0 : index
    %56 = vector.load %arg11[%c2_53, %c1_54, %c0_55] : memref<18x18x32xf32, #tpu.memory_space<vmem>>, vector<16x16x32xf32>
    %57 = vector.shape_cast %56 : vector<16x16x32xf32> to vector<256x32xf32>
    %c0_56 = arith.constant 0 : index
    %c224 = arith.constant 224 : index
    %58 = vector.load %arg12[%c0_56, %c224] : memref<256x288xf32, #tpu.memory_space<vmem>>, vector<256x32xf32>
    tpu.vector_store %arg12[%c0_56, %c224], %57 {strides = array<i32>} : memref<256x288xf32, #tpu.memory_space<vmem>>, vector<256x32xf32>,
    %c2_57 = arith.constant 2 : index
    %c2_58 = arith.constant 2 : index
    %c0_59 = arith.constant 0 : index
    %59 = vector.load %arg11[%c2_57, %c2_58, %c0_59] : memref<18x18x32xf32, #tpu.memory_space<vmem>>, vector<16x16x32xf32>
    %60 = vector.shape_cast %59 : vector<16x16x32xf32> to vector<256x32xf32>
    %c0_60 = arith.constant 0 : index
    %c256 = arith.constant 256 : index
    %61 = vector.load %arg12[%c0_60, %c256] : memref<256x288xf32, #tpu.memory_space<vmem>>, vector<256x32xf32>
    tpu.vector_store %arg12[%c0_60, %c256], %60 {strides = array<i32>} : memref<256x288xf32, #tpu.memory_space<vmem>>, vector<256x32xf32>,
    %c0_61 = arith.constant 0 : index
    %c0_62 = arith.constant 0 : index
    %62 = vector.load %arg6[%c0_61, %c0_62] : memref<32x288xf32, #tpu.memory_space<vmem>>, vector<32x288xf32>
    %c0_63 = arith.constant 0 : index
    %c0_64 = arith.constant 0 : index
    %63 = vector.load %arg12[%c0_63, %c0_64] : memref<256x288xf32, #tpu.memory_space<vmem>>, vector<256x288xf32>
    %cst_65 = arith.constant dense<0.000000e+00> : vector<32x256xf32>
    %64 = tpu.matmul %62, %63, %cst_65 {dimension_numbers = #tpu.dot_dimension_numbers<[1], [1], [0], [0], [0, 0, 1, 0], [], []>} : vector<32x288xf32>, vector<256x288xf32>, vector<32x256xf32> -> vector<32x256xf32>
    %cst_66 = arith.constant dense<0.000000e+00> : vector<32xf32>
    %65 = vector.multi_reduction <add>, %64, %cst_66 [1] : vector<32x256xf32> to vector<32xf32>
    %66 = vector.shape_cast %65 : vector<32xf32> to vector<32x1xf32>
    %67 = arith.mulf %64, %64 : vector<32x256xf32>
    %cst_67 = arith.constant dense<0.000000e+00> : vector<32xf32>
    %68 = vector.multi_reduction <add>, %67, %cst_67 [1] : vector<32x256xf32> to vector<32xf32>
    %69 = vector.shape_cast %68 : vector<32xf32> to vector<32x1xf32>
    %c0_68 = arith.constant 0 : index
    %c0_69 = arith.constant 0 : index
    %70 = vector.load %arg9[%c0_68, %c0_69] : memref<32x32xf32, #tpu.memory_space<vmem>>, vector<32x32xf32>
    %cst_70 = arith.constant dense<0.000000e+00> : vector<32x1xf32>
    %71 = tpu.matmul %70, %66, %cst_70 {dimension_numbers = #tpu.dot_dimension_numbers<[1], [0], [0], [1], [0, 0, 1, 1], [], []>} : vector<32x32xf32>, vector<32x1xf32>, vector<32x1xf32> -> vector<32x1xf32>
    %c0_71 = arith.constant 0 : index
    %c0_72 = arith.constant 0 : index
    %72 = vector.load %arg9[%c0_71, %c0_72] : memref<32x32xf32, #tpu.memory_space<vmem>>, vector<32x32xf32>
    %cst_73 = arith.constant dense<0.000000e+00> : vector<32x1xf32>
    %73 = tpu.matmul %72, %69, %cst_73 {dimension_numbers = #tpu.dot_dimension_numbers<[1], [0], [0], [1], [0, 0, 1, 1], [], []>} : vector<32x32xf32>, vector<32x1xf32>, vector<32x1xf32> -> vector<32x1xf32>
    %74 = arith.mulf %71, %71 : vector<32x1xf32>
    %75 = arith.subf %73, %74 : vector<32x1xf32>
    %cst_74 = arith.constant 0.000000e+00 : f32
    %76 = vector.broadcast %cst_74 : f32 to vector<32x1xf32>
    %77 = arith.maximumf %75, %76 : vector<32x1xf32>
    %cst_75 = arith.constant 9.99999974E-6 : f32
    %78 = vector.broadcast %cst_75 : f32 to vector<32x1xf32>
    %79 = arith.addf %77, %78 : vector<32x1xf32>
    %80 = math.rsqrt %79 : vector<32x1xf32>
    %c0_76 = arith.constant 0 : index
    %c0_77 = arith.constant 0 : index
    %81 = vector.load %arg7[%c0_76, %c0_77] : memref<32x1xf32, #tpu.memory_space<vmem>>, vector<32x1xf32>
    %82 = arith.mulf %80, %81 : vector<32x1xf32>
    %c0_78 = arith.constant 0 : index
    %c0_79 = arith.constant 0 : index
    %83 = vector.load %arg8[%c0_78, %c0_79] : memref<32x1xf32, #tpu.memory_space<vmem>>, vector<32x1xf32>
    %84 = arith.mulf %71, %82 : vector<32x1xf32>
    %85 = arith.subf %83, %84 : vector<32x1xf32>
    %86 = vector.broadcast %82 : vector<32x1xf32> to vector<32x256xf32>
    %87 = arith.mulf %64, %86 : vector<32x256xf32>
    %88 = vector.broadcast %85 : vector<32x1xf32> to vector<32x256xf32>
    %89 = arith.addf %87, %88 : vector<32x256xf32>
    %cst_80 = arith.constant 0.000000e+00 : f32
    %90 = vector.broadcast %cst_80 : f32 to vector<32x256xf32>
    %91 = arith.maximumf %89, %90 : vector<32x256xf32>
    %c0_81 = arith.constant 0 : index
    %c0_82 = arith.constant 0 : index
    %c0_83 = arith.constant 0 : index
    %92 = vector.load %arg10[%c0_81, %c0_82, %c0_83] : memref<1x32x256xf32, #tpu.memory_space<vmem>>, vector<1x32x256xf32>
    %93 = vector.shape_cast %92 : vector<1x32x256xf32> to vector<32x256xf32>
    %94 = vector.shape_cast %91 : vector<32x256xf32> to vector<1x32x256xf32>
    tpu.vector_store %arg10[%c0_81, %c0_82, %c0_83], %94 {strides = array<i32>} : memref<1x32x256xf32, #tpu.memory_space<vmem>>, vector<1x32x256xf32>,
    return
  }
  func.func @transform_0(%arg0: i32) -> (i32, i32, i32) {
    %c0_i32 = arith.constant 0 : i32
    %c0_i32_0 = arith.constant 0 : i32
    %c0_i32_1 = arith.constant 0 : i32
    return %arg0, %c0_i32, %c0_i32_0 : i32, i32, i32
  }
  func.func @transform_1(%arg0: i32) -> (i32, i32) {
    %c0_i32 = arith.constant 0 : i32
    %c0_i32_0 = arith.constant 0 : i32
    %c0_i32_1 = arith.constant 0 : i32
    return %c0_i32, %c0_i32_0 : i32, i32
  }
  func.func @transform_2(%arg0: i32) -> (i32, i32) {
    %c0_i32 = arith.constant 0 : i32
    %c0_i32_0 = arith.constant 0 : i32
    %c0_i32_1 = arith.constant 0 : i32
    return %c0_i32, %c0_i32_0 : i32, i32
  }
  func.func @transform_3(%arg0: i32) -> (i32, i32) {
    %c0_i32 = arith.constant 0 : i32
    %c0_i32_0 = arith.constant 0 : i32
    %c0_i32_1 = arith.constant 0 : i32
    return %c0_i32, %c0_i32_0 : i32, i32
  }
  func.func @transform_4(%arg0: i32) -> (i32, i32) {
    %c0_i32 = arith.constant 0 : i32
    %c0_i32_0 = arith.constant 0 : i32
    %c0_i32_1 = arith.constant 0 : i32
    return %c0_i32, %c0_i32_0 : i32, i32
  }
  func.func @transform_5(%arg0: i32) -> (i32, i32) {
    %c0_i32 = arith.constant 0 : i32
    %c0_i32_0 = arith.constant 0 : i32
    %c0_i32_1 = arith.constant 0 : i32
    return %c0_i32, %c0_i32_0 : i32, i32
  }
  func.func @transform_6(%arg0: i32) -> (i32, i32) {
    %c0_i32 = arith.constant 0 : i32
    %c0_i32_0 = arith.constant 0 : i32
    %c0_i32_1 = arith.constant 0 : i32
    return %c0_i32, %c0_i32_0 : i32, i32
  }
  func.func @transform_7(%arg0: i32) -> (i32, i32) {
    %c0_i32 = arith.constant 0 : i32
    %c0_i32_0 = arith.constant 0 : i32
    %c0_i32_1 = arith.constant 0 : i32
    return %c0_i32, %c0_i32_0 : i32, i32
  }
  func.func @transform_8(%arg0: i32) -> (i32, i32) {
    %c0_i32 = arith.constant 0 : i32
    %c0_i32_0 = arith.constant 0 : i32
    %c0_i32_1 = arith.constant 0 : i32
    return %c0_i32, %c0_i32_0 : i32, i32
  }
  func.func @transform_9(%arg0: i32) -> (i32, i32, i32) {
    %c0_i32 = arith.constant 0 : i32
    %c0_i32_0 = arith.constant 0 : i32
    %c0_i32_1 = arith.constant 0 : i32
    return %arg0, %c0_i32, %c0_i32_0 : i32, i32, i32
  }
}

</mosaic_0001>

<llo_original>
// kernel: double_conv.1
$region0: #{double_conv.1}
  #allocation0 [shape = 'u32[]', space=smem, size = 0x4, offset = 0x4, fixed_abs, tag = 'smem constant byte address 0x4 - core index']
  #allocation1 [shape = 'u32[144,128]{1,0:T(1,128)}', space=vmem, size = 0x12000, scoped, tag = 'internal scratch']
  #allocation2 [shape = 'f32[18,18,32]{2,1,0:T(8,128)}', space=vmem, size = 0x36000, scoped, tag = 'scratch operand']
  #allocation3 [shape = 'f32[256,288]{1,0:T(8,128)}', space=vmem, size = 0x60000, scoped, tag = 'scratch operand']
  %s0 = inlined_call_operand.vmem [shape: f32[2,256,36], index: 0, kind: input, shape index: {}]
  %s1 = inlined_call_operand.vmem [shape: f32[36,32], index: 1, kind: input, shape index: {}]
  %s2 = inlined_call_operand.vmem [shape: f32[1,32], index: 2, kind: input, shape index: {}]
  %s3 = inlined_call_operand.vmem [shape: f32[1,32], index: 3, kind: input, shape index: {}]
  %s4 = inlined_call_operand.vmem [shape: f32[32,32], index: 4, kind: input, shape index: {}, may-alias: {4,8}]
  %s5 = inlined_call_operand.vmem [shape: f32[32,288], index: 5, kind: input, shape index: {}]
  %s6 = inlined_call_operand.vmem [shape: f32[32,1], index: 6, kind: input, shape index: {}]
  %s7 = inlined_call_operand.vmem [shape: f32[32,1], index: 7, kind: input, shape index: {}]
  %s8 = inlined_call_operand.vmem [shape: f32[32,32], index: 8, kind: input, shape index: {}, may-alias: {4,8}]
  %s9 = inlined_call_operand.vmem [shape: f32[2,32,256], index: 9, kind: output, shape index: {}]
  %s10 = sld [smem:[#allocation0]]
  $region69: #{double_conv.1} parent=0
    _
  %s12 = ssub.s32 1, %s10
  %s13 = scalar_select 0, %s12, %s10
  loop: start=0, step=1, limit=4
  $region2: #{double_conv.1} parent=0 // loop_pre_header
    _
  $region3: #{double_conv.1} parent=0 // loop_header
    %s15 = sphi 0, %s19
    %p16 = scmp.ge.s32.totalorder %s15, 4
    %s25 = sphi 0, %s27
    %s28 = sphi 0, %s25
    %s29 = sphi 0, %s28
    %s45 = sphi 0, %s29
    %s49 = sphi 0, %s49
    %s51 = sphi 0, %s49
    %s52 = sphi 0, %s51
    %s66 = sphi 0, %s52
    %s70 = sphi 0, %s70
    %s72 = sphi 0, %s70
    %s73 = sphi 0, %s72
    %s87 = sphi 0, %s73
    %s91 = sphi 0, %s91
    %s93 = sphi 0, %s91
    %s94 = sphi 0, %s93
    %s108 = sphi 0, %s94
    %s112 = sphi 0, %s112
    %s114 = sphi 0, %s112
    %s115 = sphi 0, %s114
    %s129 = sphi 0, %s115
    %s133 = sphi 0, %s133
    %s135 = sphi 0, %s133
    %s136 = sphi 0, %s135
    %s150 = sphi 0, %s136
    %s154 = sphi 0, %s154
    %s156 = sphi 0, %s154
    %s157 = sphi 0, %s156
    %s171 = sphi 0, %s157
    %s175 = sphi 0, %s175
    %s177 = sphi 0, %s175
    %s178 = sphi 0, %s177
    %s192 = sphi 0, %s178
    %s196 = sphi 0, %s196
    %s198 = sphi 0, %s196
    %s199 = sphi 0, %s198
    %s213 = sphi 0, %s199
    %s219 = sphi 0, %s221
    %s222 = sphi 0, %s219
    %s223 = sphi 0, %s222
    %s239 = sphi 0, %s223
  $region4: #{double_conv.1} parent=0 // loop_header_branch
    %18 = sbr.rel (%p16) target = $region8
  $region5: #{double_conv.1} parent=0 // loop_body
    %s20 = ssub.s32 %s15, 1
    %s21 = ssub.s32 %s15, 2
    %s22 = sadd.s32 %s15, 1
    %s23 = ssub.s32 %s15, %s22
    %p24 = scmp.eq.s32.totalorder %s23, 0
    %s26 = sadd.s32 %s25, 1
    %s27 = scalar_select %p24, %s25, %s26
    %p30 = pneg %p24
    %p31 = scmp.eq.s32.totalorder %s15, 1
    %p32 = por %p30, %p31
    %p33 = scmp.ne.s32.totalorder %s25, %s28
    %p34 = scmp.eq.s32.totalorder %s15, 0
    %p35 = por %p33, %p34
    %p36 = scmp.ne.s32.totalorder %s25, %s28
    %p37 = scmp.eq.s32.totalorder %s20, 1
    %p38 = por %p36, %p37
    %p39 = scmp.ne.s32.totalorder %s28, %s29
    %p40 = scmp.eq.s32.totalorder %s20, 0
    %p41 = por %p39, %p40
    %p42 = scmp.ne.s32.totalorder %s28, %s29
    %p43 = scmp.eq.s32.totalorder %s21, 1
    %p44 = por %p42, %p43
    %p46 = scmp.ne.s32.totalorder %s29, %s45
    %p47 = scmp.eq.s32.totalorder %s21, 0
    %p48 = por %p46, %p47
    %s50 = sadd.s32 %s49, 1
    %p53 = scmp.eq.s32.totalorder %s15, 1
    %p54 = scmp.ne.s32.totalorder %s49, %s51
    %p55 = scmp.eq.s32.totalorder %s15, 0
    %p56 = por %p54, %p55
    %p57 = scmp.ne.s32.totalorder %s49, %s51
    %p58 = scmp.eq.s32.totalorder %s20, 1
    %p59 = por %p57, %p58
    %p60 = scmp.ne.s32.totalorder %s51, %s52
    %p61 = scmp.eq.s32.totalorder %s20, 0
    %p62 = por %p60, %p61
    %p63 = scmp.ne.s32.totalorder %s51, %s52
    %p64 = scmp.eq.s32.totalorder %s21, 1
    %p65 = por %p63, %p64
    %p67 = scmp.ne.s32.totalorder %s52, %s66
    %p68 = scmp.eq.s32.totalorder %s21, 0
    %p69 = por %p67, %p68
    %s71 = sadd.s32 %s70, 1
    %p74 = scmp.eq.s32.totalorder %s15, 1
    %p75 = scmp.ne.s32.totalorder %s70, %s72
    %p76 = scmp.eq.s32.totalorder %s15, 0
    %p77 = por %p75, %p76
    %p78 = scmp.ne.s32.totalorder %s70, %s72
    %p79 = scmp.eq.s32.totalorder %s20, 1
    %p80 = por %p78, %p79
    %p81 = scmp.ne.s32.totalorder %s72, %s73
    %p82 = scmp.eq.s32.totalorder %s20, 0
    %p83 = por %p81, %p82
    %p84 = scmp.ne.s32.totalorder %s72, %s73
    %p85 = scmp.eq.s32.totalorder %s21, 1
    %p86 = por %p84, %p85
    %p88 = scmp.ne.s32.totalorder %s73, %s87
    %p89 = scmp.eq.s32.totalorder %s21, 0
    %p90 = por %p88, %p89
    %s92 = sadd.s32 %s91, 1
    %p95 = scmp.eq.s32.totalorder %s15, 1
    %p96 = scmp.ne.s32.totalorder %s91, %s93
    %p97 = scmp.eq.s32.totalorder %s15, 0
    %p98 = por %p96, %p97
    %p99 = scmp.ne.s32.totalorder %s91, %s93
    %p100 = scmp.eq.s32.totalorder %s20, 1
    %p101 = por %p99, %p100
    %p102 = scmp.ne.s32.totalorder %s93, %s94
    %p103 = scmp.eq.s32.totalorder %s20, 0
    %p104 = por %p102, %p103
    %p105 = scmp.ne.s32.totalorder %s93, %s94
    %p106 = scmp.eq.s32.totalorder %s21, 1
    %p107 = por %p105, %p106
    %p109 = scmp.ne.s32.totalorder %s94, %s108
    %p110 = scmp.eq.s32.totalorder %s21, 0
    %p111 = por %p109, %p110
    %s113 = sadd.s32 %s112, 1
    %p116 = scmp.eq.s32.totalorder %s15, 1
    %p117 = scmp.ne.s32.totalorder %s112, %s114
    %p118 = scmp.eq.s32.totalorder %s15, 0
    %p119 = por %p117, %p118
    %p120 = scmp.ne.s32.totalorder %s112, %s114
    %p121 = scmp.eq.s32.totalorder %s20, 1
    %p122 = por %p120, %p121
    %p123 = scmp.ne.s32.totalorder %s114, %s115
    %p124 = scmp.eq.s32.totalorder %s20, 0
    %p125 = por %p123, %p124
    %p126 = scmp.ne.s32.totalorder %s114, %s115
    %p127 = scmp.eq.s32.totalorder %s21, 1
    %p128 = por %p126, %p127
    %p130 = scmp.ne.s32.totalorder %s115, %s129
    %p131 = scmp.eq.s32.totalorder %s21, 0
    %p132 = por %p130, %p131
    %s134 = sadd.s32 %s133, 1
    %p137 = scmp.eq.s32.totalorder %s15, 1
    %p138 = scmp.ne.s32.totalorder %s133, %s135
    %p139 = scmp.eq.s32.totalorder %s15, 0
    %p140 = por %p138, %p139
    %p141 = scmp.ne.s32.totalorder %s133, %s135
    %p142 = scmp.eq.s32.totalorder %s20, 1
    %p143 = por %p141, %p142
    %p144 = scmp.ne.s32.totalorder %s135, %s136
    %p145 = scmp.eq.s32.totalorder %s20, 0
    %p146 = por %p144, %p145
    %p147 = scmp.ne.s32.totalorder %s135, %s136
    %p148 = scmp.eq.s32.totalorder %s21, 1
    %p149 = por %p147, %p148
    %p151 = scmp.ne.s32.totalorder %s136, %s150
    %p152 = scmp.eq.s32.totalorder %s21, 0
    %p153 = por %p151, %p152
    %s155 = sadd.s32 %s154, 1
    %p158 = scmp.eq.s32.totalorder %s15, 1
    %p159 = scmp.ne.s32.totalorder %s154, %s156
    %p160 = scmp.eq.s32.totalorder %s15, 0
    %p161 = por %p159, %p160
    %p162 = scmp.ne.s32.totalorder %s154, %s156
    %p163 = scmp.eq.s32.totalorder %s20, 1
    %p164 = por %p162, %p163
    %p165 = scmp.ne.s32.totalorder %s156, %s157
    %p166 = scmp.eq.s32.totalorder %s20, 0
    %p167 = por %p165, %p166
    %p168 = scmp.ne.s32.totalorder %s156, %s157
    %p169 = scmp.eq.s32.totalorder %s21, 1
    %p170 = por %p168, %p169
    %p172 = scmp.ne.s32.totalorder %s157, %s171
    %p173 = scmp.eq.s32.totalorder %s21, 0
    %p174 = por %p172, %p173
    %s176 = sadd.s32 %s175, 1
    %p179 = scmp.eq.s32.totalorder %s15, 1
    %p180 = scmp.ne.s32.totalorder %s175, %s177
    %p181 = scmp.eq.s32.totalorder %s15, 0
    %p182 = por %p180, %p181
    %p183 = scmp.ne.s32.totalorder %s175, %s177
    %p184 = scmp.eq.s32.totalorder %s20, 1
    %p185 = por %p183, %p184
    %p186 = scmp.ne.s32.totalorder %s177, %s178
    %p187 = scmp.eq.s32.totalorder %s20, 0
    %p188 = por %p186, %p187
    %p189 = scmp.ne.s32.totalorder %s177, %s178
    %p190 = scmp.eq.s32.totalorder %s21, 1
    %p191 = por %p189, %p190
    %p193 = scmp.ne.s32.totalorder %s178, %s192
    %p194 = scmp.eq.s32.totalorder %s21, 0
    %p195 = por %p193, %p194
    %s197 = sadd.s32 %s196, 1
    %p200 = scmp.eq.s32.totalorder %s15, 1
    %p201 = scmp.ne.s32.totalorder %s196, %s198
    %p202 = scmp.eq.s32.totalorder %s15, 0
    %p203 = por %p201, %p202
    %p204 = scmp.ne.s32.totalorder %s196, %s198
    %p205 = scmp.eq.s32.totalorder %s20, 1
    %p206 = por %p204, %p205
    %p207 = scmp.ne.s32.totalorder %s198, %s199
    %p208 = scmp.eq.s32.totalorder %s20, 0
    %p209 = por %p207, %p208
    %p210 = scmp.ne.s32.totalorder %s198, %s199
    %p211 = scmp.eq.s32.totalorder %s21, 1
    %p212 = por %p210, %p211
    %p214 = scmp.ne.s32.totalorder %s199, %s213
    %p215 = scmp.eq.s32.totalorder %s21, 0
    %p216 = por %p214, %p215
    %s217 = ssub.s32 %s15, %s22
    %p218 = scmp.eq.s32.totalorder %s217, 0
    %s220 = sadd.s32 %s219, 1
    %s221 = scalar_select %p218, %s219, %s220
    %p224 = pneg %p218
    %p225 = scmp.eq.s32.totalorder %s15, 1
    %p226 = por %p224, %p225
    %p227 = scmp.ne.s32.totalorder %s219, %s222
    %p228 = scmp.eq.s32.totalorder %s15, 0
    %p229 = por %p227, %p228
    %p230 = scmp.ne.s32.totalorder %s219, %s222
    %p231 = scmp.eq.s32.totalorder %s20, 1
    %p232 = por %p230, %p231
    %p233 = scmp.ne.s32.totalorder %s222, %s223
    %p234 = scmp.eq.s32.totalorder %s20, 0
    %p235 = por %p233, %p234
    %p236 = scmp.ne.s32.totalorder %s222, %s223
    %p237 = scmp.eq.s32.totalorder %s21, 1
    %p238 = por %p236, %p237
    %p240 = scmp.ne.s32.totalorder %s223, %s239
    %p241 = scmp.eq.s32.totalorder %s21, 0
    %p242 = por %p240, %p241
    %p243 = scmp.le.s32.totalorder 1, %s15
    %p244 = scmp.lt.s32.totalorder %s15, 3
    %p245 = pnand %p243, %p244
    %p246 = pneg %p245
    // Predicated region
    $region9: #{double_conv.1} parent=5 // pred_check
      _
    $region10: #{double_conv.1} parent=5 // pred_check_branch
      %248 = sbr.rel (%p245) target = $region12
    $region11: #{double_conv.1} parent=5 // pred_region
      %s249 = ssub.s32 %s15, 1
      // Predicated region
      $region13: #{double_conv.1} parent=11 // pred_check
        %p250 = pneg %p62
      $region14: #{double_conv.1} parent=11 // pred_check_branch
        %252 = sbr.rel (%p250) target = $region16
      $region15: #{double_conv.1} parent=11 // pred_region
        _
      $region16: #{double_conv.1} parent=11 // pred_fallthru
        _
      // Predicated region
      $region17: #{double_conv.1} parent=11 // pred_check
        %p253 = pneg %p83
      $region18: #{double_conv.1} parent=11 // pred_check_branch
        %255 = sbr.rel (%p253) target = $region20
      $region19: #{double_conv.1} parent=11 // pred_region
        _
      $region20: #{double_conv.1} parent=11 // pred_fallthru
        _
      // Predicated region
      $region21: #{double_conv.1} parent=11 // pred_check
        %p256 = pneg %p104
      $region22: #{double_conv.1} parent=11 // pred_check_branch
        %258 = sbr.rel (%p256) target = $region24
      $region23: #{double_conv.1} parent=11 // pred_region
        _
      $region24: #{double_conv.1} parent=11 // pred_fallthru
        _
      // Predicated region
      $region25: #{double_conv.1} parent=11 // pred_check
        %p259 = pneg %p125
      $region26: #{double_conv.1} parent=11 // pred_check_branch
        %261 = sbr.rel (%p259) target = $region28
      $region27: #{double_conv.1} parent=11 // pred_region
        _
      $region28: #{double_conv.1} parent=11 // pred_fallthru
        _
      // Predicated region
      $region29: #{double_conv.1} parent=11 // pred_check
        %p262 = pneg %p146
      $region30: #{double_conv.1} parent=11 // pred_check_branch
        %264 = sbr.rel (%p262) target = $region32
      $region31: #{double_conv.1} parent=11 // pred_region
        _
      $region32: #{double_conv.1} parent=11 // pred_fallthru
        _
      // Predicated region
      $region33: #{double_conv.1} parent=11 // pred_check
        %p265 = pneg %p167
      $region34: #{double_conv.1} parent=11 // pred_check_branch
        %267 = sbr.rel (%p265) target = $region36
      $region35: #{double_conv.1} parent=11 // pred_region
        _
      $region36: #{double_conv.1} parent=11 // pred_fallthru
        _
      // Predicated region
      $region37: #{double_conv.1} parent=11 // pred_check
        %p268 = pneg %p188
      $region38: #{double_conv.1} parent=11 // pred_check_branch
        %270 = sbr.rel (%p268) target = $region40
      $region39: #{double_conv.1} parent=11 // pred_region
        _
      $region40: #{double_conv.1} parent=11 // pred_fallthru
        _
      // Predicated region
      $region41: #{double_conv.1} parent=11 // pred_check
        %p271 = pneg %p209
      $region42: #{double_conv.1} parent=11 // pred_check_branch
        %273 = sbr.rel (%p271) target = $region44
      $region43: #{double_conv.1} parent=11 // pred_region
        _
      $region44: #{double_conv.1} parent=11 // pred_fallthru
        _
    $region12: #{double_conv.1} parent=5 // pred_fallthru
      _
    %p274 = scmp.lt.s32.totalorder %s15, 2
    // Predicated region
    $region45: #{double_conv.1} parent=5 // pred_check
      %p275 = pneg %p274
    $region46: #{double_conv.1} parent=5 // pred_check_branch
      %277 = sbr.rel (%p275) target = $region48
    $region47: #{double_conv.1} parent=5 // pred_region
      // Predicated region
      $region49: #{double_conv.1} parent=47 // pred_check
        %p278 = pneg %p35
      $region50: #{double_conv.1} parent=47 // pred_check_branch
        %280 = sbr.rel (%p278) target = $region52
      $region51: #{double_conv.1} parent=47 // pred_region
        %p281 = scmp.lt.s32.totalorder %s15, 1
        %s282 = scalar_select %p281, %s15, 1
        %s283 = smul.addr %s282, 32
        %s284 = smul.addr %s283, 8
        %s285 = scalar_lea.vmem %s0, %s284
      $region52: #{double_conv.1} parent=47 // pred_fallthru
        _
    $region48: #{double_conv.1} parent=5 // pred_fallthru
      _
    %p286 = scmp.le.s32.totalorder 1, %s15
    %p287 = scmp.lt.s32.totalorder %s15, 3
    %p288 = pnand %p286, %p287
    %p289 = pneg %p288
    // Predicated region
    $region53: #{double_conv.1} parent=5 // pred_check
      _
    $region54: #{double_conv.1} parent=5 // pred_check_branch
      %291 = sbr.rel (%p288) target = $region56
    $region55: #{double_conv.1} parent=5 // pred_region
      %s292 = ssub.s32 %s15, 1
      %p293 = scmp.lt.s32.totalorder %s20, 1
      %s294 = scalar_select %p293, %s20, 1
      %s295 = smul.addr %s294, 32
      %s296 = smul.addr %s295, 8
      %s297 = scalar_lea.vmem %s0, %s296
      %p298 = pneg %p41
      %p299 = pneg %p38
      %p300 = pneg %p62
      %p301 = pneg %p59
      %p302 = pneg %p83
      %p303 = pneg %p80
      %p304 = pneg %p104
      %p305 = pneg %p101
      %p306 = pneg %p125
      %p307 = pneg %p122
      %p308 = pneg %p146
      %p309 = pneg %p143
      %p310 = pneg %p167
      %p311 = pneg %p164
      %p312 = pneg %p188
      %p313 = pneg %p185
      %p314 = pneg %p209
      %p315 = pneg %p206
      %p316 = pneg %p235
      %p317 = pneg %p232
      %p318 = scmp.lt.s32.totalorder %s20, 1
      %s319 = scalar_select %p318, %s20, 1
      %s320 = smul.addr %s319, 8
      %s321 = smul.addr %s320, 8
      %s322 = scalar_lea.vmem %s9, %s321
      %p323 = scmp.lt.s32.totalorder %s20, 1
      %s324 = scalar_select %p323, %s20, 1
      %s325 = smul.addr %s324, 32
      %s326 = smul.addr %s325, 8
      %s327 = scalar_lea.vmem %s0, %s326
      %p328 = scmp.lt.s32.totalorder %s20, 1
      %s329 = scalar_select %p328, %s20, 1
      %s330 = smul.addr %s329, 8
      %s331 = smul.addr %s330, 8
      %s332 = scalar_lea.vmem %s9, %s331
      %v333 = vld [vmem:[%s327] sm:$0xff]
      %v334 = vld [vmem:[%s327 + $0x8] sm:$0xff]
      %v335 = vld [vmem:[%s327 + $0x10] sm:$0xff]
      %v336 = vld [vmem:[%s327 + $0x18] sm:$0xff]
      %v337 = vld [vmem:[%s327 + $0x20] sm:$0xff]
      %v338 = vld [vmem:[%s327 + $0x28] sm:$0xff]
      %v339 = vld [vmem:[%s327 + $0x30] sm:$0xff]
      %v340 = vld [vmem:[%s327 + $0x38] sm:$0xff]
      %v341 = vld [vmem:[%s327 + $0x40] sm:$0xff]
      %v342 = vld [vmem:[%s327 + $0x48] sm:$0xff]
      %v343 = vld [vmem:[%s327 + $0x50] sm:$0xff]
      %v344 = vld [vmem:[%s327 + $0x58] sm:$0xff]
      %v345 = vld [vmem:[%s327 + $0x60] sm:$0xff]
      %v346 = vld [vmem:[%s327 + $0x68] sm:$0xff]
      %v347 = vld [vmem:[%s327 + $0x70] sm:$0xff]
      %v348 = vld [vmem:[%s327 + $0x78] sm:$0xff]
      %v349 = vld [vmem:[%s327 + $0x80] sm:$0xff]
      %v350 = vld [vmem:[%s327 + $0x88] sm:$0xff]
      %v351 = vld [vmem:[%s327 + $0x90] sm:$0xff]
      %v352 = vld [vmem:[%s327 + $0x98] sm:$0xff]
      %v353 = vld [vmem:[%s327 + $0xa0] sm:$0xff]
      %v354 = vld [vmem:[%s327 + $0xa8] sm:$0xff]
      %v355 = vld [vmem:[%s327 + $0xb0] sm:$0xff]
      %v356 = vld [vmem:[%s327 + $0xb8] sm:$0xff]
      %v357 = vld [vmem:[%s327 + $0xc0] sm:$0xff]
      %v358 = vld [vmem:[%s327 + $0xc8] sm:$0xff]
      %v359 = vld [vmem:[%s327 + $0xd0] sm:$0xff]
      %v360 = vld [vmem:[%s327 + $0xd8] sm:$0xff]
      %v361 = vld [vmem:[%s327 + $0xe0] sm:$0xff]
      %v362 = vld [vmem:[%s327 + $0xe8] sm:$0xff]
      %v363 = vld [vmem:[%s327 + $0xf0] sm:$0xff]
      %v364 = vld [vmem:[%s327 + $0xf8] sm:$0xff]
      %v365 = vld [vmem:[%s1] sm:$0xff]
      %v366 = vld [vmem:[%s1 + $0x8] sm:$0xff]
      %v367 = vld [vmem:[%s1 + $0x10] sm:$0xff]
      %v368 = vld [vmem:[%s1 + $0x18] sm:$0xff]
      %v369 = vld [vmem:[%s1 + $0x20] sm:$0xf]
      %vm370 = vcmask 293888
      %v372 = vsel %vm370, %v333, 0
      %v375 = vsel %vm370, %v334, 0
      %v378 = vsel %vm370, %v335, 0
      %v381 = vsel %vm370, %v336, 0
      %v384 = vsel %vm370, %v337, 0
      %v387 = vsel %vm370, %v338, 0
      %v390 = vsel %vm370, %v339, 0
      %v393 = vsel %vm370, %v340, 0
      %v396 = vsel %vm370, %v341, 0
      %v399 = vsel %vm370, %v342, 0
      %v402 = vsel %vm370, %v343, 0
      %v405 = vsel %vm370, %v344, 0
      %v408 = vsel %vm370, %v345, 0
      %v411 = vsel %vm370, %v346, 0
      %v414 = vsel %vm370, %v347, 0
      %v417 = vsel %vm370, %v348, 0
      %v420 = vsel %vm370, %v349, 0
      %v423 = vsel %vm370, %v350, 0
      %v426 = vsel %vm370, %v351, 0
      %v429 = vsel %vm370, %v352, 0
      %v432 = vsel %vm370, %v353, 0
      %v435 = vsel %vm370, %v354, 0
      %v438 = vsel %vm370, %v355, 0
      %v441 = vsel %vm370, %v356, 0
      %v444 = vsel %vm370, %v357, 0
      %v447 = vsel %vm370, %v358, 0
      %v450 = vsel %vm370, %v359, 0
      %v453 = vsel %vm370, %v360, 0
      %v456 = vsel %vm370, %v361, 0
      %v459 = vsel %vm370, %v362, 0
      %v462 = vsel %vm370, %v363, 0
      %v465 = vsel %vm370, %v364, 0
      %vm467 = vcmask 1043456
      %v469 = vsel %vm467, %v369, 0
      %471 = vmatprep.subr.mxu0 0.0
      %472 = vmatpush1.msra.mxu0 0.0
      %473 = vmatprep.subr.mxu0 0.0
      %474 = vmatpush1.msra.mxu0 0.0
      %475 = vmatprep.subr.mxu0 0.0
      %476 = vmatpush1.msra.mxu0 0.0
      %477 = vmatprep.subr.mxu0 0.0
      %478 = vmatpush1.msra.mxu0 0.0
      %479 = vmatprep.subr.mxu0 0.0
      %480 = vmatpush1.msra.mxu0 0.0
      %481 = vmatprep.subr.mxu0 0.0
      %482 = vmatpush1.msra.mxu0 0.0
      %483 = vmatprep.subr.mxu0 0.0
      %484 = vmatpush1.msra.mxu0 0.0
      %485 = vmatprep.subr.mxu0 0.0
      %486 = vmatpush1.msra.mxu0 0.0
      %487 = vmatprep.subr.mxu0 0.0
      %488 = vmatpush1.msra.mxu0 0.0
      %489 = vmatprep.subr.mxu0 0.0
      %490 = vmatpush1.msra.mxu0 0.0
      %491 = vmatprep.subr.mxu0 0.0
      %492 = vmatpush1.msra.mxu0 0.0
      %493 = vmatprep.subr.mxu0 0.0
      %494 = vmatpush1.msra.mxu0 %v469
      %495 = vmatprep.subr.mxu0 0.0
      %496 = vmatpush1.msra.mxu0 %v368
      %497 = vmatprep.subr.mxu0 0.0
      %498 = vmatpush1.msra.mxu0 %v367
      %499 = vmatprep.subr.mxu0 0.0
      %500 = vmatpush1.msra.mxu0 %v366
      %501 = vmatprep.subr.mxu0 0.0
      %502 = vmatpush1.msra.mxu0 %v365
      %503 = vmatprep.subr.mxu0 0.0
      %504 = vmatpush2.msra.mxu0 0.0
      %505 = vmatprep.subr.mxu0 0.0
      %506 = vmatpush2.msra.mxu0 0.0
      %507 = vmatprep.subr.mxu0 0.0
      %508 = vmatpush2.msra.mxu0 0.0
      %509 = vmatprep.subr.mxu0 0.0
      %510 = vmatpush2.msra.mxu0 0.0
      %511 = vmatprep.subr.mxu0 0.0
      %512 = vmatpush2.msra.mxu0 0.0
      %513 = vmatprep.subr.mxu0 0.0
      %514 = vmatpush2.msra.mxu0 0.0
      %515 = vmatprep.subr.mxu0 0.0
      %516 = vmatpush2.msra.mxu0 0.0
      %517 = vmatprep.subr.mxu0 0.0
      %518 = vmatpush2.msra.mxu0 0.0
      %519 = vmatprep.subr.mxu0 0.0
      %520 = vmatpush2.msra.mxu0 0.0
      %521 = vmatprep.subr.mxu0 0.0
      %522 = vmatpush2.msra.mxu0 0.0
      %523 = vmatprep.subr.mxu0 0.0
      %524 = vmatpush2.msra.mxu0 0.0
      %525 = vmatprep.subr.mxu0 0.0
      %526 = vmatpush2.msra.mxu0 0.0
      %527 = vmatprep.subr.mxu0 0.0
      %528 = vmatpush2.msra.mxu0 0.0
      %529 = vmatprep.subr.mxu0 0.0
      %530 = vmatpush2.msra.mxu0 0.0
      %531 = vmatprep.subr.mxu0 0.0
      %532 = vmatpush2.msra.mxu0 0.0
      %533 = vmatprep.subr.mxu0 0.0
      %534 = vmatpush2.msra.mxu0 0.0
      %535 = vmatprep.mubr.f32.mxu0 0.0
      %536 = vmatmul.mubr.f32.gmra.mxu0 %v372
      %v537 = vpop.f32.mrf.mxu0
      %v538 = vadd.f32 0.0, %v537
      %v539 = vpop.f32.mrf.mxu0
      %540 = vmatprep.mubr.f32.mxu0 0.0
      %541 = vmatmul.mubr.f32.gmra.mxu0 %v375
      %v542 = vpop.f32.mrf.mxu0
      %v543 = vadd.f32 0.0, %v542
      %v544 = vpop.f32.mrf.mxu0
      %545 = vmatprep.mubr.f32.mxu0 0.0
      %546 = vmatmul.mubr.f32.gmra.mxu0 %v378
      %v547 = vpop.f32.mrf.mxu0
      %v548 = vadd.f32 0.0, %v547
      %v549 = vpop.f32.mrf.mxu0
      %550 = vmatprep.mubr.f32.mxu0 0.0
      %551 = vmatmul.mubr.f32.gmra.mxu0 %v381
      %v552 = vpop.f32.mrf.mxu0
      %v553 = vadd.f32 0.0, %v552
      %v554 = vpop.f32.mrf.mxu0
      %555 = vmatprep.mubr.f32.mxu0 0.0
      %556 = vmatmul.mubr.f32.gmra.mxu0 %v384
      %v557 = vpop.f32.mrf.mxu0
      %v558 = vadd.f32 0.0, %v557
      %v559 = vpop.f32.mrf.mxu0
      %560 = vmatprep.mubr.f32.mxu0 0.0
      %561 = vmatmul.mubr.f32.gmra.mxu0 %v387
      %v562 = vpop.f32.mrf.mxu0
      %v563 = vadd.f32 0.0, %v562
      %v564 = vpop.f32.mrf.mxu0
      %565 = vmatprep.mubr.f32.mxu0 0.0
      %566 = vmatmul.mubr.f32.gmra.mxu0 %v390
      %v567 = vpop.f32.mrf.mxu0
      %v568 = vadd.f32 0.0, %v567
      %v569 = vpop.f32.mrf.mxu0
      %570 = vmatprep.mubr.f32.mxu0 0.0
      %571 = vmatmul.mubr.f32.gmra.mxu0 %v393
      %v572 = vpop.f32.mrf.mxu0
      %v573 = vadd.f32 0.0, %v572
      %v574 = vpop.f32.mrf.mxu0
      %575 = vmatprep.mubr.f32.mxu0 0.0
      %576 = vmatmul.mubr.f32.gmra.mxu0 %v396
      %v577 = vpop.f32.mrf.mxu0
      %v578 = vadd.f32 0.0, %v577
      %v579 = vpop.f32.mrf.mxu0
      %580 = vmatprep.mubr.f32.mxu0 0.0
      %581 = vmatmul.mubr.f32.gmra.mxu0 %v399
      %v582 = vpop.f32.mrf.mxu0
      %v583 = vadd.f32 0.0, %v582
      %v584 = vpop.f32.mrf.mxu0
      %585 = vmatprep.mubr.f32.mxu0 0.0
      %586 = vmatmul.mubr.f32.gmra.mxu0 %v402
      %v587 = vpop.f32.mrf.mxu0
      %v588 = vadd.f32 0.0, %v587
      %v589 = vpop.f32.mrf.mxu0
      %590 = vmatprep.mubr.f32.mxu0 0.0
      %591 = vmatmul.mubr.f32.gmra.mxu0 %v405
      %v592 = vpop.f32.mrf.mxu0
      %v593 = vadd.f32 0.0, %v592
      %v594 = vpop.f32.mrf.mxu0
      %595 = vmatprep.mubr.f32.mxu0 0.0
      %596 = vmatmul.mubr.f32.gmra.mxu0 %v408
      %v597 = vpop.f32.mrf.mxu0
      %v598 = vadd.f32 0.0, %v597
      %v599 = vpop.f32.mrf.mxu0
      %600 = vmatprep.mubr.f32.mxu0 0.0
      %601 = vmatmul.mubr.f32.gmra.mxu0 %v411
      %v602 = vpop.f32.mrf.mxu0
      %v603 = vadd.f32 0.0, %v602
      %v604 = vpop.f32.mrf.mxu0
      %605 = vmatprep.mubr.f32.mxu0 0.0
      %606 = vmatmul.mubr.f32.gmra.mxu0 %v414
      %v607 = vpop.f32.mrf.mxu0
      %v608 = vadd.f32 0.0, %v607
      %v609 = vpop.f32.mrf.mxu0
      %610 = vmatprep.mubr.f32.mxu0 0.0
      %611 = vmatmul.mubr.f32.gmra.mxu0 %v417
      %v612 = vpop.f32.mrf.mxu0
      %v613 = vadd.f32 0.0, %v612
      %v614 = vpop.f32.mrf.mxu0
      %615 = vmatprep.mubr.f32.mxu0 0.0
      %616 = vmatmul.mubr.f32.gmra.mxu0 %v420
      %v617 = vpop.f32.mrf.mxu0
      %v618 = vadd.f32 0.0, %v617
      %v619 = vpop.f32.mrf.mxu0
      %620 = vmatprep.mubr.f32.mxu0 0.0
      %621 = vmatmul.mubr.f32.gmra.mxu0 %v423
      %v622 = vpop.f32.mrf.mxu0
      %v623 = vadd.f32 0.0, %v622
      %v624 = vpop.f32.mrf.mxu0
      %625 = vmatprep.mubr.f32.mxu0 0.0
      %626 = vmatmul.mubr.f32.gmra.mxu0 %v426
      %v627 = vpop.f32.mrf.mxu0
      %v628 = vadd.f32 0.0, %v627
      %v629 = vpop.f32.mrf.mxu0
      %630 = vmatprep.mubr.f32.mxu0 0.0
      %631 = vmatmul.mubr.f32.gmra.mxu0 %v429
      %v632 = vpop.f32.mrf.mxu0
      %v633 = vadd.f32 0.0, %v632
      %v634 = vpop.f32.mrf.mxu0
      %635 = vmatprep.mubr.f32.mxu0 0.0
      %636 = vmatmul.mubr.f32.gmra.mxu0 %v432
      %v637 = vpop.f32.mrf.mxu0
      %v638 = vadd.f32 0.0, %v637
      %v639 = vpop.f32.mrf.mxu0
      %640 = vmatprep.mubr.f32.mxu0 0.0
      %641 = vmatmul.mubr.f32.gmra.mxu0 %v435
      %v642 = vpop.f32.mrf.mxu0
      %v643 = vadd.f32 0.0, %v642
      %v644 = vpop.f32.mrf.mxu0
      %645 = vmatprep.mubr.f32.mxu0 0.0
      %646 = vmatmul.mubr.f32.gmra.mxu0 %v438
      %v647 = vpop.f32.mrf.mxu0
      %v648 = vadd.f32 0.0, %v647
      %v649 = vpop.f32.mrf.mxu0
      %650 = vmatprep.mubr.f32.mxu0 0.0
      %651 = vmatmul.mubr.f32.gmra.mxu0 %v441
      %v652 = vpop.f32.mrf.mxu0
      %v653 = vadd.f32 0.0, %v652
      %v654 = vpop.f32.mrf.mxu0
      %655 = vmatprep.mubr.f32.mxu0 0.0
      %656 = vmatmul.mubr.f32.gmra.mxu0 %v444
      %v657 = vpop.f32.mrf.mxu0
      %v658 = vadd.f32 0.0, %v657
      %v659 = vpop.f32.mrf.mxu0
      %660 = vmatprep.mubr.f32.mxu0 0.0
      %661 = vmatmul.mubr.f32.gmra.mxu0 %v447
      %v662 = vpop.f32.mrf.mxu0
      %v663 = vadd.f32 0.0, %v662
      %v664 = vpop.f32.mrf.mxu0
      %665 = vmatprep.mubr.f32.mxu0 0.0
      %666 = vmatmul.mubr.f32.gmra.mxu0 %v450
      %v667 = vpop.f32.mrf.mxu0
      %v668 = vadd.f32 0.0, %v667
      %v669 = vpop.f32.mrf.mxu0
      %670 = vmatprep.mubr.f32.mxu0 0.0
      %671 = vmatmul.mubr.f32.gmra.mxu0 %v453
      %v672 = vpop.f32.mrf.mxu0
      %v673 = vadd.f32 0.0, %v672
      %v674 = vpop.f32.mrf.mxu0
      %675 = vmatprep.mubr.f32.mxu0 0.0
      %676 = vmatmul.mubr.f32.gmra.mxu0 %v456
      %v677 = vpop.f32.mrf.mxu0
      %v678 = vadd.f32 0.0, %v677
      %v679 = vpop.f32.mrf.mxu0
      %680 = vmatprep.mubr.f32.mxu0 0.0
      %681 = vmatmul.mubr.f32.gmra.mxu0 %v459
      %v682 = vpop.f32.mrf.mxu0
      %v683 = vadd.f32 0.0, %v682
      %v684 = vpop.f32.mrf.mxu0
      %685 = vmatprep.mubr.f32.mxu0 0.0
      %686 = vmatmul.mubr.f32.gmra.mxu0 %v462
      %v687 = vpop.f32.mrf.mxu0
      %v688 = vadd.f32 0.0, %v687
      %v689 = vpop.f32.mrf.mxu0
      %690 = vmatprep.mubr.f32.mxu0 0.0
      %691 = vmatmul.mubr.f32.gmra.mxu0 %v465
      %v692 = vpop.f32.mrf.mxu0
      %v693 = vadd.f32 0.0, %v692
      %v694 = vpop.f32.mrf.mxu0
      %695 = vdwg.mxu0
      %vm696 = vcmask 261120
      %v697 = vsel %vm696, %v538, 0.0
      %v698 = vsel %vm696, %v543, 0.0
      %v699 = vadd.f32 %v697, %v698
      %v700 = vsel %vm696, %v548, 0.0
      %v701 = vadd.f32 %v699, %v700
      %v702 = vsel %vm696, %v553, 0.0
      %v703 = vadd.f32 %v701, %v702
      %v704 = vsel %vm696, %v558, 0.0
      %v705 = vadd.f32 %v703, %v704
      %v706 = vsel %vm696, %v563, 0.0
      %v707 = vadd.f32 %v705, %v706
      %v708 = vsel %vm696, %v568, 0.0
      %v709 = vadd.f32 %v707, %v708
      %v710 = vsel %vm696, %v573, 0.0
      %v711 = vadd.f32 %v709, %v710
      %v712 = vsel %vm696, %v578, 0.0
      %v713 = vadd.f32 %v711, %v712
      %v714 = vsel %vm696, %v583, 0.0
      %v715 = vadd.f32 %v713, %v714
      %v716 = vsel %vm696, %v588, 0.0
      %v717 = vadd.f32 %v715, %v716
      %v718 = vsel %vm696, %v593, 0.0
      %v719 = vadd.f32 %v717, %v718
      %v720 = vsel %vm696, %v598, 0.0
      %v721 = vadd.f32 %v719, %v720
      %v722 = vsel %vm696, %v603, 0.0
      %v723 = vadd.f32 %v721, %v722
      %v724 = vsel %vm696, %v608, 0.0
      %v725 = vadd.f32 %v723, %v724
      %v726 = vsel %vm696, %v613, 0.0
      %v727 = vadd.f32 %v725, %v726
      %v728 = vsel %vm696, %v618, 0.0
      %v729 = vadd.f32 %v727, %v728
      %v730 = vsel %vm696, %v623, 0.0
      %v731 = vadd.f32 %v729, %v730
      %v732 = vsel %vm696, %v628, 0.0
      %v733 = vadd.f32 %v731, %v732
      %v734 = vsel %vm696, %v633, 0.0
      %v735 = vadd.f32 %v733, %v734
      %v736 = vsel %vm696, %v638, 0.0
      %v737 = vadd.f32 %v735, %v736
      %v738 = vsel %vm696, %v643, 0.0
      %v739 = vadd.f32 %v737, %v738
      %v740 = vsel %vm696, %v648, 0.0
      %v741 = vadd.f32 %v739, %v740
      %v742 = vsel %vm696, %v653, 0.0
      %v743 = vadd.f32 %v741, %v742
      %v744 = vsel %vm696, %v658, 0.0
      %v745 = vadd.f32 %v743, %v744
      %v746 = vsel %vm696, %v663, 0.0
      %v747 = vadd.f32 %v745, %v746
      %v748 = vsel %vm696, %v668, 0.0
      %v749 = vadd.f32 %v747, %v748
      %v750 = vsel %vm696, %v673, 0.0
      %v751 = vadd.f32 %v749, %v750
      %v752 = vsel %vm696, %v678, 0.0
      %v753 = vadd.f32 %v751, %v752
      %v754 = vsel %vm696, %v683, 0.0
      %v755 = vadd.f32 %v753, %v754
      %v756 = vsel %vm696, %v688, 0.0
      %v757 = vadd.f32 %v755, %v756
      %v758 = vsel %vm696, %v693, 0.0
      %v759 = vadd.f32 %v757, %v758
      %v760 = vrot.slane %v759, 4
      %v761 = vadd.f32 %v759, %v760
      %v762 = vrot.slane %v761, 2
      %v763 = vadd.f32 %v761, %v762
      %v764 = vrot.slane %v763, 1
      %v765 = vadd.f32 %v763, %v764
      %v766 = vmul.f32 %v538, %v538
      %v767 = vmul.f32 %v543, %v543
      %v768 = vmul.f32 %v548, %v548
      %v769 = vmul.f32 %v553, %v553
      %v770 = vmul.f32 %v558, %v558
      %v771 = vmul.f32 %v563, %v563
      %v772 = vmul.f32 %v568, %v568
      %v773 = vmul.f32 %v573, %v573
      %v774 = vmul.f32 %v578, %v578
      %v775 = vmul.f32 %v583, %v583
      %v776 = vmul.f32 %v588, %v588
      %v777 = vmul.f32 %v593, %v593
      %v778 = vmul.f32 %v598, %v598
      %v779 = vmul.f32 %v603, %v603
      %v780 = vmul.f32 %v608, %v608
      %v781 = vmul.f32 %v613, %v613
      %v782 = vmul.f32 %v618, %v618
      %v783 = vmul.f32 %v623, %v623
      %v784 = vmul.f32 %v628, %v628
      %v785 = vmul.f32 %v633, %v633
      %v786 = vmul.f32 %v638, %v638
      %v787 = vmul.f32 %v643, %v643
      %v788 = vmul.f32 %v648, %v648
      %v789 = vmul.f32 %v653, %v653
      %v790 = vmul.f32 %v658, %v658
      %v791 = vmul.f32 %v663, %v663
      %v792 = vmul.f32 %v668, %v668
      %v793 = vmul.f32 %v673, %v673
      %v794 = vmul.f32 %v678, %v678
      %v795 = vmul.f32 %v683, %v683
      %v796 = vmul.f32 %v688, %v688
      %v797 = vmul.f32 %v693, %v693
      %v798 = vsel %vm696, %v766, 0.0
      %v799 = vsel %vm696, %v767, 0.0
      %v800 = vadd.f32 %v798, %v799
      %v801 = vsel %vm696, %v768, 0.0
      %v802 = vadd.f32 %v800, %v801
      %v803 = vsel %vm696, %v769, 0.0
      %v804 = vadd.f32 %v802, %v803
      %v805 = vsel %vm696, %v770, 0.0
      %v806 = vadd.f32 %v804, %v805
      %v807 = vsel %vm696, %v771, 0.0
      %v808 = vadd.f32 %v806, %v807
      %v809 = vsel %vm696, %v772, 0.0
      %v810 = vadd.f32 %v808, %v809
      %v811 = vsel %vm696, %v773, 0.0
      %v812 = vadd.f32 %v810, %v811
      %v813 = vsel %vm696, %v774, 0.0
      %v814 = vadd.f32 %v812, %v813
      %v815 = vsel %vm696, %v775, 0.0
      %v816 = vadd.f32 %v814, %v815
      %v817 = vsel %vm696, %v776, 0.0
      %v818 = vadd.f32 %v816, %v817
      %v819 = vsel %vm696, %v777, 0.0
      %v820 = vadd.f32 %v818, %v819
      %v821 = vsel %vm696, %v778, 0.0
      %v822 = vadd.f32 %v820, %v821
      %v823 = vsel %vm696, %v779, 0.0
      %v824 = vadd.f32 %v822, %v823
      %v825 = vsel %vm696, %v780, 0.0
      %v826 = vadd.f32 %v824, %v825
      %v827 = vsel %vm696, %v781, 0.0
      %v828 = vadd.f32 %v826, %v827
      %v829 = vsel %vm696, %v782, 0.0
      %v830 = vadd.f32 %v828, %v829
      %v831 = vsel %vm696, %v783, 0.0
      %v832 = vadd.f32 %v830, %v831
      %v833 = vsel %vm696, %v784, 0.0
      %v834 = vadd.f32 %v832, %v833
      %v835 = vsel %vm696, %v785, 0.0
      %v836 = vadd.f32 %v834, %v835
      %v837 = vsel %vm696, %v786, 0.0
      %v838 = vadd.f32 %v836, %v837
      %v839 = vsel %vm696, %v787, 0.0
      %v840 = vadd.f32 %v838, %v839
      %v841 = vsel %vm696, %v788, 0.0
      %v842 = vadd.f32 %v840, %v841
      %v843 = vsel %vm696, %v789, 0.0
      %v844 = vadd.f32 %v842, %v843
      %v845 = vsel %vm696, %v790, 0.0
      %v846 = vadd.f32 %v844, %v845
      %v847 = vsel %vm696, %v791, 0.0
      %v848 = vadd.f32 %v846, %v847
      %v849 = vsel %vm696, %v792, 0.0
      %v850 = vadd.f32 %v848, %v849
      %v851 = vsel %vm696, %v793, 0.0
      %v852 = vadd.f32 %v850, %v851
      %v853 = vsel %vm696, %v794, 0.0
      %v854 = vadd.f32 %v852, %v853
      %v855 = vsel %vm696, %v795, 0.0
      %v856 = vadd.f32 %v854, %v855
      %v857 = vsel %vm696, %v796, 0.0
      %v858 = vadd.f32 %v856, %v857
      %v859 = vsel %vm696, %v797, 0.0
      %v860 = vadd.f32 %v858, %v859
      %v861 = vrot.slane %v860, 4
      %v862 = vadd.f32 %v860, %v861
      %v863 = vrot.slane %v862, 2
      %v864 = vadd.f32 %v862, %v863
      %v865 = vrot.slane %v864, 1
      %v866 = vadd.f32 %v864, %v865
      %v867 = vld [vmem:[%s4] sm:$0xff]
      %v868 = vld [vmem:[%s4 + $0x8] sm:$0xff]
      %v869 = vld [vmem:[%s4 + $0x10] sm:$0xff]
      %v870 = vld [vmem:[%s4 + $0x18] sm:$0xff]
      %v872 = vsel %vm696, %v765, 0
      %874 = vmatprep.subr.mxu0 0.0
      %875 = vmatpush1.msra.mxu0 0.0
      %876 = vmatprep.subr.mxu0 0.0
      %877 = vmatpush1.msra.mxu0 0.0
      %878 = vmatprep.subr.mxu0 0.0
      %879 = vmatpush1.msra.mxu0 0.0
      %880 = vmatprep.subr.mxu0 0.0
      %881 = vmatpush1.msra.mxu0 0.0
      %882 = vmatprep.subr.mxu0 0.0
      %883 = vmatpush1.msra.mxu0 0.0
      %884 = vmatprep.subr.mxu0 0.0
      %885 = vmatpush1.msra.mxu0 0.0
      %886 = vmatprep.subr.mxu0 0.0
      %887 = vmatpush1.msra.mxu0 0.0
      %888 = vmatprep.subr.mxu0 0.0
      %889 = vmatpush1.msra.mxu0 0.0
      %890 = vmatprep.subr.mxu0 0.0
      %891 = vmatpush1.msra.mxu0 0.0
      %892 = vmatprep.subr.mxu0 0.0
      %893 = vmatpush1.msra.mxu0 0.0
      %894 = vmatprep.subr.mxu0 0.0
      %895 = vmatpush1.msra.mxu0 0.0
      %896 = vmatprep.subr.mxu0 0.0
      %897 = vmatpush1.msra.mxu0 0.0
      %898 = vmatprep.subr.mxu0 0.0
      %899 = vmatpush1.msra.mxu0 %v870
      %900 = vmatprep.subr.mxu0 0.0
      %901 = vmatpush1.msra.mxu0 %v869
      %902 = vmatprep.subr.mxu0 0.0
      %903 = vmatpush1.msra.mxu0 %v868
      %904 = vmatprep.subr.mxu0 0.0
      %905 = vmatpush1.msra.mxu0 %v867
      %906 = vmatprep.subr.mxu0 0.0
      %907 = vmatpush2.msra.mxu0 0.0
      %908 = vmatprep.subr.mxu0 0.0
      %909 = vmatpush2.msra.mxu0 0.0
      %910 = vmatprep.subr.mxu0 0.0
      %911 = vmatpush2.msra.mxu0 0.0
      %912 = vmatprep.subr.mxu0 0.0
      %913 = vmatpush2.msra.mxu0 0.0
      %914 = vmatprep.subr.mxu0 0.0
      %915 = vmatpush2.msra.mxu0 0.0
      %916 = vmatprep.subr.mxu0 0.0
      %917 = vmatpush2.msra.mxu0 0.0
      %918 = vmatprep.subr.mxu0 0.0
      %919 = vmatpush2.msra.mxu0 0.0
      %920 = vmatprep.subr.mxu0 0.0
      %921 = vmatpush2.msra.mxu0 0.0
      %922 = vmatprep.subr.mxu0 0.0
      %923 = vmatpush2.msra.mxu0 0.0
      %924 = vmatprep.subr.mxu0 0.0
      %925 = vmatpush2.msra.mxu0 0.0
      %926 = vmatprep.subr.mxu0 0.0
      %927 = vmatpush2.msra.mxu0 0.0
      %928 = vmatprep.subr.mxu0 0.0
      %929 = vmatpush2.msra.mxu0 0.0
      %930 = vmatprep.subr.mxu0 0.0
      %931 = vmatpush2.msra.mxu0 0.0
      %932 = vmatprep.subr.mxu0 0.0
      %933 = vmatpush2.msra.mxu0 0.0
      %934 = vmatprep.subr.mxu0 0.0
      %935 = vmatpush2.msra.mxu0 0.0
      %936 = vmatprep.subr.mxu0 0.0
      %937 = vmatpush2.msra.mxu0 0.0
      %938 = vmatprep.mubr.f32.mxu0 0.0
      %939 = vmatmul.mubr.f32.gmra.mxu0 %v872
      %v940 = vpop.f32.mrf.mxu0
      %v941 = vadd.f32 0.0, %v940
      %v942 = vpop.f32.mrf.mxu0
      %943 = vdwg.mxu0
      %v945 = vsel %vm696, %v866, 0
      %947 = vmatprep.subr.mxu0 0.0
      %948 = vmatpush1.msra.mxu0 0.0
      %949 = vmatprep.subr.mxu0 0.0
      %950 = vmatpush1.msra.mxu0 0.0
      %951 = vmatprep.subr.mxu0 0.0
      %952 = vmatpush1.msra.mxu0 0.0
      %953 = vmatprep.subr.mxu0 0.0
      %954 = vmatpush1.msra.mxu0 0.0
      %955 = vmatprep.subr.mxu0 0.0
      %956 = vmatpush1.msra.mxu0 0.0
      %957 = vmatprep.subr.mxu0 0.0
      %958 = vmatpush1.msra.mxu0 0.0
      %959 = vmatprep.subr.mxu0 0.0
      %960 = vmatpush1.msra.mxu0 0.0
      %961 = vmatprep.subr.mxu0 0.0
      %962 = vmatpush1.msra.mxu0 0.0
      %963 = vmatprep.subr.mxu0 0.0
      %964 = vmatpush1.msra.mxu0 0.0
      %965 = vmatprep.subr.mxu0 0.0
      %966 = vmatpush1.msra.mxu0 0.0
      %967 = vmatprep.subr.mxu0 0.0
      %968 = vmatpush1.msra.mxu0 0.0
      %969 = vmatprep.subr.mxu0 0.0
      %970 = vmatpush1.msra.mxu0 0.0
      %971 = vmatprep.subr.mxu0 0.0
      %972 = vmatpush1.msra.mxu0 %v870
      %973 = vmatprep.subr.mxu0 0.0
      %974 = vmatpush1.msra.mxu0 %v869
      %975 = vmatprep.subr.mxu0 0.0
      %976 = vmatpush1.msra.mxu0 %v868
      %977 = vmatprep.subr.mxu0 0.0
      %978 = vmatpush1.msra.mxu0 %v867
      %979 = vmatprep.subr.mxu0 0.0
      %980 = vmatpush2.msra.mxu0 0.0
      %981 = vmatprep.subr.mxu0 0.0
      %982 = vmatpush2.msra.mxu0 0.0
      %983 = vmatprep.subr.mxu0 0.0
      %984 = vmatpush2.msra.mxu0 0.0
      %985 = vmatprep.subr.mxu0 0.0
      %986 = vmatpush2.msra.mxu0 0.0
      %987 = vmatprep.subr.mxu0 0.0
      %988 = vmatpush2.msra.mxu0 0.0
      %989 = vmatprep.subr.mxu0 0.0
      %990 = vmatpush2.msra.mxu0 0.0
      %991 = vmatprep.subr.mxu0 0.0
      %992 = vmatpush2.msra.mxu0 0.0
      %993 = vmatprep.subr.mxu0 0.0
      %994 = vmatpush2.msra.mxu0 0.0
      %995 = vmatprep.subr.mxu0 0.0
      %996 = vmatpush2.msra.mxu0 0.0
      %997 = vmatprep.subr.mxu0 0.0
      %998 = vmatpush2.msra.mxu0 0.0
      %999 = vmatprep.subr.mxu0 0.0
      %1000 = vmatpush2.msra.mxu0 0.0
      %1001 = vmatprep.subr.mxu0 0.0
      %1002 = vmatpush2.msra.mxu0 0.0
      %1003 = vmatprep.subr.mxu0 0.0
      %1004 = vmatpush2.msra.mxu0 0.0
      %1005 = vmatprep.subr.mxu0 0.0
      %1006 = vmatpush2.msra.mxu0 0.0
      %1007 = vmatprep.subr.mxu0 0.0
      %1008 = vmatpush2.msra.mxu0 0.0
      %1009 = vmatprep.subr.mxu0 0.0
      %1010 = vmatpush2.msra.mxu0 0.0
      %1011 = vmatprep.mubr.f32.mxu0 0.0
      %1012 = vmatmul.mubr.f32.gmra.mxu0 %v945
      %v1013 = vpop.f32.mrf.mxu0
      %v1014 = vadd.f32 0.0, %v1013
      %v1015 = vpop.f32.mrf.mxu0
      %1016 = vdwg.mxu0
      %v1017 = vmul.f32 %v941, %v941
      %v1018 = vsub.f32 %v1014, %v1017
      %v1019 = vmax.f32 %v1018, 0.0
      %v1020 = vadd.f32 %v1019, 1e-05
      %v1021 = vrsqrt.pop %v1020
      %v1022 = vld [vmem:[%s2] sm:$0x1]
      %v1023 = vmul.f32 %v1021, %v1022
      %v1024 = vld [vmem:[%s3] sm:$0x1]
      %v1025 = vmul.f32 %v941, %v1023
      %v1026 = vsub.f32 %v1024, %v1025
      %v1027 = vlaneseq
      %v1028 = vshrl.u32 %v1027, 7
      %v1029 = vsub.s32 0, %v1028
      %v1030 = vrot.slane %v1023, %v1029
      %v1031 = vmul.f32 %v538, %v1030
      %v1032 = vmul.f32 %v543, %v1030
      %v1033 = vmul.f32 %v548, %v1030
      %v1034 = vmul.f32 %v553, %v1030
      %v1035 = vmul.f32 %v558, %v1030
      %v1036 = vmul.f32 %v563, %v1030
      %v1037 = vmul.f32 %v568, %v1030
      %v1038 = vmul.f32 %v573, %v1030
      %v1039 = vmul.f32 %v578, %v1030
      %v1040 = vmul.f32 %v583, %v1030
      %v1041 = vmul.f32 %v588, %v1030
      %v1042 = vmul.f32 %v593, %v1030
      %v1043 = vmul.f32 %v598, %v1030
      %v1044 = vmul.f32 %v603, %v1030
      %v1045 = vmul.f32 %v608, %v1030
      %v1046 = vmul.f32 %v613, %v1030
      %v1047 = vmul.f32 %v618, %v1030
      %v1048 = vmul.f32 %v623, %v1030
      %v1049 = vmul.f32 %v628, %v1030
      %v1050 = vmul.f32 %v633, %v1030
      %v1051 = vmul.f32 %v638, %v1030
      %v1052 = vmul.f32 %v643, %v1030
      %v1053 = vmul.f32 %v648, %v1030
      %v1054 = vmul.f32 %v653, %v1030
      %v1055 = vmul.f32 %v658, %v1030
      %v1056 = vmul.f32 %v663, %v1030
      %v1057 = vmul.f32 %v668, %v1030
      %v1058 = vmul.f32 %v673, %v1030
      %v1059 = vmul.f32 %v678, %v1030
      %v1060 = vmul.f32 %v683, %v1030
      %v1061 = vmul.f32 %v688, %v1030
      %v1062 = vmul.f32 %v693, %v1030
      %v1064 = vlaneseq
      %v1065 = vshrl.u32 %v1064, 7
      %v1066 = vsub.s32 0, %v1065
      %v1067 = vrot.slane %v1026, %v1066
      %v1069 = vadd.f32 %v1031, %v1067
      %v1070 = vadd.f32 %v1032, %v1067
      %v1071 = vadd.f32 %v1033, %v1067
      %v1072 = vadd.f32 %v1034, %v1067
      %v1073 = vadd.f32 %v1035, %v1067
      %v1074 = vadd.f32 %v1036, %v1067
      %v1075 = vadd.f32 %v1037, %v1067
      %v1076 = vadd.f32 %v1038, %v1067
      %v1077 = vadd.f32 %v1039, %v1067
      %v1078 = vadd.f32 %v1040, %v1067
      %v1079 = vadd.f32 %v1041, %v1067
      %v1080 = vadd.f32 %v1042, %v1067
      %v1081 = vadd.f32 %v1043, %v1067
      %v1082 = vadd.f32 %v1044, %v1067
      %v1083 = vadd.f32 %v1045, %v1067
      %v1084 = vadd.f32 %v1046, %v1067
      %v1085 = vadd.f32 %v1047, %v1067
      %v1086 = vadd.f32 %v1048, %v1067
      %v1087 = vadd.f32 %v1049, %v1067
      %v1088 = vadd.f32 %v1050, %v1067
      %v1089 = vadd.f32 %v1051, %v1067
      %v1090 = vadd.f32 %v1052, %v1067
      %v1091 = vadd.f32 %v1053, %v1067
      %v1092 = vadd.f32 %v1054, %v1067
      %v1093 = vadd.f32 %v1055, %v1067
      %v1094 = vadd.f32 %v1056, %v1067
      %v1095 = vadd.f32 %v1057, %v1067
      %v1096 = vadd.f32 %v1058, %v1067
      %v1097 = vadd.f32 %v1059, %v1067
      %v1098 = vadd.f32 %v1060, %v1067
      %v1099 = vadd.f32 %v1061, %v1067
      %v1100 = vadd.f32 %v1062, %v1067
      %v1101 = vmax.f32 %v1069, 0.0
      %v1102 = vmax.f32 %v1070, 0.0
      %v1103 = vmax.f32 %v1071, 0.0
      %v1104 = vmax.f32 %v1072, 0.0
      %v1105 = vmax.f32 %v1073, 0.0
      %v1106 = vmax.f32 %v1074, 0.0
      %v1107 = vmax.f32 %v1075, 0.0
      %v1108 = vmax.f32 %v1076, 0.0
      %v1109 = vmax.f32 %v1077, 0.0
      %v1110 = vmax.f32 %v1078, 0.0
      %v1111 = vmax.f32 %v1079, 0.0
      %v1112 = vmax.f32 %v1080, 0.0
      %v1113 = vmax.f32 %v1081, 0.0
      %v1114 = vmax.f32 %v1082, 0.0
      %v1115 = vmax.f32 %v1083, 0.0
      %v1116 = vmax.f32 %v1084, 0.0
      %v1117 = vmax.f32 %v1085, 0.0
      %v1118 = vmax.f32 %v1086, 0.0
      %v1119 = vmax.f32 %v1087, 0.0
      %v1120 = vmax.f32 %v1088, 0.0
      %v1121 = vmax.f32 %v1089, 0.0
      %v1122 = vmax.f32 %v1090, 0.0
      %v1123 = vmax.f32 %v1091, 0.0
      %v1124 = vmax.f32 %v1092, 0.0
      %v1125 = vmax.f32 %v1093, 0.0
      %v1126 = vmax.f32 %v1094, 0.0
      %v1127 = vmax.f32 %v1095, 0.0
      %v1128 = vmax.f32 %v1096, 0.0
      %v1129 = vmax.f32 %v1097, 0.0
      %v1130 = vmax.f32 %v1098, 0.0
      %v1131 = vmax.f32 %v1099, 0.0
      %v1132 = vmax.f32 %v1100, 0.0
      %1133 = vst.msk [vmem:[#allocation2] sm:$0xff] %vm696, 0.0
      %1134 = vst.msk [vmem:[#allocation2 + $0x8] sm:$0xff] %vm696, 0.0
      %vm1135 = vcmask 254976
      %1136 = vst.msk [vmem:[#allocation2 + $0x10] sm:$0x3] %vm1135, 0.0
      %1137 = vst.msk [vmem:[#allocation2 + $0x18] sm:$0xff] %vm696, 0.0
      %1138 = vst.msk [vmem:[#allocation2 + $0x20] sm:$0xff] %vm696, 0.0
      %1139 = vst.msk [vmem:[#allocation2 + $0x28] sm:$0x3] %vm1135, 0.0
      %1140 = vst.msk [vmem:[#allocation2 + $0x30] sm:$0xff] %vm696, 0.0
      %1141 = vst.msk [vmem:[#allocation2 + $0x38] sm:$0xff] %vm696, 0.0
      %1142 = vst.msk [vmem:[#allocation2 + $0x40] sm:$0x3] %vm1135, 0.0
      %1143 = vst.msk [vmem:[#allocation2 + $0x48] sm:$0xff] %vm696, 0.0
      %1144 = vst.msk [vmem:[#allocation2 + $0x50] sm:$0xff] %vm696, 0.0
      %1145 = vst.msk [vmem:[#allocation2 + $0x58] sm:$0x3] %vm1135, 0.0
      %1146 = vst.msk [vmem:[#allocation2 + $0x60] sm:$0xff] %vm696, 0.0
      %1147 = vst.msk [vmem:[#allocation2 + $0x68] sm:$0xff] %vm696, 0.0
      %1148 = vst.msk [vmem:[#allocation2 + $0x70] sm:$0x3] %vm1135, 0.0
      %1149 = vst.msk [vmem:[#allocation2 + $0x78] sm:$0xff] %vm696, 0.0
      %1150 = vst.msk [vmem:[#allocation2 + $0x80] sm:$0xff] %vm696, 0.0
      %1151 = vst.msk [vmem:[#allocation2 + $0x88] sm:$0x3] %vm1135, 0.0
      %1152 = vst.msk [vmem:[#allocation2 + $0x90] sm:$0xff] %vm696, 0.0
      %1153 = vst.msk [vmem:[#allocation2 + $0x98] sm:$0xff] %vm696, 0.0
      %1154 = vst.msk [vmem:[#allocation2 + $0xa0] sm:$0x3] %vm1135, 0.0
      %1155 = vst.msk [vmem:[#allocation2 + $0xa8] sm:$0xff] %vm696, 0.0
      %1156 = vst.msk [vmem:[#allocation2 + $0xb0] sm:$0xff] %vm696, 0.0
      %1157 = vst.msk [vmem:[#allocation2 + $0xb8] sm:$0x3] %vm1135, 0.0
      %1158 = vst.msk [vmem:[#allocation2 + $0xc0] sm:$0xff] %vm696, 0.0
      %1159 = vst.msk [vmem:[#allocation2 + $0xc8] sm:$0xff] %vm696, 0.0
      %1160 = vst.msk [vmem:[#allocation2 + $0xd0] sm:$0x3] %vm1135, 0.0
      %1161 = vst.msk [vmem:[#allocation2 + $0xd8] sm:$0xff] %vm696, 0.0
      %1162 = vst.msk [vmem:[#allocation2 + $0xe0] sm:$0xff] %vm696, 0.0
      %1163 = vst.msk [vmem:[#allocation2 + $0xe8] sm:$0x3] %vm1135, 0.0
      %1164 = vst.msk [vmem:[#allocation2 + $0xf0] sm:$0xff] %vm696, 0.0
      %1165 = vst.msk [vmem:[#allocation2 + $0xf8] sm:$0xff] %vm696, 0.0
      %1166 = vst.msk [vmem:[#allocation2 + $0x100] sm:$0x3] %vm1135, 0.0
      %1167 = vst.msk [vmem:[#allocation2 + $0x108] sm:$0xff] %vm696, 0.0
      %1168 = vst.msk [vmem:[#allocation2 + $0x110] sm:$0xff] %vm696, 0.0
      %1169 = vst.msk [vmem:[#allocation2 + $0x118] sm:$0x3] %vm1135, 0.0
      %1170 = vst.msk [vmem:[#allocation2 + $0x120] sm:$0xff] %vm696, 0.0
      %1171 = vst.msk [vmem:[#allocation2 + $0x128] sm:$0xff] %vm696, 0.0
      %1172 = vst.msk [vmem:[#allocation2 + $0x130] sm:$0x3] %vm1135, 0.0
      %1173 = vst.msk [vmem:[#allocation2 + $0x138] sm:$0xff] %vm696, 0.0
      %1174 = vst.msk [vmem:[#allocation2 + $0x140] sm:$0xff] %vm696, 0.0
      %1175 = vst.msk [vmem:[#allocation2 + $0x148] sm:$0x3] %vm1135, 0.0
      %1176 = vst.msk [vmem:[#allocation2 + $0x150] sm:$0xff] %vm696, 0.0
      %1177 = vst.msk [vmem:[#allocation2 + $0x158] sm:$0xff] %vm696, 0.0
      %1178 = vst.msk [vmem:[#allocation2 + $0x160] sm:$0x3] %vm1135, 0.0
      %1179 = vst.msk [vmem:[#allocation2 + $0x168] sm:$0xff] %vm696, 0.0
      %1180 = vst.msk [vmem:[#allocation2 + $0x170] sm:$0xff] %vm696, 0.0
      %1181 = vst.msk [vmem:[#allocation2 + $0x178] sm:$0x3] %vm1135, 0.0
      %1182 = vst.msk [vmem:[#allocation2 + $0x180] sm:$0xff] %vm696, 0.0
      %1183 = vst.msk [vmem:[#allocation2 + $0x188] sm:$0xff] %vm696, 0.0
      %1184 = vst.msk [vmem:[#allocation2 + $0x190] sm:$0x3] %vm1135, 0.0
      %1185 = vst.msk [vmem:[#allocation2 + $0x198] sm:$0xff] %vm696, 0.0
      %1186 = vst.msk [vmem:[#allocation2 + $0x1a0] sm:$0xff] %vm696, 0.0
      %1187 = vst.msk [vmem:[#allocation2 + $0x1a8] sm:$0x3] %vm1135, 0.0
      %s1188 = scalar_lea.vmem [#allocation2], 24
      %1189 = vst.msk [vmem:[%s1188 + $0x1] sm:$0xff] %vm696, %v1101
      %1190 = vst.msk [vmem:[%s1188 + $0x9] sm:$0xff] %vm696, %v1102
      %1191 = vst.msk [vmem:[%s1188 + $0x19] sm:$0xff] %vm696, %v1103
      %1192 = vst.msk [vmem:[%s1188 + $0x21] sm:$0xff] %vm696, %v1104
      %1193 = vst.msk [vmem:[%s1188 + $0x31] sm:$0xff] %vm696, %v1105
      %1194 = vst.msk [vmem:[%s1188 + $0x39] sm:$0xff] %vm696, %v1106
      %1195 = vst.msk [vmem:[%s1188 + $0x49] sm:$0xff] %vm696, %v1107
      %1196 = vst.msk [vmem:[%s1188 + $0x51] sm:$0xff] %vm696, %v1108
      %1197 = vst.msk [vmem:[%s1188 + $0x61] sm:$0xff] %vm696, %v1109
      %1198 = vst.msk [vmem:[%s1188 + $0x69] sm:$0xff] %vm696, %v1110
      %1199 = vst.msk [vmem:[%s1188 + $0x79] sm:$0xff] %vm696, %v1111
      %1200 = vst.msk [vmem:[%s1188 + $0x81] sm:$0xff] %vm696, %v1112
      %1201 = vst.msk [vmem:[%s1188 + $0x91] sm:$0xff] %vm696, %v1113
      %1202 = vst.msk [vmem:[%s1188 + $0x99] sm:$0xff] %vm696, %v1114
      %1203 = vst.msk [vmem:[%s1188 + $0xa9] sm:$0xff] %vm696, %v1115
      %1204 = vst.msk [vmem:[%s1188 + $0xb1] sm:$0xff] %vm696, %v1116
      %1205 = vst.msk [vmem:[%s1188 + $0xc1] sm:$0xff] %vm696, %v1117
      %1206 = vst.msk [vmem:[%s1188 + $0xc9] sm:$0xff] %vm696, %v1118
      %1207 = vst.msk [vmem:[%s1188 + $0xd9] sm:$0xff] %vm696, %v1119
      %1208 = vst.msk [vmem:[%s1188 + $0xe1] sm:$0xff] %vm696, %v1120
      %1209 = vst.msk [vmem:[%s1188 + $0xf1] sm:$0xff] %vm696, %v1121
      %1210 = vst.msk [vmem:[%s1188 + $0xf9] sm:$0xff] %vm696, %v1122
      %1211 = vst.msk [vmem:[%s1188 + $0x109] sm:$0xff] %vm696, %v1123
      %1212 = vst.msk [vmem:[%s1188 + $0x111] sm:$0xff] %vm696, %v1124
      %1213 = vst.msk [vmem:[%s1188 + $0x121] sm:$0xff] %vm696, %v1125
      %1214 = vst.msk [vmem:[%s1188 + $0x129] sm:$0xff] %vm696, %v1126
      %1215 = vst.msk [vmem:[%s1188 + $0x139] sm:$0xff] %vm696, %v1127
      %1216 = vst.msk [vmem:[%s1188 + $0x141] sm:$0xff] %vm696, %v1128
      %1217 = vst.msk [vmem:[%s1188 + $0x151] sm:$0xff] %vm696, %v1129
      %1218 = vst.msk [vmem:[%s1188 + $0x159] sm:$0xff] %vm696, %v1130
      %1219 = vst.msk [vmem:[%s1188 + $0x169] sm:$0xff] %vm696, %v1131
      %1220 = vst.msk [vmem:[%s1188 + $0x171] sm:$0xff] %vm696, %v1132
      %v1221 = vld [vmem:[#allocation2] sm:$0xff]
      %v1222 = vld [vmem:[#allocation2 + $0x8] sm:$0xff]
      %v1223 = vld [vmem:[#allocation2 + $0x18] sm:$0xff]
      %v1224 = vld [vmem:[#allocation2 + $0x20] sm:$0xff]
      %v1225 = vld [vmem:[#allocation2 + $0x30] sm:$0xff]
      %v1226 = vld [vmem:[#allocation2 + $0x38] sm:$0xff]
      %v1227 = vld [vmem:[#allocation2 + $0x48] sm:$0xff]
      %v1228 = vld [vmem:[#allocation2 + $0x50] sm:$0xff]
      %v1229 = vld [vmem:[#allocation2 + $0x60] sm:$0xff]
      %v1230 = vld [vmem:[#allocation2 + $0x68] sm:$0xff]
      %v1231 = vld [vmem:[#allocation2 + $0x78] sm:$0xff]
      %v1232 = vld [vmem:[#allocation2 + $0x80] sm:$0xff]
      %v1233 = vld [vmem:[#allocation2 + $0x90] sm:$0xff]
      %v1234 = vld [vmem:[#allocation2 + $0x98] sm:$0xff]
      %v1235 = vld [vmem:[#allocation2 + $0xa8] sm:$0xff]
      %v1236 = vld [vmem:[#allocation2 + $0xb0] sm:$0xff]
      %v1237 = vld [vmem:[#allocation2 + $0xc0] sm:$0xff]
      %v1238 = vld [vmem:[#allocation2 + $0xc8] sm:$0xff]
      %v1239 = vld [vmem:[#allocation2 + $0xd8] sm:$0xff]
      %v1240 = vld [vmem:[#allocation2 + $0xe0] sm:$0xff]
      %v1241 = vld [vmem:[#allocation2 + $0xf0] sm:$0xff]
      %v1242 = vld [vmem:[#allocation2 + $0xf8] sm:$0xff]
      %v1243 = vld [vmem:[#allocation2 + $0x108] sm:$0xff]
      %v1244 = vld [vmem:[#allocation2 + $0x110] sm:$0xff]
      %v1245 = vld [vmem:[#allocation2 + $0x120] sm:$0xff]
      %v1246 = vld [vmem:[#allocation2 + $0x128] sm:$0xff]
      %v1247 = vld [vmem:[#allocation2 + $0x138] sm:$0xff]
      %v1248 = vld [vmem:[#allocation2 + $0x140] sm:$0xff]
      %v1249 = vld [vmem:[#allocation2 + $0x150] sm:$0xff]
      %v1250 = vld [vmem:[#allocation2 + $0x158] sm:$0xff]
      %v1251 = vld [vmem:[#allocation2 + $0x168] sm:$0xff]
      %v1252 = vld [vmem:[#allocation2 + $0x170] sm:$0xff]
      %1253 = vst.msk [vmem:[#allocation3] sm:$0xff] %vm696, %v1221
      %1254 = vst.msk [vmem:[#allocation3 + $0x18] sm:$0xff] %vm696, %v1222
      %1255 = vst.msk [vmem:[#allocation3 + $0x30] sm:$0xff] %vm696, %v1223
      %1256 = vst.msk [vmem:[#allocation3 + $0x48] sm:$0xff] %vm696, %v1224
      %1257 = vst.msk [vmem:[#allocation3 + $0x60] sm:$0xff] %vm696, %v1225
      %1258 = vst.msk [vmem:[#allocation3 + $0x78] sm:$0xff] %vm696, %v1226
      %1259 = vst.msk [vmem:[#allocation3 + $0x90] sm:$0xff] %vm696, %v1227
      %1260 = vst.msk [vmem:[#allocation3 + $0xa8] sm:$0xff] %vm696, %v1228
      %1261 = vst.msk [vmem:[#allocation3 + $0xc0] sm:$0xff] %vm696, %v1229
      %1262 = vst.msk [vmem:[#allocation3 + $0xd8] sm:$0xff] %vm696, %v1230
      %1263 = vst.msk [vmem:[#allocation3 + $0xf0] sm:$0xff] %vm696, %v1231
      %1264 = vst.msk [vmem:[#allocation3 + $0x108] sm:$0xff] %vm696, %v1232
      %1265 = vst.msk [vmem:[#allocation3 + $0x120] sm:$0xff] %vm696, %v1233
      %1266 = vst.msk [vmem:[#allocation3 + $0x138] sm:$0xff] %vm696, %v1234
      %1267 = vst.msk [vmem:[#allocation3 + $0x150] sm:$0xff] %vm696, %v1235
      %1268 = vst.msk [vmem:[#allocation3 + $0x168] sm:$0xff] %vm696, %v1236
      %1269 = vst.msk [vmem:[#allocation3 + $0x180] sm:$0xff] %vm696, %v1237
      %1270 = vst.msk [vmem:[#allocation3 + $0x198] sm:$0xff] %vm696, %v1238
      %1271 = vst.msk [vmem:[#allocation3 + $0x1b0] sm:$0xff] %vm696, %v1239
      %1272 = vst.msk [vmem:[#allocation3 + $0x1c8] sm:$0xff] %vm696, %v1240
      %1273 = vst.msk [vmem:[#allocation3 + $0x1e0] sm:$0xff] %vm696, %v1241
      %1274 = vst.msk [vmem:[#allocation3 + $0x1f8] sm:$0xff] %vm696, %v1242
      %1275 = vst.msk [vmem:[#allocation3 + $0x210] sm:$0xff] %vm696, %v1243
      %1276 = vst.msk [vmem:[#allocation3 + $0x228] sm:$0xff] %vm696, %v1244
      %1277 = vst.msk [vmem:[#allocation3 + $0x240] sm:$0xff] %vm696, %v1245
      %1278 = vst.msk [vmem:[#allocation3 + $0x258] sm:$0xff] %vm696, %v1246
      %1279 = vst.msk [vmem:[#allocation3 + $0x270] sm:$0xff] %vm696, %v1247
      %1280 = vst.msk [vmem:[#allocation3 + $0x288] sm:$0xff] %vm696, %v1248
      %1281 = vst.msk [vmem:[#allocation3 + $0x2a0] sm:$0xff] %vm696, %v1249
      %1282 = vst.msk [vmem:[#allocation3 + $0x2b8] sm:$0xff] %vm696, %v1250
      %1283 = vst.msk [vmem:[#allocation3 + $0x2d0] sm:$0xff] %vm696, %v1251
      %1284 = vst.msk [vmem:[#allocation3 + $0x2e8] sm:$0xff] %vm696, %v1252
      %v1285 = vld [vmem:[#allocation2 + $0x1] sm:$0xff]
      %v1286 = vld [vmem:[#allocation2 + $0x9] sm:$0xff]
      %v1287 = vld [vmem:[#allocation2 + $0x19] sm:$0xff]
      %v1288 = vld [vmem:[#allocation2 + $0x21] sm:$0xff]
      %v1289 = vld [vmem:[#allocation2 + $0x31] sm:$0xff]
      %v1290 = vld [vmem:[#allocation2 + $0x39] sm:$0xff]
      %v1291 = vld [vmem:[#allocation2 + $0x49] sm:$0xff]
      %v1292 = vld [vmem:[#allocation2 + $0x51] sm:$0xff]
      %v1293 = vld [vmem:[#allocation2 + $0x61] sm:$0xff]
      %v1294 = vld [vmem:[#allocation2 + $0x69] sm:$0xff]
      %v1295 = vld [vmem:[#allocation2 + $0x79] sm:$0xff]
      %v1296 = vld [vmem:[#allocation2 + $0x81] sm:$0xff]
      %v1297 = vld [vmem:[#allocation2 + $0x91] sm:$0xff]
      %v1298 = vld [vmem:[#allocation2 + $0x99] sm:$0xff]
      %v1299 = vld [vmem:[#allocation2 + $0xa9] sm:$0xff]
      %v1300 = vld [vmem:[#allocation2 + $0xb1] sm:$0xff]
      %v1301 = vld [vmem:[#allocation2 + $0xc1] sm:$0xff]
      %v1302 = vld [vmem:[#allocation2 + $0xc9] sm:$0xff]
      %v1303 = vld [vmem:[#allocation2 + $0xd9] sm:$0xff]
      %v1304 = vld [vmem:[#allocation2 + $0xe1] sm:$0xff]
      %v1305 = vld [vmem:[#allocation2 + $0xf1] sm:$0xff]
      %v1306 = vld [vmem:[#allocation2 + $0xf9] sm:$0xff]
      %v1307 = vld [vmem:[#allocation2 + $0x109] sm:$0xff]
      %v1308 = vld [vmem:[#allocation2 + $0x111] sm:$0xff]
      %v1309 = vld [vmem:[#allocation2 + $0x121] sm:$0xff]
      %v1310 = vld [vmem:[#allocation2 + $0x129] sm:$0xff]
      %v1311 = vld [vmem:[#allocation2 + $0x139] sm:$0xff]
      %v1312 = vld [vmem:[#allocation2 + $0x141] sm:$0xff]
      %v1313 = vld [vmem:[#allocation2 + $0x151] sm:$0xff]
      %v1314 = vld [vmem:[#allocation2 + $0x159] sm:$0xff]
      %v1315 = vld [vmem:[#allocation2 + $0x169] sm:$0xff]
      %v1316 = vld [vmem:[#allocation2 + $0x171] sm:$0xff]
      %1349 = vrot.lane.b32.xlu0 %v1285, 32
      %v1350 = vpop.permute.xlu0 %1349
      %1351 = vrot.lane.b32.xlu0 %v1286, 32
      %v1352 = vpop.permute.xlu0 %1351
      %1353 = vrot.lane.b32.xlu0 %v1287, 32
      %v1354 = vpop.permute.xlu0 %1353
      %1355 = vrot.lane.b32.xlu0 %v1288, 32
      %v1356 = vpop.permute.xlu0 %1355
      %1357 = vrot.lane.b32.xlu0 %v1289, 32
      %v1358 = vpop.permute.xlu0 %1357
      %1359 = vrot.lane.b32.xlu0 %v1290, 32
      %v1360 = vpop.permute.xlu0 %1359
      %1361 = vrot.lane.b32.xlu0 %v1291, 32
      %v1362 = vpop.permute.xlu0 %1361
      %1363 = vrot.lane.b32.xlu0 %v1292, 32
      %v1364 = vpop.permute.xlu0 %1363
      %1365 = vrot.lane.b32.xlu0 %v1293, 32
      %v1366 = vpop.permute.xlu0 %1365
      %1367 = vrot.lane.b32.xlu0 %v1294, 32
      %v1368 = vpop.permute.xlu0 %1367
      %1369 = vrot.lane.b32.xlu0 %v1295, 32
      %v1370 = vpop.permute.xlu0 %1369
      %1371 = vrot.lane.b32.xlu0 %v1296, 32
      %v1372 = vpop.permute.xlu0 %1371
      %1373 = vrot.lane.b32.xlu0 %v1297, 32
      %v1374 = vpop.permute.xlu0 %1373
      %1375 = vrot.lane.b32.xlu0 %v1298, 32
      %v1376 = vpop.permute.xlu0 %1375
      %1377 = vrot.lane.b32.xlu0 %v1299, 32
      %v1378 = vpop.permute.xlu0 %1377
      %1379 = vrot.lane.b32.xlu0 %v1300, 32
      %v1380 = vpop.permute.xlu0 %1379
      %1381 = vrot.lane.b32.xlu0 %v1301, 32
      %v1382 = vpop.permute.xlu0 %1381
      %1383 = vrot.lane.b32.xlu0 %v1302, 32
      %v1384 = vpop.permute.xlu0 %1383
      %1385 = vrot.lane.b32.xlu0 %v1303, 32
      %v1386 = vpop.permute.xlu0 %1385
      %1387 = vrot.lane.b32.xlu0 %v1304, 32
      %v1388 = vpop.permute.xlu0 %1387
      %1389 = vrot.lane.b32.xlu0 %v1305, 32
      %v1390 = vpop.permute.xlu0 %1389
      %1391 = vrot.lane.b32.xlu0 %v1306, 32
      %v1392 = vpop.permute.xlu0 %1391
      %1393 = vrot.lane.b32.xlu0 %v1307, 32
      %v1394 = vpop.permute.xlu0 %1393
      %1395 = vrot.lane.b32.xlu0 %v1308, 32
      %v1396 = vpop.permute.xlu0 %1395
      %1397 = vrot.lane.b32.xlu0 %v1309, 32
      %v1398 = vpop.permute.xlu0 %1397
      %1399 = vrot.lane.b32.xlu0 %v1310, 32
      %v1400 = vpop.permute.xlu0 %1399
      %1401 = vrot.lane.b32.xlu0 %v1311, 32
      %v1402 = vpop.permute.xlu0 %1401
      %1403 = vrot.lane.b32.xlu0 %v1312, 32
      %v1404 = vpop.permute.xlu0 %1403
      %1405 = vrot.lane.b32.xlu0 %v1313, 32
      %v1406 = vpop.permute.xlu0 %1405
      %1407 = vrot.lane.b32.xlu0 %v1314, 32
      %v1408 = vpop.permute.xlu0 %1407
      %1409 = vrot.lane.b32.xlu0 %v1315, 32
      %v1410 = vpop.permute.xlu0 %1409
      %1411 = vrot.lane.b32.xlu0 %v1316, 32
      %v1412 = vpop.permute.xlu0 %1411
      %vm1445 = vcmask 523520
      %1446 = vst.msk [vmem:[#allocation3] sm:$0xff] %vm1445, %v1350
      %1447 = vst.msk [vmem:[#allocation3 + $0x18] sm:$0xff] %vm1445, %v1352
      %1448 = vst.msk [vmem:[#allocation3 + $0x30] sm:$0xff] %vm1445, %v1354
      %1449 = vst.msk [vmem:[#allocation3 + $0x48] sm:$0xff] %vm1445, %v1356
      %1450 = vst.msk [vmem:[#allocation3 + $0x60] sm:$0xff] %vm1445, %v1358
      %1451 = vst.msk [vmem:[#allocation3 + $0x78] sm:$0xff] %vm1445, %v1360
      %1452 = vst.msk [vmem:[#allocation3 + $0x90] sm:$0xff] %vm1445, %v1362
      %1453 = vst.msk [vmem:[#allocation3 + $0xa8] sm:$0xff] %vm1445, %v1364
      %1454 = vst.msk [vmem:[#allocation3 + $0xc0] sm:$0xff] %vm1445, %v1366
      %1455 = vst.msk [vmem:[#allocation3 + $0xd8] sm:$0xff] %vm1445, %v1368
      %1456 = vst.msk [vmem:[#allocation3 + $0xf0] sm:$0xff] %vm1445, %v1370
      %1457 = vst.msk [vmem:[#allocation3 + $0x108] sm:$0xff] %vm1445, %v1372
      %1458 = vst.msk [vmem:[#allocation3 + $0x120] sm:$0xff] %vm1445, %v1374
      %1459 = vst.msk [vmem:[#allocation3 + $0x138] sm:$0xff] %vm1445, %v1376
      %1460 = vst.msk [vmem:[#allocation3 + $0x150] sm:$0xff] %vm1445, %v1378
      %1461 = vst.msk [vmem:[#allocation3 + $0x168] sm:$0xff] %vm1445, %v1380
      %1462 = vst.msk [vmem:[#allocation3 + $0x180] sm:$0xff] %vm1445, %v1382
      %1463 = vst.msk [vmem:[#allocation3 + $0x198] sm:$0xff] %vm1445, %v1384
      %1464 = vst.msk [vmem:[#allocation3 + $0x1b0] sm:$0xff] %vm1445, %v1386
      %1465 = vst.msk [vmem:[#allocation3 + $0x1c8] sm:$0xff] %vm1445, %v1388
      %1466 = vst.msk [vmem:[#allocation3 + $0x1e0] sm:$0xff] %vm1445, %v1390
      %1467 = vst.msk [vmem:[#allocation3 + $0x1f8] sm:$0xff] %vm1445, %v1392
      %1468 = vst.msk [vmem:[#allocation3 + $0x210] sm:$0xff] %vm1445, %v1394
      %1469 = vst.msk [vmem:[#allocation3 + $0x228] sm:$0xff] %vm1445, %v1396
      %1470 = vst.msk [vmem:[#allocation3 + $0x240] sm:$0xff] %vm1445, %v1398
      %1471 = vst.msk [vmem:[#allocation3 + $0x258] sm:$0xff] %vm1445, %v1400
      %1472 = vst.msk [vmem:[#allocation3 + $0x270] sm:$0xff] %vm1445, %v1402
      %1473 = vst.msk [vmem:[#allocation3 + $0x288] sm:$0xff] %vm1445, %v1404
      %1474 = vst.msk [vmem:[#allocation3 + $0x2a0] sm:$0xff] %vm1445, %v1406
      %1475 = vst.msk [vmem:[#allocation3 + $0x2b8] sm:$0xff] %vm1445, %v1408
      %1476 = vst.msk [vmem:[#allocation3 + $0x2d0] sm:$0xff] %vm1445, %v1410
      %1477 = vst.msk [vmem:[#allocation3 + $0x2e8] sm:$0xff] %vm1445, %v1412
      %v1478 = vld [vmem:[#allocation2 + $0x2] sm:$0xff]
      %v1479 = vld [vmem:[#allocation2 + $0xa] sm:$0xff]
      %v1480 = vld [vmem:[#allocation2 + $0x1a] sm:$0xff]
      %v1481 = vld [vmem:[#allocation2 + $0x22] sm:$0xff]
      %v1482 = vld [vmem:[#allocation2 + $0x32] sm:$0xff]
      %v1483 = vld [vmem:[#allocation2 + $0x3a] sm:$0xff]
      %v1484 = vld [vmem:[#allocation2 + $0x4a] sm:$0xff]
      %v1485 = vld [vmem:[#allocation2 + $0x52] sm:$0xff]
      %v1486 = vld [vmem:[#allocation2 + $0x62] sm:$0xff]
      %v1487 = vld [vmem:[#allocation2 + $0x6a] sm:$0xff]
      %v1488 = vld [vmem:[#allocation2 + $0x7a] sm:$0xff]
      %v1489 = vld [vmem:[#allocation2 + $0x82] sm:$0xff]
      %v1490 = vld [vmem:[#allocation2 + $0x92] sm:$0xff]
      %v1491 = vld [vmem:[#allocation2 + $0x9a] sm:$0xff]
      %v1492 = vld [vmem:[#allocation2 + $0xaa] sm:$0xff]
      %v1493 = vld [vmem:[#allocation2 + $0xb2] sm:$0xff]
      %v1494 = vld [vmem:[#allocation2 + $0xc2] sm:$0xff]
      %v1495 = vld [vmem:[#allocation2 + $0xca] sm:$0xff]
      %v1496 = vld [vmem:[#allocation2 + $0xda] sm:$0xff]
      %v1497 = vld [vmem:[#allocation2 + $0xe2] sm:$0xff]
      %v1498 = vld [vmem:[#allocation2 + $0xf2] sm:$0xff]
      %v1499 = vld [vmem:[#allocation2 + $0xfa] sm:$0xff]
      %v1500 = vld [vmem:[#allocation2 + $0x10a] sm:$0xff]
      %v1501 = vld [vmem:[#allocation2 + $0x112] sm:$0xff]
      %v1502 = vld [vmem:[#allocation2 + $0x122] sm:$0xff]
      %v1503 = vld [vmem:[#allocation2 + $0x12a] sm:$0xff]
      %v1504 = vld [vmem:[#allocation2 + $0x13a] sm:$0xff]
      %v1505 = vld [vmem:[#allocation2 + $0x142] sm:$0xff]
      %v1506 = vld [vmem:[#allocation2 + $0x152] sm:$0xff]
      %v1507 = vld [vmem:[#allocation2 + $0x15a] sm:$0xff]
      %v1508 = vld [vmem:[#allocation2 + $0x16a] sm:$0xff]
      %v1509 = vld [vmem:[#allocation2 + $0x172] sm:$0xff]
      %1542 = vrot.lane.b32.xlu0 %v1478, 64
      %v1543 = vpop.permute.xlu0 %1542
      %1544 = vrot.lane.b32.xlu0 %v1479, 64
      %v1545 = vpop.permute.xlu0 %1544
      %1546 = vrot.lane.b32.xlu0 %v1480, 64
      %v1547 = vpop.permute.xlu0 %1546
      %1548 = vrot.lane.b32.xlu0 %v1481, 64
      %v1549 = vpop.permute.xlu0 %1548
      %1550 = vrot.lane.b32.xlu0 %v1482, 64
      %v1551 = vpop.permute.xlu0 %1550
      %1552 = vrot.lane.b32.xlu0 %v1483, 64
      %v1553 = vpop.permute.xlu0 %1552
      %1554 = vrot.lane.b32.xlu0 %v1484, 64
      %v1555 = vpop.permute.xlu0 %1554
      %1556 = vrot.lane.b32.xlu0 %v1485, 64
      %v1557 = vpop.permute.xlu0 %1556
      %1558 = vrot.lane.b32.xlu0 %v1486, 64
      %v1559 = vpop.permute.xlu0 %1558
      %1560 = vrot.lane.b32.xlu0 %v1487, 64
      %v1561 = vpop.permute.xlu0 %1560
      %1562 = vrot.lane.b32.xlu0 %v1488, 64
      %v1563 = vpop.permute.xlu0 %1562
      %1564 = vrot.lane.b32.xlu0 %v1489, 64
      %v1565 = vpop.permute.xlu0 %1564
      %1566 = vrot.lane.b32.xlu0 %v1490, 64
      %v1567 = vpop.permute.xlu0 %1566
      %1568 = vrot.lane.b32.xlu0 %v1491, 64
      %v1569 = vpop.permute.xlu0 %1568
      %1570 = vrot.lane.b32.xlu0 %v1492, 64
      %v1571 = vpop.permute.xlu0 %1570
      %1572 = vrot.lane.b32.xlu0 %v1493, 64
      %v1573 = vpop.permute.xlu0 %1572
      %1574 = vrot.lane.b32.xlu0 %v1494, 64
      %v1575 = vpop.permute.xlu0 %1574
      %1576 = vrot.lane.b32.xlu0 %v1495, 64
      %v1577 = vpop.permute.xlu0 %1576
      %1578 = vrot.lane.b32.xlu0 %v1496, 64
      %v1579 = vpop.permute.xlu0 %1578
      %1580 = vrot.lane.b32.xlu0 %v1497, 64
      %v1581 = vpop.permute.xlu0 %1580
      %1582 = vrot.lane.b32.xlu0 %v1498, 64
      %v1583 = vpop.permute.xlu0 %1582
      %1584 = vrot.lane.b32.xlu0 %v1499, 64
      %v1585 = vpop.permute.xlu0 %1584
      %1586 = vrot.lane.b32.xlu0 %v1500, 64
      %v1587 = vpop.permute.xlu0 %1586
      %1588 = vrot.lane.b32.xlu0 %v1501, 64
      %v1589 = vpop.permute.xlu0 %1588
      %1590 = vrot.lane.b32.xlu0 %v1502, 64
      %v1591 = vpop.permute.xlu0 %1590
      %1592 = vrot.lane.b32.xlu0 %v1503, 64
      %v1593 = vpop.permute.xlu0 %1592
      %1594 = vrot.lane.b32.xlu0 %v1504, 64
      %v1595 = vpop.permute.xlu0 %1594
      %1596 = vrot.lane.b32.xlu0 %v1505, 64
      %v1597 = vpop.permute.xlu0 %1596
      %1598 = vrot.lane.b32.xlu0 %v1506, 64
      %v1599 = vpop.permute.xlu0 %1598
      %1600 = vrot.lane.b32.xlu0 %v1507, 64
      %v1601 = vpop.permute.xlu0 %1600
      %1602 = vrot.lane.b32.xlu0 %v1508, 64
      %v1603 = vpop.permute.xlu0 %1602
      %1604 = vrot.lane.b32.xlu0 %v1509, 64
      %v1605 = vpop.permute.xlu0 %1604
      %vm1638 = vcmask 785920
      %1639 = vst.msk [vmem:[#allocation3] sm:$0xff] %vm1638, %v1543
      %1640 = vst.msk [vmem:[#allocation3 + $0x18] sm:$0xff] %vm1638, %v1545
      %1641 = vst.msk [vmem:[#allocation3 + $0x30] sm:$0xff] %vm1638, %v1547
      %1642 = vst.msk [vmem:[#allocation3 + $0x48] sm:$0xff] %vm1638, %v1549
      %1643 = vst.msk [vmem:[#allocation3 + $0x60] sm:$0xff] %vm1638, %v1551
      %1644 = vst.msk [vmem:[#allocation3 + $0x78] sm:$0xff] %vm1638, %v1553
      %1645 = vst.msk [vmem:[#allocation3 + $0x90] sm:$0xff] %vm1638, %v1555
      %1646 = vst.msk [vmem:[#allocation3 + $0xa8] sm:$0xff] %vm1638, %v1557
      %1647 = vst.msk [vmem:[#allocation3 + $0xc0] sm:$0xff] %vm1638, %v1559
      %1648 = vst.msk [vmem:[#allocation3 + $0xd8] sm:$0xff] %vm1638, %v1561
      %1649 = vst.msk [vmem:[#allocation3 + $0xf0] sm:$0xff] %vm1638, %v1563
      %1650 = vst.msk [vmem:[#allocation3 + $0x108] sm:$0xff] %vm1638, %v1565
      %1651 = vst.msk [vmem:[#allocation3 + $0x120] sm:$0xff] %vm1638, %v1567
      %1652 = vst.msk [vmem:[#allocation3 + $0x138] sm:$0xff] %vm1638, %v1569
      %1653 = vst.msk [vmem:[#allocation3 + $0x150] sm:$0xff] %vm1638, %v1571
      %1654 = vst.msk [vmem:[#allocation3 + $0x168] sm:$0xff] %vm1638, %v1573
      %1655 = vst.msk [vmem:[#allocation3 + $0x180] sm:$0xff] %vm1638, %v1575
      %1656 = vst.msk [vmem:[#allocation3 + $0x198] sm:$0xff] %vm1638, %v1577
      %1657 = vst.msk [vmem:[#allocation3 + $0x1b0] sm:$0xff] %vm1638, %v1579
      %1658 = vst.msk [vmem:[#allocation3 + $0x1c8] sm:$0xff] %vm1638, %v1581
      %1659 = vst.msk [vmem:[#allocation3 + $0x1e0] sm:$0xff] %vm1638, %v1583
      %1660 = vst.msk [vmem:[#allocation3 + $0x1f8] sm:$0xff] %vm1638, %v1585
      %1661 = vst.msk [vmem:[#allocation3 + $0x210] sm:$0xff] %vm1638, %v1587
      %1662 = vst.msk [vmem:[#allocation3 + $0x228] sm:$0xff] %vm1638, %v1589
      %1663 = vst.msk [vmem:[#allocation3 + $0x240] sm:$0xff] %vm1638, %v1591
      %1664 = vst.msk [vmem:[#allocation3 + $0x258] sm:$0xff] %vm1638, %v1593
      %1665 = vst.msk [vmem:[#allocation3 + $0x270] sm:$0xff] %vm1638, %v1595
      %1666 = vst.msk [vmem:[#allocation3 + $0x288] sm:$0xff] %vm1638, %v1597
      %1667 = vst.msk [vmem:[#allocation3 + $0x2a0] sm:$0xff] %vm1638, %v1599
      %1668 = vst.msk [vmem:[#allocation3 + $0x2b8] sm:$0xff] %vm1638, %v1601
      %1669 = vst.msk [vmem:[#allocation3 + $0x2d0] sm:$0xff] %vm1638, %v1603
      %1670 = vst.msk [vmem:[#allocation3 + $0x2e8] sm:$0xff] %vm1638, %v1605
      %v1671 = vld [vmem:[%s1188] sm:$0xff]
      %v1672 = vld [vmem:[%s1188 + $0x8] sm:$0xff]
      %v1673 = vld [vmem:[%s1188 + $0x18] sm:$0xff]
      %v1674 = vld [vmem:[%s1188 + $0x20] sm:$0xff]
      %v1675 = vld [vmem:[%s1188 + $0x30] sm:$0xff]
      %v1676 = vld [vmem:[%s1188 + $0x38] sm:$0xff]
      %v1677 = vld [vmem:[%s1188 + $0x48] sm:$0xff]
      %v1678 = vld [vmem:[%s1188 + $0x50] sm:$0xff]
      %v1679 = vld [vmem:[%s1188 + $0x60] sm:$0xff]
      %v1680 = vld [vmem:[%s1188 + $0x68] sm:$0xff]
      %v1681 = vld [vmem:[%s1188 + $0x78] sm:$0xff]
      %v1682 = vld [vmem:[%s1188 + $0x80] sm:$0xff]
      %v1683 = vld [vmem:[%s1188 + $0x90] sm:$0xff]
      %v1684 = vld [vmem:[%s1188 + $0x98] sm:$0xff]
      %v1685 = vld [vmem:[%s1188 + $0xa8] sm:$0xff]
      %v1686 = vld [vmem:[%s1188 + $0xb0] sm:$0xff]
      %v1687 = vld [vmem:[%s1188 + $0xc0] sm:$0xff]
      %v1688 = vld [vmem:[%s1188 + $0xc8] sm:$0xff]
      %v1689 = vld [vmem:[%s1188 + $0xd8] sm:$0xff]
      %v1690 = vld [vmem:[%s1188 + $0xe0] sm:$0xff]
      %v1691 = vld [vmem:[%s1188 + $0xf0] sm:$0xff]
      %v1692 = vld [vmem:[%s1188 + $0xf8] sm:$0xff]
      %v1693 = vld [vmem:[%s1188 + $0x108] sm:$0xff]
      %v1694 = vld [vmem:[%s1188 + $0x110] sm:$0xff]
      %v1695 = vld [vmem:[%s1188 + $0x120] sm:$0xff]
      %v1696 = vld [vmem:[%s1188 + $0x128] sm:$0xff]
      %v1697 = vld [vmem:[%s1188 + $0x138] sm:$0xff]
      %v1698 = vld [vmem:[%s1188 + $0x140] sm:$0xff]
      %v1699 = vld [vmem:[%s1188 + $0x150] sm:$0xff]
      %v1700 = vld [vmem:[%s1188 + $0x158] sm:$0xff]
      %v1701 = vld [vmem:[%s1188 + $0x168] sm:$0xff]
      %v1702 = vld [vmem:[%s1188 + $0x170] sm:$0xff]
      %1735 = vrot.lane.b32.xlu0 %v1671, 96
      %v1736 = vpop.permute.xlu0 %1735
      %1737 = vrot.lane.b32.xlu0 %v1672, 96
      %v1738 = vpop.permute.xlu0 %1737
      %1739 = vrot.lane.b32.xlu0 %v1673, 96
      %v1740 = vpop.permute.xlu0 %1739
      %1741 = vrot.lane.b32.xlu0 %v1674, 96
      %v1742 = vpop.permute.xlu0 %1741
      %1743 = vrot.lane.b32.xlu0 %v1675, 96
      %v1744 = vpop.permute.xlu0 %1743
      %1745 = vrot.lane.b32.xlu0 %v1676, 96
      %v1746 = vpop.permute.xlu0 %1745
      %1747 = vrot.lane.b32.xlu0 %v1677, 96
      %v1748 = vpop.permute.xlu0 %1747
      %1749 = vrot.lane.b32.xlu0 %v1678, 96
      %v1750 = vpop.permute.xlu0 %1749
      %1751 = vrot.lane.b32.xlu0 %v1679, 96
      %v1752 = vpop.permute.xlu0 %1751
      %1753 = vrot.lane.b32.xlu0 %v1680, 96
      %v1754 = vpop.permute.xlu0 %1753
      %1755 = vrot.lane.b32.xlu0 %v1681, 96
      %v1756 = vpop.permute.xlu0 %1755
      %1757 = vrot.lane.b32.xlu0 %v1682, 96
      %v1758 = vpop.permute.xlu0 %1757
      %1759 = vrot.lane.b32.xlu0 %v1683, 96
      %v1760 = vpop.permute.xlu0 %1759
      %1761 = vrot.lane.b32.xlu0 %v1684, 96
      %v1762 = vpop.permute.xlu0 %1761
      %1763 = vrot.lane.b32.xlu0 %v1685, 96
      %v1764 = vpop.permute.xlu0 %1763
      %1765 = vrot.lane.b32.xlu0 %v1686, 96
      %v1766 = vpop.permute.xlu0 %1765
      %1767 = vrot.lane.b32.xlu0 %v1687, 96
      %v1768 = vpop.permute.xlu0 %1767
      %1769 = vrot.lane.b32.xlu0 %v1688, 96
      %v1770 = vpop.permute.xlu0 %1769
      %1771 = vrot.lane.b32.xlu0 %v1689, 96
      %v1772 = vpop.permute.xlu0 %1771
      %1773 = vrot.lane.b32.xlu0 %v1690, 96
      %v1774 = vpop.permute.xlu0 %1773
      %1775 = vrot.lane.b32.xlu0 %v1691, 96
      %v1776 = vpop.permute.xlu0 %1775
      %1777 = vrot.lane.b32.xlu0 %v1692, 96
      %v1778 = vpop.permute.xlu0 %1777
      %1779 = vrot.lane.b32.xlu0 %v1693, 96
      %v1780 = vpop.permute.xlu0 %1779
      %1781 = vrot.lane.b32.xlu0 %v1694, 96
      %v1782 = vpop.permute.xlu0 %1781
      %1783 = vrot.lane.b32.xlu0 %v1695, 96
      %v1784 = vpop.permute.xlu0 %1783
      %1785 = vrot.lane.b32.xlu0 %v1696, 96
      %v1786 = vpop.permute.xlu0 %1785
      %1787 = vrot.lane.b32.xlu0 %v1697, 96
      %v1788 = vpop.permute.xlu0 %1787
      %1789 = vrot.lane.b32.xlu0 %v1698, 96
      %v1790 = vpop.permute.xlu0 %1789
      %1791 = vrot.lane.b32.xlu0 %v1699, 96
      %v1792 = vpop.permute.xlu0 %1791
      %1793 = vrot.lane.b32.xlu0 %v1700, 96
      %v1794 = vpop.permute.xlu0 %1793
      %1795 = vrot.lane.b32.xlu0 %v1701, 96
      %v1796 = vpop.permute.xlu0 %1795
      %1797 = vrot.lane.b32.xlu0 %v1702, 96
      %v1798 = vpop.permute.xlu0 %1797
      %vm1831 = vcmask 1048320
      %1832 = vst.msk [vmem:[#allocation3] sm:$0xff] %vm1831, %v1736
      %1833 = vst.msk [vmem:[#allocation3 + $0x18] sm:$0xff] %vm1831, %v1738
      %1834 = vst.msk [vmem:[#allocation3 + $0x30] sm:$0xff] %vm1831, %v1740
      %1835 = vst.msk [vmem:[#allocation3 + $0x48] sm:$0xff] %vm1831, %v1742
      %1836 = vst.msk [vmem:[#allocation3 + $0x60] sm:$0xff] %vm1831, %v1744
      %1837 = vst.msk [vmem:[#allocation3 + $0x78] sm:$0xff] %vm1831, %v1746
      %1838 = vst.msk [vmem:[#allocation3 + $0x90] sm:$0xff] %vm1831, %v1748
      %1839 = vst.msk [vmem:[#allocation3 + $0xa8] sm:$0xff] %vm1831, %v1750
      %1840 = vst.msk [vmem:[#allocation3 + $0xc0] sm:$0xff] %vm1831, %v1752
      %1841 = vst.msk [vmem:[#allocation3 + $0xd8] sm:$0xff] %vm1831, %v1754
      %1842 = vst.msk [vmem:[#allocation3 + $0xf0] sm:$0xff] %vm1831, %v1756
      %1843 = vst.msk [vmem:[#allocation3 + $0x108] sm:$0xff] %vm1831, %v1758
      %1844 = vst.msk [vmem:[#allocation3 + $0x120] sm:$0xff] %vm1831, %v1760
      %1845 = vst.msk [vmem:[#allocation3 + $0x138] sm:$0xff] %vm1831, %v1762
      %1846 = vst.msk [vmem:[#allocation3 + $0x150] sm:$0xff] %vm1831, %v1764
      %1847 = vst.msk [vmem:[#allocation3 + $0x168] sm:$0xff] %vm1831, %v1766
      %1848 = vst.msk [vmem:[#allocation3 + $0x180] sm:$0xff] %vm1831, %v1768
      %1849 = vst.msk [vmem:[#allocation3 + $0x198] sm:$0xff] %vm1831, %v1770
      %1850 = vst.msk [vmem:[#allocation3 + $0x1b0] sm:$0xff] %vm1831, %v1772
      %1851 = vst.msk [vmem:[#allocation3 + $0x1c8] sm:$0xff] %vm1831, %v1774
      %1852 = vst.msk [vmem:[#allocation3 + $0x1e0] sm:$0xff] %vm1831, %v1776
      %1853 = vst.msk [vmem:[#allocation3 + $0x1f8] sm:$0xff] %vm1831, %v1778
      %1854 = vst.msk [vmem:[#allocation3 + $0x210] sm:$0xff] %vm1831, %v1780
      %1855 = vst.msk [vmem:[#allocation3 + $0x228] sm:$0xff] %vm1831, %v1782
      %1856 = vst.msk [vmem:[#allocation3 + $0x240] sm:$0xff] %vm1831, %v1784
      %1857 = vst.msk [vmem:[#allocation3 + $0x258] sm:$0xff] %vm1831, %v1786
      %1858 = vst.msk [vmem:[#allocation3 + $0x270] sm:$0xff] %vm1831, %v1788
      %1859 = vst.msk [vmem:[#allocation3 + $0x288] sm:$0xff] %vm1831, %v1790
      %1860 = vst.msk [vmem:[#allocation3 + $0x2a0] sm:$0xff] %vm1831, %v1792
      %1861 = vst.msk [vmem:[#allocation3 + $0x2b8] sm:$0xff] %vm1831, %v1794
      %1862 = vst.msk [vmem:[#allocation3 + $0x2d0] sm:$0xff] %vm1831, %v1796
      %1863 = vst.msk [vmem:[#allocation3 + $0x2e8] sm:$0xff] %vm1831, %v1798
      %v1864 = vld [vmem:[%s1188 + $0x1] sm:$0xff]
      %v1865 = vld [vmem:[%s1188 + $0x9] sm:$0xff]
      %v1866 = vld [vmem:[%s1188 + $0x19] sm:$0xff]
      %v1867 = vld [vmem:[%s1188 + $0x21] sm:$0xff]
      %v1868 = vld [vmem:[%s1188 + $0x31] sm:$0xff]
      %v1869 = vld [vmem:[%s1188 + $0x39] sm:$0xff]
      %v1870 = vld [vmem:[%s1188 + $0x49] sm:$0xff]
      %v1871 = vld [vmem:[%s1188 + $0x51] sm:$0xff]
      %v1872 = vld [vmem:[%s1188 + $0x61] sm:$0xff]
      %v1873 = vld [vmem:[%s1188 + $0x69] sm:$0xff]
      %v1874 = vld [vmem:[%s1188 + $0x79] sm:$0xff]
      %v1875 = vld [vmem:[%s1188 + $0x81] sm:$0xff]
      %v1876 = vld [vmem:[%s1188 + $0x91] sm:$0xff]
      %v1877 = vld [vmem:[%s1188 + $0x99] sm:$0xff]
      %v1878 = vld [vmem:[%s1188 + $0xa9] sm:$0xff]
      %v1879 = vld [vmem:[%s1188 + $0xb1] sm:$0xff]
      %v1880 = vld [vmem:[%s1188 + $0xc1] sm:$0xff]
      %v1881 = vld [vmem:[%s1188 + $0xc9] sm:$0xff]
      %v1882 = vld [vmem:[%s1188 + $0xd9] sm:$0xff]
      %v1883 = vld [vmem:[%s1188 + $0xe1] sm:$0xff]
      %v1884 = vld [vmem:[%s1188 + $0xf1] sm:$0xff]
      %v1885 = vld [vmem:[%s1188 + $0xf9] sm:$0xff]
      %v1886 = vld [vmem:[%s1188 + $0x109] sm:$0xff]
      %v1887 = vld [vmem:[%s1188 + $0x111] sm:$0xff]
      %v1888 = vld [vmem:[%s1188 + $0x121] sm:$0xff]
      %v1889 = vld [vmem:[%s1188 + $0x129] sm:$0xff]
      %v1890 = vld [vmem:[%s1188 + $0x139] sm:$0xff]
      %v1891 = vld [vmem:[%s1188 + $0x141] sm:$0xff]
      %v1892 = vld [vmem:[%s1188 + $0x151] sm:$0xff]
      %v1893 = vld [vmem:[%s1188 + $0x159] sm:$0xff]
      %v1894 = vld [vmem:[%s1188 + $0x169] sm:$0xff]
      %v1895 = vld [vmem:[%s1188 + $0x171] sm:$0xff]
      %1896 = vst.msk [vmem:[#allocation3 + $0x8] sm:$0xff] %vm696, %v1864
      %1897 = vst.msk [vmem:[#allocation3 + $0x20] sm:$0xff] %vm696, %v1865
      %1898 = vst.msk [vmem:[#allocation3 + $0x38] sm:$0xff] %vm696, %v1866
      %1899 = vst.msk [vmem:[#allocation3 + $0x50] sm:$0xff] %vm696, %v1867
      %1900 = vst.msk [vmem:[#allocation3 + $0x68] sm:$0xff] %vm696, %v1868
      %1901 = vst.msk [vmem:[#allocation3 + $0x80] sm:$0xff] %vm696, %v1869
      %1902 = vst.msk [vmem:[#allocation3 + $0x98] sm:$0xff] %vm696, %v1870
      %1903 = vst.msk [vmem:[#allocation3 + $0xb0] sm:$0xff] %vm696, %v1871
      %1904 = vst.msk [vmem:[#allocation3 + $0xc8] sm:$0xff] %vm696, %v1872
      %1905 = vst.msk [vmem:[#allocation3 + $0xe0] sm:$0xff] %vm696, %v1873
      %1906 = vst.msk [vmem:[#allocation3 + $0xf8] sm:$0xff] %vm696, %v1874
      %1907 = vst.msk [vmem:[#allocation3 + $0x110] sm:$0xff] %vm696, %v1875
      %1908 = vst.msk [vmem:[#allocation3 + $0x128] sm:$0xff] %vm696, %v1876
      %1909 = vst.msk [vmem:[#allocation3 + $0x140] sm:$0xff] %vm696, %v1877
      %1910 = vst.msk [vmem:[#allocation3 + $0x158] sm:$0xff] %vm696, %v1878
      %1911 = vst.msk [vmem:[#allocation3 + $0x170] sm:$0xff] %vm696, %v1879
      %1912 = vst.msk [vmem:[#allocation3 + $0x188] sm:$0xff] %vm696, %v1880
      %1913 = vst.msk [vmem:[#allocation3 + $0x1a0] sm:$0xff] %vm696, %v1881
      %1914 = vst.msk [vmem:[#allocation3 + $0x1b8] sm:$0xff] %vm696, %v1882
      %1915 = vst.msk [vmem:[#allocation3 + $0x1d0] sm:$0xff] %vm696, %v1883
      %1916 = vst.msk [vmem:[#allocation3 + $0x1e8] sm:$0xff] %vm696, %v1884
      %1917 = vst.msk [vmem:[#allocation3 + $0x200] sm:$0xff] %vm696, %v1885
      %1918 = vst.msk [vmem:[#allocation3 + $0x218] sm:$0xff] %vm696, %v1886
      %1919 = vst.msk [vmem:[#allocation3 + $0x230] sm:$0xff] %vm696, %v1887
      %1920 = vst.msk [vmem:[#allocation3 + $0x248] sm:$0xff] %vm696, %v1888
      %1921 = vst.msk [vmem:[#allocation3 + $0x260] sm:$0xff] %vm696, %v1889
      %1922 = vst.msk [vmem:[#allocation3 + $0x278] sm:$0xff] %vm696, %v1890
      %1923 = vst.msk [vmem:[#allocation3 + $0x290] sm:$0xff] %vm696, %v1891
      %1924 = vst.msk [vmem:[#allocation3 + $0x2a8] sm:$0xff] %vm696, %v1892
      %1925 = vst.msk [vmem:[#allocation3 + $0x2c0] sm:$0xff] %vm696, %v1893
      %1926 = vst.msk [vmem:[#allocation3 + $0x2d8] sm:$0xff] %vm696, %v1894
      %1927 = vst.msk [vmem:[#allocation3 + $0x2f0] sm:$0xff] %vm696, %v1895
      %v1928 = vld [vmem:[%s1188 + $0x2] sm:$0xff]
      %v1929 = vld [vmem:[%s1188 + $0xa] sm:$0xff]
      %v1930 = vld [vmem:[%s1188 + $0x1a] sm:$0xff]
      %v1931 = vld [vmem:[%s1188 + $0x22] sm:$0xff]
      %v1932 = vld [vmem:[%s1188 + $0x32] sm:$0xff]
      %v1933 = vld [vmem:[%s1188 + $0x3a] sm:$0xff]
      %v1934 = vld [vmem:[%s1188 + $0x4a] sm:$0xff]
      %v1935 = vld [vmem:[%s1188 + $0x52] sm:$0xff]
      %v1936 = vld [vmem:[%s1188 + $0x62] sm:$0xff]
      %v1937 = vld [vmem:[%s1188 + $0x6a] sm:$0xff]
      %v1938 = vld [vmem:[%s1188 + $0x7a] sm:$0xff]
      %v1939 = vld [vmem:[%s1188 + $0x82] sm:$0xff]
      %v1940 = vld [vmem:[%s1188 + $0x92] sm:$0xff]
      %v1941 = vld [vmem:[%s1188 + $0x9a] sm:$0xff]
      %v1942 = vld [vmem:[%s1188 + $0xaa] sm:$0xff]
      %v1943 = vld [vmem:[%s1188 + $0xb2] sm:$0xff]
      %v1944 = vld [vmem:[%s1188 + $0xc2] sm:$0xff]
      %v1945 = vld [vmem:[%s1188 + $0xca] sm:$0xff]
      %v1946 = vld [vmem:[%s1188 + $0xda] sm:$0xff]
      %v1947 = vld [vmem:[%s1188 + $0xe2] sm:$0xff]
      %v1948 = vld [vmem:[%s1188 + $0xf2] sm:$0xff]
      %v1949 = vld [vmem:[%s1188 + $0xfa] sm:$0xff]
      %v1950 = vld [vmem:[%s1188 + $0x10a] sm:$0xff]
      %v1951 = vld [vmem:[%s1188 + $0x112] sm:$0xff]
      %v1952 = vld [vmem:[%s1188 + $0x122] sm:$0xff]
      %v1953 = vld [vmem:[%s1188 + $0x12a] sm:$0xff]
      %v1954 = vld [vmem:[%s1188 + $0x13a] sm:$0xff]
      %v1955 = vld [vmem:[%s1188 + $0x142] sm:$0xff]
      %v1956 = vld [vmem:[%s1188 + $0x152] sm:$0xff]
      %v1957 = vld [vmem:[%s1188 + $0x15a] sm:$0xff]
      %v1958 = vld [vmem:[%s1188 + $0x16a] sm:$0xff]
      %v1959 = vld [vmem:[%s1188 + $0x172] sm:$0xff]
      %1992 = vrot.lane.b32.xlu0 %v1928, 32
      %v1993 = vpop.permute.xlu0 %1992
      %1994 = vrot.lane.b32.xlu0 %v1929, 32
      %v1995 = vpop.permute.xlu0 %1994
      %1996 = vrot.lane.b32.xlu0 %v1930, 32
      %v1997 = vpop.permute.xlu0 %1996
      %1998 = vrot.lane.b32.xlu0 %v1931, 32
      %v1999 = vpop.permute.xlu0 %1998
      %2000 = vrot.lane.b32.xlu0 %v1932, 32
      %v2001 = vpop.permute.xlu0 %2000
      %2002 = vrot.lane.b32.xlu0 %v1933, 32
      %v2003 = vpop.permute.xlu0 %2002
      %2004 = vrot.lane.b32.xlu0 %v1934, 32
      %v2005 = vpop.permute.xlu0 %2004
      %2006 = vrot.lane.b32.xlu0 %v1935, 32
      %v2007 = vpop.permute.xlu0 %2006
      %2008 = vrot.lane.b32.xlu0 %v1936, 32
      %v2009 = vpop.permute.xlu0 %2008
      %2010 = vrot.lane.b32.xlu0 %v1937, 32
      %v2011 = vpop.permute.xlu0 %2010
      %2012 = vrot.lane.b32.xlu0 %v1938, 32
      %v2013 = vpop.permute.xlu0 %2012
      %2014 = vrot.lane.b32.xlu0 %v1939, 32
      %v2015 = vpop.permute.xlu0 %2014
      %2016 = vrot.lane.b32.xlu0 %v1940, 32
      %v2017 = vpop.permute.xlu0 %2016
      %2018 = vrot.lane.b32.xlu0 %v1941, 32
      %v2019 = vpop.permute.xlu0 %2018
      %2020 = vrot.lane.b32.xlu0 %v1942, 32
      %v2021 = vpop.permute.xlu0 %2020
      %2022 = vrot.lane.b32.xlu0 %v1943, 32
      %v2023 = vpop.permute.xlu0 %2022
      %2024 = vrot.lane.b32.xlu0 %v1944, 32
      %v2025 = vpop.permute.xlu0 %2024
      %2026 = vrot.lane.b32.xlu0 %v1945, 32
      %v2027 = vpop.permute.xlu0 %2026
      %2028 = vrot.lane.b32.xlu0 %v1946, 32
      %v2029 = vpop.permute.xlu0 %2028
      %2030 = vrot.lane.b32.xlu0 %v1947, 32
      %v2031 = vpop.permute.xlu0 %2030
      %2032 = vrot.lane.b32.xlu0 %v1948, 32
      %v2033 = vpop.permute.xlu0 %2032
      %2034 = vrot.lane.b32.xlu0 %v1949, 32
      %v2035 = vpop.permute.xlu0 %2034
      %2036 = vrot.lane.b32.xlu0 %v1950, 32
      %v2037 = vpop.permute.xlu0 %2036
      %2038 = vrot.lane.b32.xlu0 %v1951, 32
      %v2039 = vpop.permute.xlu0 %2038
      %2040 = vrot.lane.b32.xlu0 %v1952, 32
      %v2041 = vpop.permute.xlu0 %2040
      %2042 = vrot.lane.b32.xlu0 %v1953, 32
      %v2043 = vpop.permute.xlu0 %2042
      %2044 = vrot.lane.b32.xlu0 %v1954, 32
      %v2045 = vpop.permute.xlu0 %2044
      %2046 = vrot.lane.b32.xlu0 %v1955, 32
      %v2047 = vpop.permute.xlu0 %2046
      %2048 = vrot.lane.b32.xlu0 %v1956, 32
      %v2049 = vpop.permute.xlu0 %2048
      %2050 = vrot.lane.b32.xlu0 %v1957, 32
      %v2051 = vpop.permute.xlu0 %2050
      %2052 = vrot.lane.b32.xlu0 %v1958, 32
      %v2053 = vpop.permute.xlu0 %2052
      %2054 = vrot.lane.b32.xlu0 %v1959, 32
      %v2055 = vpop.permute.xlu0 %2054
      %2088 = vst.msk [vmem:[#allocation3 + $0x8] sm:$0xff] %vm1445, %v1993
      %2089 = vst.msk [vmem:[#allocation3 + $0x20] sm:$0xff] %vm1445, %v1995
      %2090 = vst.msk [vmem:[#allocation3 + $0x38] sm:$0xff] %vm1445, %v1997
      %2091 = vst.msk [vmem:[#allocation3 + $0x50] sm:$0xff] %vm1445, %v1999
      %2092 = vst.msk [vmem:[#allocation3 + $0x68] sm:$0xff] %vm1445, %v2001
      %2093 = vst.msk [vmem:[#allocation3 + $0x80] sm:$0xff] %vm1445, %v2003
      %2094 = vst.msk [vmem:[#allocation3 + $0x98] sm:$0xff] %vm1445, %v2005
      %2095 = vst.msk [vmem:[#allocation3 + $0xb0] sm:$0xff] %vm1445, %v2007
      %2096 = vst.msk [vmem:[#allocation3 + $0xc8] sm:$0xff] %vm1445, %v2009
      %2097 = vst.msk [vmem:[#allocation3 + $0xe0] sm:$0xff] %vm1445, %v2011
      %2098 = vst.msk [vmem:[#allocation3 + $0xf8] sm:$0xff] %vm1445, %v2013
      %2099 = vst.msk [vmem:[#allocation3 + $0x110] sm:$0xff] %vm1445, %v2015
      %2100 = vst.msk [vmem:[#allocation3 + $0x128] sm:$0xff] %vm1445, %v2017
      %2101 = vst.msk [vmem:[#allocation3 + $0x140] sm:$0xff] %vm1445, %v2019
      %2102 = vst.msk [vmem:[#allocation3 + $0x158] sm:$0xff] %vm1445, %v2021
      %2103 = vst.msk [vmem:[#allocation3 + $0x170] sm:$0xff] %vm1445, %v2023
      %2104 = vst.msk [vmem:[#allocation3 + $0x188] sm:$0xff] %vm1445, %v2025
      %2105 = vst.msk [vmem:[#allocation3 + $0x1a0] sm:$0xff] %vm1445, %v2027
      %2106 = vst.msk [vmem:[#allocation3 + $0x1b8] sm:$0xff] %vm1445, %v2029
      %2107 = vst.msk [vmem:[#allocation3 + $0x1d0] sm:$0xff] %vm1445, %v2031
      %2108 = vst.msk [vmem:[#allocation3 + $0x1e8] sm:$0xff] %vm1445, %v2033
      %2109 = vst.msk [vmem:[#allocation3 + $0x200] sm:$0xff] %vm1445, %v2035
      %2110 = vst.msk [vmem:[#allocation3 + $0x218] sm:$0xff] %vm1445, %v2037
      %2111 = vst.msk [vmem:[#allocation3 + $0x230] sm:$0xff] %vm1445, %v2039
      %2112 = vst.msk [vmem:[#allocation3 + $0x248] sm:$0xff] %vm1445, %v2041
      %2113 = vst.msk [vmem:[#allocation3 + $0x260] sm:$0xff] %vm1445, %v2043
      %2114 = vst.msk [vmem:[#allocation3 + $0x278] sm:$0xff] %vm1445, %v2045
      %2115 = vst.msk [vmem:[#allocation3 + $0x290] sm:$0xff] %vm1445, %v2047
      %2116 = vst.msk [vmem:[#allocation3 + $0x2a8] sm:$0xff] %vm1445, %v2049
      %2117 = vst.msk [vmem:[#allocation3 + $0x2c0] sm:$0xff] %vm1445, %v2051
      %2118 = vst.msk [vmem:[#allocation3 + $0x2d8] sm:$0xff] %vm1445, %v2053
      %2119 = vst.msk [vmem:[#allocation3 + $0x2f0] sm:$0xff] %vm1445, %v2055
      %s2120 = scalar_lea.vmem [#allocation2], 48
      %v2121 = vld [vmem:[%s2120] sm:$0xff]
      %v2122 = vld [vmem:[%s2120 + $0x8] sm:$0xff]
      %v2123 = vld [vmem:[%s2120 + $0x18] sm:$0xff]
      %v2124 = vld [vmem:[%s2120 + $0x20] sm:$0xff]
      %v2125 = vld [vmem:[%s2120 + $0x30] sm:$0xff]
      %v2126 = vld [vmem:[%s2120 + $0x38] sm:$0xff]
      %v2127 = vld [vmem:[%s2120 + $0x48] sm:$0xff]
      %v2128 = vld [vmem:[%s2120 + $0x50] sm:$0xff]
      %v2129 = vld [vmem:[%s2120 + $0x60] sm:$0xff]
      %v2130 = vld [vmem:[%s2120 + $0x68] sm:$0xff]
      %v2131 = vld [vmem:[%s2120 + $0x78] sm:$0xff]
      %v2132 = vld [vmem:[%s2120 + $0x80] sm:$0xff]
      %v2133 = vld [vmem:[%s2120 + $0x90] sm:$0xff]
      %v2134 = vld [vmem:[%s2120 + $0x98] sm:$0xff]
      %v2135 = vld [vmem:[%s2120 + $0xa8] sm:$0xff]
      %v2136 = vld [vmem:[%s2120 + $0xb0] sm:$0xff]
      %v2137 = vld [vmem:[%s2120 + $0xc0] sm:$0xff]
      %v2138 = vld [vmem:[%s2120 + $0xc8] sm:$0xff]
      %v2139 = vld [vmem:[%s2120 + $0xd8] sm:$0xff]
      %v2140 = vld [vmem:[%s2120 + $0xe0] sm:$0xff]
      %v2141 = vld [vmem:[%s2120 + $0xf0] sm:$0xff]
      %v2142 = vld [vmem:[%s2120 + $0xf8] sm:$0xff]
      %v2143 = vld [vmem:[%s2120 + $0x108] sm:$0xff]
      %v2144 = vld [vmem:[%s2120 + $0x110] sm:$0xff]
      %v2145 = vld [vmem:[%s2120 + $0x120] sm:$0xff]
      %v2146 = vld [vmem:[%s2120 + $0x128] sm:$0xff]
      %v2147 = vld [vmem:[%s2120 + $0x138] sm:$0xff]
      %v2148 = vld [vmem:[%s2120 + $0x140] sm:$0xff]
      %v2149 = vld [vmem:[%s2120 + $0x150] sm:$0xff]
      %v2150 = vld [vmem:[%s2120 + $0x158] sm:$0xff]
      %v2151 = vld [vmem:[%s2120 + $0x168] sm:$0xff]
      %v2152 = vld [vmem:[%s2120 + $0x170] sm:$0xff]
      %2185 = vrot.lane.b32.xlu0 %v2121, 64
      %v2186 = vpop.permute.xlu0 %2185
      %2187 = vrot.lane.b32.xlu0 %v2122, 64
      %v2188 = vpop.permute.xlu0 %2187
      %2189 = vrot.lane.b32.xlu0 %v2123, 64
      %v2190 = vpop.permute.xlu0 %2189
      %2191 = vrot.lane.b32.xlu0 %v2124, 64
      %v2192 = vpop.permute.xlu0 %2191
      %2193 = vrot.lane.b32.xlu0 %v2125, 64
      %v2194 = vpop.permute.xlu0 %2193
      %2195 = vrot.lane.b32.xlu0 %v2126, 64
      %v2196 = vpop.permute.xlu0 %2195
      %2197 = vrot.lane.b32.xlu0 %v2127, 64
      %v2198 = vpop.permute.xlu0 %2197
      %2199 = vrot.lane.b32.xlu0 %v2128, 64
      %v2200 = vpop.permute.xlu0 %2199
      %2201 = vrot.lane.b32.xlu0 %v2129, 64
      %v2202 = vpop.permute.xlu0 %2201
      %2203 = vrot.lane.b32.xlu0 %v2130, 64
      %v2204 = vpop.permute.xlu0 %2203
      %2205 = vrot.lane.b32.xlu0 %v2131, 64
      %v2206 = vpop.permute.xlu0 %2205
      %2207 = vrot.lane.b32.xlu0 %v2132, 64
      %v2208 = vpop.permute.xlu0 %2207
      %2209 = vrot.lane.b32.xlu0 %v2133, 64
      %v2210 = vpop.permute.xlu0 %2209
      %2211 = vrot.lane.b32.xlu0 %v2134, 64
      %v2212 = vpop.permute.xlu0 %2211
      %2213 = vrot.lane.b32.xlu0 %v2135, 64
      %v2214 = vpop.permute.xlu0 %2213
      %2215 = vrot.lane.b32.xlu0 %v2136, 64
      %v2216 = vpop.permute.xlu0 %2215
      %2217 = vrot.lane.b32.xlu0 %v2137, 64
      %v2218 = vpop.permute.xlu0 %2217
      %2219 = vrot.lane.b32.xlu0 %v2138, 64
      %v2220 = vpop.permute.xlu0 %2219
      %2221 = vrot.lane.b32.xlu0 %v2139, 64
      %v2222 = vpop.permute.xlu0 %2221
      %2223 = vrot.lane.b32.xlu0 %v2140, 64
      %v2224 = vpop.permute.xlu0 %2223
      %2225 = vrot.lane.b32.xlu0 %v2141, 64
      %v2226 = vpop.permute.xlu0 %2225
      %2227 = vrot.lane.b32.xlu0 %v2142, 64
      %v2228 = vpop.permute.xlu0 %2227
      %2229 = vrot.lane.b32.xlu0 %v2143, 64
      %v2230 = vpop.permute.xlu0 %2229
      %2231 = vrot.lane.b32.xlu0 %v2144, 64
      %v2232 = vpop.permute.xlu0 %2231
      %2233 = vrot.lane.b32.xlu0 %v2145, 64
      %v2234 = vpop.permute.xlu0 %2233
      %2235 = vrot.lane.b32.xlu0 %v2146, 64
      %v2236 = vpop.permute.xlu0 %2235
      %2237 = vrot.lane.b32.xlu0 %v2147, 64
      %v2238 = vpop.permute.xlu0 %2237
      %2239 = vrot.lane.b32.xlu0 %v2148, 64
      %v2240 = vpop.permute.xlu0 %2239
      %2241 = vrot.lane.b32.xlu0 %v2149, 64
      %v2242 = vpop.permute.xlu0 %2241
      %2243 = vrot.lane.b32.xlu0 %v2150, 64
      %v2244 = vpop.permute.xlu0 %2243
      %2245 = vrot.lane.b32.xlu0 %v2151, 64
      %v2246 = vpop.permute.xlu0 %2245
      %2247 = vrot.lane.b32.xlu0 %v2152, 64
      %v2248 = vpop.permute.xlu0 %2247
      %2281 = vst.msk [vmem:[#allocation3 + $0x8] sm:$0xff] %vm1638, %v2186
      %2282 = vst.msk [vmem:[#allocation3 + $0x20] sm:$0xff] %vm1638, %v2188
      %2283 = vst.msk [vmem:[#allocation3 + $0x38] sm:$0xff] %vm1638, %v2190
      %2284 = vst.msk [vmem:[#allocation3 + $0x50] sm:$0xff] %vm1638, %v2192
      %2285 = vst.msk [vmem:[#allocation3 + $0x68] sm:$0xff] %vm1638, %v2194
      %2286 = vst.msk [vmem:[#allocation3 + $0x80] sm:$0xff] %vm1638, %v2196
      %2287 = vst.msk [vmem:[#allocation3 + $0x98] sm:$0xff] %vm1638, %v2198
      %2288 = vst.msk [vmem:[#allocation3 + $0xb0] sm:$0xff] %vm1638, %v2200
      %2289 = vst.msk [vmem:[#allocation3 + $0xc8] sm:$0xff] %vm1638, %v2202
      %2290 = vst.msk [vmem:[#allocation3 + $0xe0] sm:$0xff] %vm1638, %v2204
      %2291 = vst.msk [vmem:[#allocation3 + $0xf8] sm:$0xff] %vm1638, %v2206
      %2292 = vst.msk [vmem:[#allocation3 + $0x110] sm:$0xff] %vm1638, %v2208
      %2293 = vst.msk [vmem:[#allocation3 + $0x128] sm:$0xff] %vm1638, %v2210
      %2294 = vst.msk [vmem:[#allocation3 + $0x140] sm:$0xff] %vm1638, %v2212
      %2295 = vst.msk [vmem:[#allocation3 + $0x158] sm:$0xff] %vm1638, %v2214
      %2296 = vst.msk [vmem:[#allocation3 + $0x170] sm:$0xff] %vm1638, %v2216
      %2297 = vst.msk [vmem:[#allocation3 + $0x188] sm:$0xff] %vm1638, %v2218
      %2298 = vst.msk [vmem:[#allocation3 + $0x1a0] sm:$0xff] %vm1638, %v2220
      %2299 = vst.msk [vmem:[#allocation3 + $0x1b8] sm:$0xff] %vm1638, %v2222
      %2300 = vst.msk [vmem:[#allocation3 + $0x1d0] sm:$0xff] %vm1638, %v2224
      %2301 = vst.msk [vmem:[#allocation3 + $0x1e8] sm:$0xff] %vm1638, %v2226
      %2302 = vst.msk [vmem:[#allocation3 + $0x200] sm:$0xff] %vm1638, %v2228
      %2303 = vst.msk [vmem:[#allocation3 + $0x218] sm:$0xff] %vm1638, %v2230
      %2304 = vst.msk [vmem:[#allocation3 + $0x230] sm:$0xff] %vm1638, %v2232
      %2305 = vst.msk [vmem:[#allocation3 + $0x248] sm:$0xff] %vm1638, %v2234
      %2306 = vst.msk [vmem:[#allocation3 + $0x260] sm:$0xff] %vm1638, %v2236
      %2307 = vst.msk [vmem:[#allocation3 + $0x278] sm:$0xff] %vm1638, %v2238
      %2308 = vst.msk [vmem:[#allocation3 + $0x290] sm:$0xff] %vm1638, %v2240
      %2309 = vst.msk [vmem:[#allocation3 + $0x2a8] sm:$0xff] %vm1638, %v2242
      %2310 = vst.msk [vmem:[#allocation3 + $0x2c0] sm:$0xff] %vm1638, %v2244
      %2311 = vst.msk [vmem:[#allocation3 + $0x2d8] sm:$0xff] %vm1638, %v2246
      %2312 = vst.msk [vmem:[#allocation3 + $0x2f0] sm:$0xff] %vm1638, %v2248
      %v2313 = vld [vmem:[%s2120 + $0x1] sm:$0xff]
      %v2314 = vld [vmem:[%s2120 + $0x9] sm:$0xff]
      %v2315 = vld [vmem:[%s2120 + $0x19] sm:$0xff]
      %v2316 = vld [vmem:[%s2120 + $0x21] sm:$0xff]
      %v2317 = vld [vmem:[%s2120 + $0x31] sm:$0xff]
      %v2318 = vld [vmem:[%s2120 + $0x39] sm:$0xff]
      %v2319 = vld [vmem:[%s2120 + $0x49] sm:$0xff]
      %v2320 = vld [vmem:[%s2120 + $0x51] sm:$0xff]
      %v2321 = vld [vmem:[%s2120 + $0x61] sm:$0xff]
      %v2322 = vld [vmem:[%s2120 + $0x69] sm:$0xff]
      %v2323 = vld [vmem:[%s2120 + $0x79] sm:$0xff]
      %v2324 = vld [vmem:[%s2120 + $0x81] sm:$0xff]
      %v2325 = vld [vmem:[%s2120 + $0x91] sm:$0xff]
      %v2326 = vld [vmem:[%s2120 + $0x99] sm:$0xff]
      %v2327 = vld [vmem:[%s2120 + $0xa9] sm:$0xff]
      %v2328 = vld [vmem:[%s2120 + $0xb1] sm:$0xff]
      %v2329 = vld [vmem:[%s2120 + $0xc1] sm:$0xff]
      %v2330 = vld [vmem:[%s2120 + $0xc9] sm:$0xff]
      %v2331 = vld [vmem:[%s2120 + $0xd9] sm:$0xff]
      %v2332 = vld [vmem:[%s2120 + $0xe1] sm:$0xff]
      %v2333 = vld [vmem:[%s2120 + $0xf1] sm:$0xff]
      %v2334 = vld [vmem:[%s2120 + $0xf9] sm:$0xff]
      %v2335 = vld [vmem:[%s2120 + $0x109] sm:$0xff]
      %v2336 = vld [vmem:[%s2120 + $0x111] sm:$0xff]
      %v2337 = vld [vmem:[%s2120 + $0x121] sm:$0xff]
      %v2338 = vld [vmem:[%s2120 + $0x129] sm:$0xff]
      %v2339 = vld [vmem:[%s2120 + $0x139] sm:$0xff]
      %v2340 = vld [vmem:[%s2120 + $0x141] sm:$0xff]
      %v2341 = vld [vmem:[%s2120 + $0x151] sm:$0xff]
      %v2342 = vld [vmem:[%s2120 + $0x159] sm:$0xff]
      %v2343 = vld [vmem:[%s2120 + $0x169] sm:$0xff]
      %v2344 = vld [vmem:[%s2120 + $0x171] sm:$0xff]
      %2377 = vrot.lane.b32.xlu0 %v2313, 96
      %v2378 = vpop.permute.xlu0 %2377
      %2379 = vrot.lane.b32.xlu0 %v2314, 96
      %v2380 = vpop.permute.xlu0 %2379
      %2381 = vrot.lane.b32.xlu0 %v2315, 96
      %v2382 = vpop.permute.xlu0 %2381
      %2383 = vrot.lane.b32.xlu0 %v2316, 96
      %v2384 = vpop.permute.xlu0 %2383
      %2385 = vrot.lane.b32.xlu0 %v2317, 96
      %v2386 = vpop.permute.xlu0 %2385
      %2387 = vrot.lane.b32.xlu0 %v2318, 96
      %v2388 = vpop.permute.xlu0 %2387
      %2389 = vrot.lane.b32.xlu0 %v2319, 96
      %v2390 = vpop.permute.xlu0 %2389
      %2391 = vrot.lane.b32.xlu0 %v2320, 96
      %v2392 = vpop.permute.xlu0 %2391
      %2393 = vrot.lane.b32.xlu0 %v2321, 96
      %v2394 = vpop.permute.xlu0 %2393
      %2395 = vrot.lane.b32.xlu0 %v2322, 96
      %v2396 = vpop.permute.xlu0 %2395
      %2397 = vrot.lane.b32.xlu0 %v2323, 96
      %v2398 = vpop.permute.xlu0 %2397
      %2399 = vrot.lane.b32.xlu0 %v2324, 96
      %v2400 = vpop.permute.xlu0 %2399
      %2401 = vrot.lane.b32.xlu0 %v2325, 96
      %v2402 = vpop.permute.xlu0 %2401
      %2403 = vrot.lane.b32.xlu0 %v2326, 96
      %v2404 = vpop.permute.xlu0 %2403
      %2405 = vrot.lane.b32.xlu0 %v2327, 96
      %v2406 = vpop.permute.xlu0 %2405
      %2407 = vrot.lane.b32.xlu0 %v2328, 96
      %v2408 = vpop.permute.xlu0 %2407
      %2409 = vrot.lane.b32.xlu0 %v2329, 96
      %v2410 = vpop.permute.xlu0 %2409
      %2411 = vrot.lane.b32.xlu0 %v2330, 96
      %v2412 = vpop.permute.xlu0 %2411
      %2413 = vrot.lane.b32.xlu0 %v2331, 96
      %v2414 = vpop.permute.xlu0 %2413
      %2415 = vrot.lane.b32.xlu0 %v2332, 96
      %v2416 = vpop.permute.xlu0 %2415
      %2417 = vrot.lane.b32.xlu0 %v2333, 96
      %v2418 = vpop.permute.xlu0 %2417
      %2419 = vrot.lane.b32.xlu0 %v2334, 96
      %v2420 = vpop.permute.xlu0 %2419
      %2421 = vrot.lane.b32.xlu0 %v2335, 96
      %v2422 = vpop.permute.xlu0 %2421
      %2423 = vrot.lane.b32.xlu0 %v2336, 96
      %v2424 = vpop.permute.xlu0 %2423
      %2425 = vrot.lane.b32.xlu0 %v2337, 96
      %v2426 = vpop.permute.xlu0 %2425
      %2427 = vrot.lane.b32.xlu0 %v2338, 96
      %v2428 = vpop.permute.xlu0 %2427
      %2429 = vrot.lane.b32.xlu0 %v2339, 96
      %v2430 = vpop.permute.xlu0 %2429
      %2431 = vrot.lane.b32.xlu0 %v2340, 96
      %v2432 = vpop.permute.xlu0 %2431
      %2433 = vrot.lane.b32.xlu0 %v2341, 96
      %v2434 = vpop.permute.xlu0 %2433
      %2435 = vrot.lane.b32.xlu0 %v2342, 96
      %v2436 = vpop.permute.xlu0 %2435
      %2437 = vrot.lane.b32.xlu0 %v2343, 96
      %v2438 = vpop.permute.xlu0 %2437
      %2439 = vrot.lane.b32.xlu0 %v2344, 96
      %v2440 = vpop.permute.xlu0 %2439
      %2473 = vst.msk [vmem:[#allocation3 + $0x8] sm:$0xff] %vm1831, %v2378
      %2474 = vst.msk [vmem:[#allocation3 + $0x20] sm:$0xff] %vm1831, %v2380
      %2475 = vst.msk [vmem:[#allocation3 + $0x38] sm:$0xff] %vm1831, %v2382
      %2476 = vst.msk [vmem:[#allocation3 + $0x50] sm:$0xff] %vm1831, %v2384
      %2477 = vst.msk [vmem:[#allocation3 + $0x68] sm:$0xff] %vm1831, %v2386
      %2478 = vst.msk [vmem:[#allocation3 + $0x80] sm:$0xff] %vm1831, %v2388
      %2479 = vst.msk [vmem:[#allocation3 + $0x98] sm:$0xff] %vm1831, %v2390
      %2480 = vst.msk [vmem:[#allocation3 + $0xb0] sm:$0xff] %vm1831, %v2392
      %2481 = vst.msk [vmem:[#allocation3 + $0xc8] sm:$0xff] %vm1831, %v2394
      %2482 = vst.msk [vmem:[#allocation3 + $0xe0] sm:$0xff] %vm1831, %v2396
      %2483 = vst.msk [vmem:[#allocation3 + $0xf8] sm:$0xff] %vm1831, %v2398
      %2484 = vst.msk [vmem:[#allocation3 + $0x110] sm:$0xff] %vm1831, %v2400
      %2485 = vst.msk [vmem:[#allocation3 + $0x128] sm:$0xff] %vm1831, %v2402
      %2486 = vst.msk [vmem:[#allocation3 + $0x140] sm:$0xff] %vm1831, %v2404
      %2487 = vst.msk [vmem:[#allocation3 + $0x158] sm:$0xff] %vm1831, %v2406
      %2488 = vst.msk [vmem:[#allocation3 + $0x170] sm:$0xff] %vm1831, %v2408
      %2489 = vst.msk [vmem:[#allocation3 + $0x188] sm:$0xff] %vm1831, %v2410
      %2490 = vst.msk [vmem:[#allocation3 + $0x1a0] sm:$0xff] %vm1831, %v2412
      %2491 = vst.msk [vmem:[#allocation3 + $0x1b8] sm:$0xff] %vm1831, %v2414
      %2492 = vst.msk [vmem:[#allocation3 + $0x1d0] sm:$0xff] %vm1831, %v2416
      %2493 = vst.msk [vmem:[#allocation3 + $0x1e8] sm:$0xff] %vm1831, %v2418
      %2494 = vst.msk [vmem:[#allocation3 + $0x200] sm:$0xff] %vm1831, %v2420
      %2495 = vst.msk [vmem:[#allocation3 + $0x218] sm:$0xff] %vm1831, %v2422
      %2496 = vst.msk [vmem:[#allocation3 + $0x230] sm:$0xff] %vm1831, %v2424
      %2497 = vst.msk [vmem:[#allocation3 + $0x248] sm:$0xff] %vm1831, %v2426
      %2498 = vst.msk [vmem:[#allocation3 + $0x260] sm:$0xff] %vm1831, %v2428
      %2499 = vst.msk [vmem:[#allocation3 + $0x278] sm:$0xff] %vm1831, %v2430
      %2500 = vst.msk [vmem:[#allocation3 + $0x290] sm:$0xff] %vm1831, %v2432
      %2501 = vst.msk [vmem:[#allocation3 + $0x2a8] sm:$0xff] %vm1831, %v2434
      %2502 = vst.msk [vmem:[#allocation3 + $0x2c0] sm:$0xff] %vm1831, %v2436
      %2503 = vst.msk [vmem:[#allocation3 + $0x2d8] sm:$0xff] %vm1831, %v2438
      %2504 = vst.msk [vmem:[#allocation3 + $0x2f0] sm:$0xff] %vm1831, %v2440
      %v2505 = vld [vmem:[%s2120 + $0x2] sm:$0xff]
      %v2506 = vld [vmem:[%s2120 + $0xa] sm:$0xff]
      %v2507 = vld [vmem:[%s2120 + $0x1a] sm:$0xff]
      %v2508 = vld [vmem:[%s2120 + $0x22] sm:$0xff]
      %v2509 = vld [vmem:[%s2120 + $0x32] sm:$0xff]
      %v2510 = vld [vmem:[%s2120 + $0x3a] sm:$0xff]
      %v2511 = vld [vmem:[%s2120 + $0x4a] sm:$0xff]
      %v2512 = vld [vmem:[%s2120 + $0x52] sm:$0xff]
      %v2513 = vld [vmem:[%s2120 + $0x62] sm:$0xff]
      %v2514 = vld [vmem:[%s2120 + $0x6a] sm:$0xff]
      %v2515 = vld [vmem:[%s2120 + $0x7a] sm:$0xff]
      %v2516 = vld [vmem:[%s2120 + $0x82] sm:$0xff]
      %v2517 = vld [vmem:[%s2120 + $0x92] sm:$0xff]
      %v2518 = vld [vmem:[%s2120 + $0x9a] sm:$0xff]
      %v2519 = vld [vmem:[%s2120 + $0xaa] sm:$0xff]
      %v2520 = vld [vmem:[%s2120 + $0xb2] sm:$0xff]
      %v2521 = vld [vmem:[%s2120 + $0xc2] sm:$0xff]
      %v2522 = vld [vmem:[%s2120 + $0xca] sm:$0xff]
      %v2523 = vld [vmem:[%s2120 + $0xda] sm:$0xff]
      %v2524 = vld [vmem:[%s2120 + $0xe2] sm:$0xff]
      %v2525 = vld [vmem:[%s2120 + $0xf2] sm:$0xff]
      %v2526 = vld [vmem:[%s2120 + $0xfa] sm:$0xff]
      %v2527 = vld [vmem:[%s2120 + $0x10a] sm:$0xff]
      %v2528 = vld [vmem:[%s2120 + $0x112] sm:$0xff]
      %v2529 = vld [vmem:[%s2120 + $0x122] sm:$0xff]
      %v2530 = vld [vmem:[%s2120 + $0x12a] sm:$0xff]
      %v2531 = vld [vmem:[%s2120 + $0x13a] sm:$0xff]
      %v2532 = vld [vmem:[%s2120 + $0x142] sm:$0xff]
      %v2533 = vld [vmem:[%s2120 + $0x152] sm:$0xff]
      %v2534 = vld [vmem:[%s2120 + $0x15a] sm:$0xff]
      %v2535 = vld [vmem:[%s2120 + $0x16a] sm:$0xff]
      %v2536 = vld [vmem:[%s2120 + $0x172] sm:$0xff]
      %2537 = vst.msk [vmem:[#allocation3 + $0x10] sm:$0xff] %vm696, %v2505
      %2538 = vst.msk [vmem:[#allocation3 + $0x28] sm:$0xff] %vm696, %v2506
      %2539 = vst.msk [vmem:[#allocation3 + $0x40] sm:$0xff] %vm696, %v2507
      %2540 = vst.msk [vmem:[#allocation3 + $0x58] sm:$0xff] %vm696, %v2508
      %2541 = vst.msk [vmem:[#allocation3 + $0x70] sm:$0xff] %vm696, %v2509
      %2542 = vst.msk [vmem:[#allocation3 + $0x88] sm:$0xff] %vm696, %v2510
      %2543 = vst.msk [vmem:[#allocation3 + $0xa0] sm:$0xff] %vm696, %v2511
      %2544 = vst.msk [vmem:[#allocation3 + $0xb8] sm:$0xff] %vm696, %v2512
      %2545 = vst.msk [vmem:[#allocation3 + $0xd0] sm:$0xff] %vm696, %v2513
      %2546 = vst.msk [vmem:[#allocation3 + $0xe8] sm:$0xff] %vm696, %v2514
      %2547 = vst.msk [vmem:[#allocation3 + $0x100] sm:$0xff] %vm696, %v2515
      %2548 = vst.msk [vmem:[#allocation3 + $0x118] sm:$0xff] %vm696, %v2516
      %2549 = vst.msk [vmem:[#allocation3 + $0x130] sm:$0xff] %vm696, %v2517
      %2550 = vst.msk [vmem:[#allocation3 + $0x148] sm:$0xff] %vm696, %v2518
      %2551 = vst.msk [vmem:[#allocation3 + $0x160] sm:$0xff] %vm696, %v2519
      %2552 = vst.msk [vmem:[#allocation3 + $0x178] sm:$0xff] %vm696, %v2520
      %2553 = vst.msk [vmem:[#allocation3 + $0x190] sm:$0xff] %vm696, %v2521
      %2554 = vst.msk [vmem:[#allocation3 + $0x1a8] sm:$0xff] %vm696, %v2522
      %2555 = vst.msk [vmem:[#allocation3 + $0x1c0] sm:$0xff] %vm696, %v2523
      %2556 = vst.msk [vmem:[#allocation3 + $0x1d8] sm:$0xff] %vm696, %v2524
      %2557 = vst.msk [vmem:[#allocation3 + $0x1f0] sm:$0xff] %vm696, %v2525
      %2558 = vst.msk [vmem:[#allocation3 + $0x208] sm:$0xff] %vm696, %v2526
      %2559 = vst.msk [vmem:[#allocation3 + $0x220] sm:$0xff] %vm696, %v2527
      %2560 = vst.msk [vmem:[#allocation3 + $0x238] sm:$0xff] %vm696, %v2528
      %2561 = vst.msk [vmem:[#allocation3 + $0x250] sm:$0xff] %vm696, %v2529
      %2562 = vst.msk [vmem:[#allocation3 + $0x268] sm:$0xff] %vm696, %v2530
      %2563 = vst.msk [vmem:[#allocation3 + $0x280] sm:$0xff] %vm696, %v2531
      %2564 = vst.msk [vmem:[#allocation3 + $0x298] sm:$0xff] %vm696, %v2532
      %2565 = vst.msk [vmem:[#allocation3 + $0x2b0] sm:$0xff] %vm696, %v2533
      %2566 = vst.msk [vmem:[#allocation3 + $0x2c8] sm:$0xff] %vm696, %v2534
      %2567 = vst.msk [vmem:[#allocation3 + $0x2e0] sm:$0xff] %vm696, %v2535
      %2568 = vst.msk [vmem:[#allocation3 + $0x2f8] sm:$0xff] %vm696, %v2536
      %v2569 = vld [vmem:[%s5] sm:$0xff]
      %v2570 = vld [vmem:[%s5 + $0x8] sm:$0xff]
      %v2571 = vld [vmem:[%s5 + $0x10] sm:$0xff]
      %v2572 = vld [vmem:[%s5 + $0x18] sm:$0xff]
      %v2573 = vld [vmem:[%s5 + $0x20] sm:$0xff]
      %v2574 = vld [vmem:[%s5 + $0x28] sm:$0xff]
      %v2575 = vld [vmem:[%s5 + $0x30] sm:$0xff]
      %v2576 = vld [vmem:[%s5 + $0x38] sm:$0xff]
      %v2577 = vld [vmem:[%s5 + $0x40] sm:$0xff]
      %v2578 = vld [vmem:[%s5 + $0x48] sm:$0xff]
      %v2579 = vld [vmem:[%s5 + $0x50] sm:$0xff]
      %v2580 = vld [vmem:[%s5 + $0x58] sm:$0xff]
      %v2581 = vld [vmem:[#allocation3] sm:$0xff]
      %v2582 = vld [vmem:[#allocation3 + $0x8] sm:$0xff]
      %v2583 = vld [vmem:[#allocation3 + $0x10] sm:$0xff]
      %v2584 = vld [vmem:[#allocation3 + $0x18] sm:$0xff]
      %v2585 = vld [vmem:[#allocation3 + $0x20] sm:$0xff]
      %v2586 = vld [vmem:[#allocation3 + $0x28] sm:$0xff]
      %v2587 = vld [vmem:[#allocation3 + $0x30] sm:$0xff]
      %v2588 = vld [vmem:[#allocation3 + $0x38] sm:$0xff]
      %v2589 = vld [vmem:[#allocation3 + $0x40] sm:$0xff]
      %v2590 = vld [vmem:[#allocation3 + $0x48] sm:$0xff]
      %v2591 = vld [vmem:[#allocation3 + $0x50] sm:$0xff]
      %v2592 = vld [vmem:[#allocation3 + $0x58] sm:$0xff]
      %v2593 = vld [vmem:[#allocation3 + $0x60] sm:$0xff]
      %v2594 = vld [vmem:[#allocation3 + $0x68] sm:$0xff]
      %v2595 = vld [vmem:[#allocation3 + $0x70] sm:$0xff]
      %v2596 = vld [vmem:[#allocation3 + $0x78] sm:$0xff]
      %v2597 = vld [vmem:[#allocation3 + $0x80] sm:$0xff]
      %v2598 = vld [vmem:[#allocation3 + $0x88] sm:$0xff]
      %v2599 = vld [vmem:[#allocation3 + $0x90] sm:$0xff]
      %v2600 = vld [vmem:[#allocation3 + $0x98] sm:$0xff]
      %v2601 = vld [vmem:[#allocation3 + $0xa0] sm:$0xff]
      %v2602 = vld [vmem:[#allocation3 + $0xa8] sm:$0xff]
      %v2603 = vld [vmem:[#allocation3 + $0xb0] sm:$0xff]
      %v2604 = vld [vmem:[#allocation3 + $0xb8] sm:$0xff]
      %v2605 = vld [vmem:[#allocation3 + $0xc0] sm:$0xff]
      %v2606 = vld [vmem:[#allocation3 + $0xc8] sm:$0xff]
      %v2607 = vld [vmem:[#allocation3 + $0xd0] sm:$0xff]
      %v2608 = vld [vmem:[#allocation3 + $0xd8] sm:$0xff]
      %v2609 = vld [vmem:[#allocation3 + $0xe0] sm:$0xff]
      %v2610 = vld [vmem:[#allocation3 + $0xe8] sm:$0xff]
      %v2611 = vld [vmem:[#allocation3 + $0xf0] sm:$0xff]
      %v2612 = vld [vmem:[#allocation3 + $0xf8] sm:$0xff]
      %v2613 = vld [vmem:[#allocation3 + $0x100] sm:$0xff]
      %v2614 = vld [vmem:[#allocation3 + $0x108] sm:$0xff]
      %v2615 = vld [vmem:[#allocation3 + $0x110] sm:$0xff]
      %v2616 = vld [vmem:[#allocation3 + $0x118] sm:$0xff]
      %v2617 = vld [vmem:[#allocation3 + $0x120] sm:$0xff]
      %v2618 = vld [vmem:[#allocation3 + $0x128] sm:$0xff]
      %v2619 = vld [vmem:[#allocation3 + $0x130] sm:$0xff]
      %v2620 = vld [vmem:[#allocation3 + $0x138] sm:$0xff]
      %v2621 = vld [vmem:[#allocation3 + $0x140] sm:$0xff]
      %v2622 = vld [vmem:[#allocation3 + $0x148] sm:$0xff]
      %v2623 = vld [vmem:[#allocation3 + $0x150] sm:$0xff]
      %v2624 = vld [vmem:[#allocation3 + $0x158] sm:$0xff]
      %v2625 = vld [vmem:[#allocation3 + $0x160] sm:$0xff]
      %v2626 = vld [vmem:[#allocation3 + $0x168] sm:$0xff]
      %v2627 = vld [vmem:[#allocation3 + $0x170] sm:$0xff]
      %v2628 = vld [vmem:[#allocation3 + $0x178] sm:$0xff]
      %v2629 = vld [vmem:[#allocation3 + $0x180] sm:$0xff]
      %v2630 = vld [vmem:[#allocation3 + $0x188] sm:$0xff]
      %v2631 = vld [vmem:[#allocation3 + $0x190] sm:$0xff]
      %v2632 = vld [vmem:[#allocation3 + $0x198] sm:$0xff]
      %v2633 = vld [vmem:[#allocation3 + $0x1a0] sm:$0xff]
      %v2634 = vld [vmem:[#allocation3 + $0x1a8] sm:$0xff]
      %v2635 = vld [vmem:[#allocation3 + $0x1b0] sm:$0xff]
      %v2636 = vld [vmem:[#allocation3 + $0x1b8] sm:$0xff]
      %v2637 = vld [vmem:[#allocation3 + $0x1c0] sm:$0xff]
      %v2638 = vld [vmem:[#allocation3 + $0x1c8] sm:$0xff]
      %v2639 = vld [vmem:[#allocation3 + $0x1d0] sm:$0xff]
      %v2640 = vld [vmem:[#allocation3 + $0x1d8] sm:$0xff]
      %v2641 = vld [vmem:[#allocation3 + $0x1e0] sm:$0xff]
      %v2642 = vld [vmem:[#allocation3 + $0x1e8] sm:$0xff]
      %v2643 = vld [vmem:[#allocation3 + $0x1f0] sm:$0xff]
      %v2644 = vld [vmem:[#allocation3 + $0x1f8] sm:$0xff]
      %v2645 = vld [vmem:[#allocation3 + $0x200] sm:$0xff]
      %v2646 = vld [vmem:[#allocation3 + $0x208] sm:$0xff]
      %v2647 = vld [vmem:[#allocation3 + $0x210] sm:$0xff]
      %v2648 = vld [vmem:[#allocation3 + $0x218] sm:$0xff]
      %v2649 = vld [vmem:[#allocation3 + $0x220] sm:$0xff]
      %v2650 = vld [vmem:[#allocation3 + $0x228] sm:$0xff]
      %v2651 = vld [vmem:[#allocation3 + $0x230] sm:$0xff]
      %v2652 = vld [vmem:[#allocation3 + $0x238] sm:$0xff]
      %v2653 = vld [vmem:[#allocation3 + $0x240] sm:$0xff]
      %v2654 = vld [vmem:[#allocation3 + $0x248] sm:$0xff]
      %v2655 = vld [vmem:[#allocation3 + $0x250] sm:$0xff]
      %v2656 = vld [vmem:[#allocation3 + $0x258] sm:$0xff]
      %v2657 = vld [vmem:[#allocation3 + $0x260] sm:$0xff]
      %v2658 = vld [vmem:[#allocation3 + $0x268] sm:$0xff]
      %v2659 = vld [vmem:[#allocation3 + $0x270] sm:$0xff]
      %v2660 = vld [vmem:[#allocation3 + $0x278] sm:$0xff]
      %v2661 = vld [vmem:[#allocation3 + $0x280] sm:$0xff]
      %v2662 = vld [vmem:[#allocation3 + $0x288] sm:$0xff]
      %v2663 = vld [vmem:[#allocation3 + $0x290] sm:$0xff]
      %v2664 = vld [vmem:[#allocation3 + $0x298] sm:$0xff]
      %v2665 = vld [vmem:[#allocation3 + $0x2a0] sm:$0xff]
      %v2666 = vld [vmem:[#allocation3 + $0x2a8] sm:$0xff]
      %v2667 = vld [vmem:[#allocation3 + $0x2b0] sm:$0xff]
      %v2668 = vld [vmem:[#allocation3 + $0x2b8] sm:$0xff]
      %v2669 = vld [vmem:[#allocation3 + $0x2c0] sm:$0xff]
      %v2670 = vld [vmem:[#allocation3 + $0x2c8] sm:$0xff]
      %v2671 = vld [vmem:[#allocation3 + $0x2d0] sm:$0xff]
      %v2672 = vld [vmem:[#allocation3 + $0x2d8] sm:$0xff]
      %v2673 = vld [vmem:[#allocation3 + $0x2e0] sm:$0xff]
      %v2674 = vld [vmem:[#allocation3 + $0x2e8] sm:$0xff]
      %v2675 = vld [vmem:[#allocation3 + $0x2f0] sm:$0xff]
      %v2676 = vld [vmem:[#allocation3 + $0x2f8] sm:$0xff]
      %v2678 = vsel %vm696, %v2571, 0
      %v2681 = vsel %vm696, %v2574, 0
      %v2684 = vsel %vm696, %v2577, 0
      %v2687 = vsel %vm696, %v2580, 0
      %v2690 = vsel %vm696, %v2583, 0
      %v2693 = vsel %vm696, %v2586, 0
      %v2696 = vsel %vm696, %v2589, 0
      %v2699 = vsel %vm696, %v2592, 0
      %v2702 = vsel %vm696, %v2595, 0
      %v2705 = vsel %vm696, %v2598, 0
      %v2708 = vsel %vm696, %v2601, 0
      %v2711 = vsel %vm696, %v2604, 0
      %v2714 = vsel %vm696, %v2607, 0
      %v2717 = vsel %vm696, %v2610, 0
      %v2720 = vsel %vm696, %v2613, 0
      %v2723 = vsel %vm696, %v2616, 0
      %v2726 = vsel %vm696, %v2619, 0
      %v2729 = vsel %vm696, %v2622, 0
      %v2732 = vsel %vm696, %v2625, 0
      %v2735 = vsel %vm696, %v2628, 0
      %v2738 = vsel %vm696, %v2631, 0
      %v2741 = vsel %vm696, %v2634, 0
      %v2744 = vsel %vm696, %v2637, 0
      %v2747 = vsel %vm696, %v2640, 0
      %v2750 = vsel %vm696, %v2643, 0
      %v2753 = vsel %vm696, %v2646, 0
      %v2756 = vsel %vm696, %v2649, 0
      %v2759 = vsel %vm696, %v2652, 0
      %v2762 = vsel %vm696, %v2655, 0
      %v2765 = vsel %vm696, %v2658, 0
      %v2768 = vsel %vm696, %v2661, 0
      %v2771 = vsel %vm696, %v2664, 0
      %v2774 = vsel %vm696, %v2667, 0
      %v2777 = vsel %vm696, %v2670, 0
      %v2780 = vsel %vm696, %v2673, 0
      %v2783 = vsel %vm696, %v2676, 0
      %2785 = vmatprep.subr.mxu0 %v2627
      %2786 = vmatpush1.xpose.msra.mxu0 %v2626
      %2787 = vmatprep.subr.mxu0 %v2624
      %2788 = vmatpush1.xpose.msra.mxu0 %v2623
      %2789 = vmatprep.subr.mxu0 %v2621
      %2790 = vmatpush1.xpose.msra.mxu0 %v2620
      %2791 = vmatprep.subr.mxu0 %v2618
      %2792 = vmatpush1.xpose.msra.mxu0 %v2617
      %2793 = vmatprep.subr.mxu0 %v2615
      %2794 = vmatpush1.xpose.msra.mxu0 %v2614
      %2795 = vmatprep.subr.mxu0 %v2612
      %2796 = vmatpush1.xpose.msra.mxu0 %v2611
      %2797 = vmatprep.subr.mxu0 %v2609
      %2798 = vmatpush1.xpose.msra.mxu0 %v2608
      %2799 = vmatprep.subr.mxu0 %v2606
      %2800 = vmatpush1.xpose.msra.mxu0 %v2605
      %2801 = vmatprep.subr.mxu0 %v2603
      %2802 = vmatpush1.xpose.msra.mxu0 %v2602
      %2803 = vmatprep.subr.mxu0 %v2600
      %2804 = vmatpush1.xpose.msra.mxu0 %v2599
      %2805 = vmatprep.subr.mxu0 %v2597
      %2806 = vmatpush1.xpose.msra.mxu0 %v2596
      %2807 = vmatprep.subr.mxu0 %v2594
      %2808 = vmatpush1.xpose.msra.mxu0 %v2593
      %2809 = vmatprep.subr.mxu0 %v2591
      %2810 = vmatpush1.xpose.msra.mxu0 %v2590
      %2811 = vmatprep.subr.mxu0 %v2588
      %2812 = vmatpush1.xpose.msra.mxu0 %v2587
      %2813 = vmatprep.subr.mxu0 %v2585
      %2814 = vmatpush1.xpose.msra.mxu0 %v2584
      %2815 = vmatprep.subr.mxu0 %v2582
      %2816 = vmatpush1.xpose.msra.mxu0 %v2581
      %2817 = vmatprep.subr.mxu0 %v2675
      %2818 = vmatpush2.xpose.msra.mxu0 %v2674
      %2819 = vmatprep.subr.mxu0 %v2672
      %2820 = vmatpush2.xpose.msra.mxu0 %v2671
      %2821 = vmatprep.subr.mxu0 %v2669
      %2822 = vmatpush2.xpose.msra.mxu0 %v2668
      %2823 = vmatprep.subr.mxu0 %v2666
      %2824 = vmatpush2.xpose.msra.mxu0 %v2665
      %2825 = vmatprep.subr.mxu0 %v2663
      %2826 = vmatpush2.xpose.msra.mxu0 %v2662
      %2827 = vmatprep.subr.mxu0 %v2660
      %2828 = vmatpush2.xpose.msra.mxu0 %v2659
      %2829 = vmatprep.subr.mxu0 %v2657
      %2830 = vmatpush2.xpose.msra.mxu0 %v2656
      %2831 = vmatprep.subr.mxu0 %v2654
      %2832 = vmatpush2.xpose.msra.mxu0 %v2653
      %2833 = vmatprep.subr.mxu0 %v2651
      %2834 = vmatpush2.xpose.msra.mxu0 %v2650
      %2835 = vmatprep.subr.mxu0 %v2648
      %2836 = vmatpush2.xpose.msra.mxu0 %v2647
      %2837 = vmatprep.subr.mxu0 %v2645
      %2838 = vmatpush2.xpose.msra.mxu0 %v2644
      %2839 = vmatprep.subr.mxu0 %v2642
      %2840 = vmatpush2.xpose.msra.mxu0 %v2641
      %2841 = vmatprep.subr.mxu0 %v2639
      %2842 = vmatpush2.xpose.msra.mxu0 %v2638
      %2843 = vmatprep.subr.mxu0 %v2636
      %2844 = vmatpush2.xpose.msra.mxu0 %v2635
      %2845 = vmatprep.subr.mxu0 %v2633
      %2846 = vmatpush2.xpose.msra.mxu0 %v2632
      %2847 = vmatprep.subr.mxu0 %v2630
      %2848 = vmatpush2.xpose.msra.mxu0 %v2629
      %2849 = vmatprep.mubr.f32.mxu0 %v2570
      %2850 = vmatmul.mubr.f32.gmra.mxu0 %v2569
      %v2851 = vpop.f32.mrf.mxu0
      %v2852 = vadd.f32 0.0, %v2851
      %v2853 = vpop.f32.mrf.mxu0
      %v2854 = vadd.f32 0.0, %v2853
      %2855 = vmatprep.mubr.f32.mxu0 %v2573
      %2856 = vmatmul.mubr.f32.gmra.mxu0 %v2572
      %v2857 = vpop.f32.mrf.mxu0
      %v2858 = vadd.f32 0.0, %v2857
      %v2859 = vpop.f32.mrf.mxu0
      %v2860 = vadd.f32 0.0, %v2859
      %2861 = vmatprep.mubr.f32.mxu0 %v2576
      %2862 = vmatmul.mubr.f32.gmra.mxu0 %v2575
      %v2863 = vpop.f32.mrf.mxu0
      %v2864 = vadd.f32 0.0, %v2863
      %v2865 = vpop.f32.mrf.mxu0
      %v2866 = vadd.f32 0.0, %v2865
      %2867 = vmatprep.mubr.f32.mxu0 %v2579
      %2868 = vmatmul.mubr.f32.gmra.mxu0 %v2578
      %v2869 = vpop.f32.mrf.mxu0
      %v2870 = vadd.f32 0.0, %v2869
      %v2871 = vpop.f32.mrf.mxu0
      %v2872 = vadd.f32 0.0, %v2871
      %2873 = vdwg.mxu0
      %2874 = vmatprep.subr.mxu0 0.0
      %2875 = vmatpush1.xpose.msra.mxu0 %v2735
      %2876 = vmatprep.subr.mxu0 0.0
      %2877 = vmatpush1.xpose.msra.mxu0 %v2732
      %2878 = vmatprep.subr.mxu0 0.0
      %2879 = vmatpush1.xpose.msra.mxu0 %v2729
      %2880 = vmatprep.subr.mxu0 0.0
      %2881 = vmatpush1.xpose.msra.mxu0 %v2726
      %2882 = vmatprep.subr.mxu0 0.0
      %2883 = vmatpush1.xpose.msra.mxu0 %v2723
      %2884 = vmatprep.subr.mxu0 0.0
      %2885 = vmatpush1.xpose.msra.mxu0 %v2720
      %2886 = vmatprep.subr.mxu0 0.0
      %2887 = vmatpush1.xpose.msra.mxu0 %v2717
      %2888 = vmatprep.subr.mxu0 0.0
      %2889 = vmatpush1.xpose.msra.mxu0 %v2714
      %2890 = vmatprep.subr.mxu0 0.0
      %2891 = vmatpush1.xpose.msra.mxu0 %v2711
      %2892 = vmatprep.subr.mxu0 0.0
      %2893 = vmatpush1.xpose.msra.mxu0 %v2708
      %2894 = vmatprep.subr.mxu0 0.0
      %2895 = vmatpush1.xpose.msra.mxu0 %v2705
      %2896 = vmatprep.subr.mxu0 0.0
      %2897 = vmatpush1.xpose.msra.mxu0 %v2702
      %2898 = vmatprep.subr.mxu0 0.0
      %2899 = vmatpush1.xpose.msra.mxu0 %v2699
      %2900 = vmatprep.subr.mxu0 0.0
      %2901 = vmatpush1.xpose.msra.mxu0 %v2696
      %2902 = vmatprep.subr.mxu0 0.0
      %2903 = vmatpush1.xpose.msra.mxu0 %v2693
      %2904 = vmatprep.subr.mxu0 0.0
      %2905 = vmatpush1.xpose.msra.mxu0 %v2690
      %2906 = vmatprep.subr.mxu0 0.0
      %2907 = vmatpush2.xpose.msra.mxu0 %v2783
      %2908 = vmatprep.subr.mxu0 0.0
      %2909 = vmatpush2.xpose.msra.mxu0 %v2780
      %2910 = vmatprep.subr.mxu0 0.0
      %2911 = vmatpush2.xpose.msra.mxu0 %v2777
      %2912 = vmatprep.subr.mxu0 0.0
      %2913 = vmatpush2.xpose.msra.mxu0 %v2774
      %2914 = vmatprep.subr.mxu0 0.0
      %2915 = vmatpush2.xpose.msra.mxu0 %v2771
      %2916 = vmatprep.subr.mxu0 0.0
      %2917 = vmatpush2.xpose.msra.mxu0 %v2768
      %2918 = vmatprep.subr.mxu0 0.0
      %2919 = vmatpush2.xpose.msra.mxu0 %v2765
      %2920 = vmatprep.subr.mxu0 0.0
      %2921 = vmatpush2.xpose.msra.mxu0 %v2762
      %2922 = vmatprep.subr.mxu0 0.0
      %2923 = vmatpush2.xpose.msra.mxu0 %v2759
      %2924 = vmatprep.subr.mxu0 0.0
      %2925 = vmatpush2.xpose.msra.mxu0 %v2756
      %2926 = vmatprep.subr.mxu0 0.0
      %2927 = vmatpush2.xpose.msra.mxu0 %v2753
      %2928 = vmatprep.subr.mxu0 0.0
      %2929 = vmatpush2.xpose.msra.mxu0 %v2750
      %2930 = vmatprep.subr.mxu0 0.0
      %2931 = vmatpush2.xpose.msra.mxu0 %v2747
      %2932 = vmatprep.subr.mxu0 0.0
      %2933 = vmatpush2.xpose.msra.mxu0 %v2744
      %2934 = vmatprep.subr.mxu0 0.0
      %2935 = vmatpush2.xpose.msra.mxu0 %v2741
      %2936 = vmatprep.subr.mxu0 0.0
      %2937 = vmatpush2.xpose.msra.mxu0 %v2738
      %2938 = vmatprep.mubr.f32.mxu0 0.0
      %2939 = vmatmul.mubr.f32.gmra.mxu0 %v2678
      %v2940 = vpop.f32.mrf.mxu0
      %v2941 = vadd.f32 %v2852, %v2940
      %v2942 = vpop.f32.mrf.mxu0
      %v2943 = vadd.f32 %v2854, %v2942
      %2944 = vmatprep.mubr.f32.mxu0 0.0
      %2945 = vmatmul.mubr.f32.gmra.mxu0 %v2681
      %v2946 = vpop.f32.mrf.mxu0
      %v2947 = vadd.f32 %v2858, %v2946
      %v2948 = vpop.f32.mrf.mxu0
      %v2949 = vadd.f32 %v2860, %v2948
      %2950 = vmatprep.mubr.f32.mxu0 0.0
      %2951 = vmatmul.mubr.f32.gmra.mxu0 %v2684
      %v2952 = vpop.f32.mrf.mxu0
      %v2953 = vadd.f32 %v2864, %v2952
      %v2954 = vpop.f32.mrf.mxu0
      %v2955 = vadd.f32 %v2866, %v2954
      %2956 = vmatprep.mubr.f32.mxu0 0.0
      %2957 = vmatmul.mubr.f32.gmra.mxu0 %v2687
      %v2958 = vpop.f32.mrf.mxu0
      %v2959 = vadd.f32 %v2870, %v2958
      %v2960 = vpop.f32.mrf.mxu0
      %v2961 = vadd.f32 %v2872, %v2960
      %2962 = vdwg.mxu0
      %v2963 = vadd.f32 %v2941, %v2943
      %2964 = vadd.xlane.f32.xlu0 %v2963
      %v2965 = vpop.xlane.xlu0 %2964
      %v2966 = vadd.f32 %v2947, %v2949
      %2967 = vadd.xlane.f32.xlu0 %v2966
      %v2968 = vpop.xlane.xlu0 %2967
      %v2969 = vadd.f32 %v2953, %v2955
      %2970 = vadd.xlane.f32.xlu0 %v2969
      %v2971 = vpop.xlane.xlu0 %2970
      %v2972 = vadd.f32 %v2959, %v2961
      %2973 = vadd.xlane.f32.xlu0 %v2972
      %v2974 = vpop.xlane.xlu0 %2973
      %v2975 = vmul.f32 %v2941, %v2941
      %v2976 = vmul.f32 %v2943, %v2943
      %v2977 = vmul.f32 %v2947, %v2947
      %v2978 = vmul.f32 %v2949, %v2949
      %v2979 = vmul.f32 %v2953, %v2953
      %v2980 = vmul.f32 %v2955, %v2955
      %v2981 = vmul.f32 %v2959, %v2959
      %v2982 = vmul.f32 %v2961, %v2961
      %v2983 = vadd.f32 %v2975, %v2976
      %2984 = vadd.xlane.f32.xlu0 %v2983
      %v2985 = vpop.xlane.xlu0 %2984
      %v2986 = vadd.f32 %v2977, %v2978
      %2987 = vadd.xlane.f32.xlu0 %v2986
      %v2988 = vpop.xlane.xlu0 %2987
      %v2989 = vadd.f32 %v2979, %v2980
      %2990 = vadd.xlane.f32.xlu0 %v2989
      %v2991 = vpop.xlane.xlu0 %2990
      %v2992 = vadd.f32 %v2981, %v2982
      %2993 = vadd.xlane.f32.xlu0 %v2992
      %v2994 = vpop.xlane.xlu0 %2993
      %v2995 = vld [vmem:[%s8] sm:$0xff]
      %v2996 = vld [vmem:[%s8 + $0x8] sm:$0xff]
      %v2997 = vld [vmem:[%s8 + $0x10] sm:$0xff]
      %v2998 = vld [vmem:[%s8 + $0x18] sm:$0xff]
      %v3000 = vsel %vm696, %v2995, 0
      %v3003 = vsel %vm696, %v2996, 0
      %v3006 = vsel %vm696, %v2997, 0
      %v3009 = vsel %vm696, %v2998, 0
      %3011 = vmatprep.subr.mxu0 0.0
      %3012 = vmatpush1.msra.mxu0 0.0
      %3013 = vmatprep.subr.mxu0 0.0
      %3014 = vmatpush1.msra.mxu0 0.0
      %3015 = vmatprep.subr.mxu0 0.0
      %3016 = vmatpush1.msra.mxu0 0.0
      %3017 = vmatprep.subr.mxu0 0.0
      %3018 = vmatpush1.msra.mxu0 0.0
      %3019 = vmatprep.subr.mxu0 0.0
      %3020 = vmatpush1.msra.mxu0 0.0
      %3021 = vmatprep.subr.mxu0 0.0
      %3022 = vmatpush1.msra.mxu0 0.0
      %3023 = vmatprep.subr.mxu0 0.0
      %3024 = vmatpush1.msra.mxu0 0.0
      %3025 = vmatprep.subr.mxu0 0.0
      %3026 = vmatpush1.msra.mxu0 0.0
      %3027 = vmatprep.subr.mxu0 0.0
      %3028 = vmatpush1.msra.mxu0 0.0
      %3029 = vmatprep.subr.mxu0 0.0
      %3030 = vmatpush1.msra.mxu0 0.0
      %3031 = vmatprep.subr.mxu0 0.0
      %3032 = vmatpush1.msra.mxu0 0.0
      %3033 = vmatprep.subr.mxu0 0.0
      %3034 = vmatpush1.msra.mxu0 0.0
      %3035 = vmatprep.subr.mxu0 0.0
      %3036 = vmatpush1.msra.mxu0 %v2974
      %3037 = vmatprep.subr.mxu0 0.0
      %3038 = vmatpush1.msra.mxu0 %v2971
      %3039 = vmatprep.subr.mxu0 0.0
      %3040 = vmatpush1.msra.mxu0 %v2968
      %3041 = vmatprep.subr.mxu0 0.0
      %3042 = vmatpush1.msra.mxu0 %v2965
      %3043 = vmatprep.subr.mxu0 0.0
      %3044 = vmatpush2.msra.mxu0 0.0
      %3045 = vmatprep.subr.mxu0 0.0
      %3046 = vmatpush2.msra.mxu0 0.0
      %3047 = vmatprep.subr.mxu0 0.0
      %3048 = vmatpush2.msra.mxu0 0.0
      %3049 = vmatprep.subr.mxu0 0.0
      %3050 = vmatpush2.msra.mxu0 0.0
      %3051 = vmatprep.subr.mxu0 0.0
      %3052 = vmatpush2.msra.mxu0 0.0
      %3053 = vmatprep.subr.mxu0 0.0
      %3054 = vmatpush2.msra.mxu0 0.0
      %3055 = vmatprep.subr.mxu0 0.0
      %3056 = vmatpush2.msra.mxu0 0.0
      %3057 = vmatprep.subr.mxu0 0.0
      %3058 = vmatpush2.msra.mxu0 0.0
      %3059 = vmatprep.subr.mxu0 0.0
      %3060 = vmatpush2.msra.mxu0 0.0
      %3061 = vmatprep.subr.mxu0 0.0
      %3062 = vmatpush2.msra.mxu0 0.0
      %3063 = vmatprep.subr.mxu0 0.0
      %3064 = vmatpush2.msra.mxu0 0.0
      %3065 = vmatprep.subr.mxu0 0.0
      %3066 = vmatpush2.msra.mxu0 0.0
      %3067 = vmatprep.subr.mxu0 0.0
      %3068 = vmatpush2.msra.mxu0 0.0
      %3069 = vmatprep.subr.mxu0 0.0
      %3070 = vmatpush2.msra.mxu0 0.0
      %3071 = vmatprep.subr.mxu0 0.0
      %3072 = vmatpush2.msra.mxu0 0.0
      %3073 = vmatprep.subr.mxu0 0.0
      %3074 = vmatpush2.msra.mxu0 0.0
      %3075 = vmatprep.mubr.f32.mxu0 0.0
      %3076 = vmatmul.mubr.f32.gmra.mxu0 %v3000
      %v3077 = vpop.f32.mrf.mxu0
      %v3078 = vadd.f32 0.0, %v3077
      %v3079 = vpop.f32.mrf.mxu0
      %3080 = vmatprep.mubr.f32.mxu0 0.0
      %3081 = vmatmul.mubr.f32.gmra.mxu0 %v3003
      %v3082 = vpop.f32.mrf.mxu0
      %v3083 = vadd.f32 0.0, %v3082
      %v3084 = vpop.f32.mrf.mxu0
      %3085 = vmatprep.mubr.f32.mxu0 0.0
      %3086 = vmatmul.mubr.f32.gmra.mxu0 %v3006
      %v3087 = vpop.f32.mrf.mxu0
      %v3088 = vadd.f32 0.0, %v3087
      %v3089 = vpop.f32.mrf.mxu0
      %3090 = vmatprep.mubr.f32.mxu0 0.0
      %3091 = vmatmul.mubr.f32.gmra.mxu0 %v3009
      %v3092 = vpop.f32.mrf.mxu0
      %v3093 = vadd.f32 0.0, %v3092
      %v3094 = vpop.f32.mrf.mxu0
      %3095 = vdwg.mxu0
      %3096 = vmatprep.subr.mxu0 0.0
      %3097 = vmatpush1.msra.mxu0 0.0
      %3098 = vmatprep.subr.mxu0 0.0
      %3099 = vmatpush1.msra.mxu0 0.0
      %3100 = vmatprep.subr.mxu0 0.0
      %3101 = vmatpush1.msra.mxu0 0.0
      %3102 = vmatprep.subr.mxu0 0.0
      %3103 = vmatpush1.msra.mxu0 0.0
      %3104 = vmatprep.subr.mxu0 0.0
      %3105 = vmatpush1.msra.mxu0 0.0
      %3106 = vmatprep.subr.mxu0 0.0
      %3107 = vmatpush1.msra.mxu0 0.0
      %3108 = vmatprep.subr.mxu0 0.0
      %3109 = vmatpush1.msra.mxu0 0.0
      %3110 = vmatprep.subr.mxu0 0.0
      %3111 = vmatpush1.msra.mxu0 0.0
      %3112 = vmatprep.subr.mxu0 0.0
      %3113 = vmatpush1.msra.mxu0 0.0
      %3114 = vmatprep.subr.mxu0 0.0
      %3115 = vmatpush1.msra.mxu0 0.0
      %3116 = vmatprep.subr.mxu0 0.0
      %3117 = vmatpush1.msra.mxu0 0.0
      %3118 = vmatprep.subr.mxu0 0.0
      %3119 = vmatpush1.msra.mxu0 0.0
      %3120 = vmatprep.subr.mxu0 0.0
      %3121 = vmatpush1.msra.mxu0 %v2994
      %3122 = vmatprep.subr.mxu0 0.0
      %3123 = vmatpush1.msra.mxu0 %v2991
      %3124 = vmatprep.subr.mxu0 0.0
      %3125 = vmatpush1.msra.mxu0 %v2988
      %3126 = vmatprep.subr.mxu0 0.0
      %3127 = vmatpush1.msra.mxu0 %v2985
      %3128 = vmatprep.subr.mxu0 0.0
      %3129 = vmatpush2.msra.mxu0 0.0
      %3130 = vmatprep.subr.mxu0 0.0
      %3131 = vmatpush2.msra.mxu0 0.0
      %3132 = vmatprep.subr.mxu0 0.0
      %3133 = vmatpush2.msra.mxu0 0.0
      %3134 = vmatprep.subr.mxu0 0.0
      %3135 = vmatpush2.msra.mxu0 0.0
      %3136 = vmatprep.subr.mxu0 0.0
      %3137 = vmatpush2.msra.mxu0 0.0
      %3138 = vmatprep.subr.mxu0 0.0
      %3139 = vmatpush2.msra.mxu0 0.0
      %3140 = vmatprep.subr.mxu0 0.0
      %3141 = vmatpush2.msra.mxu0 0.0
      %3142 = vmatprep.subr.mxu0 0.0
      %3143 = vmatpush2.msra.mxu0 0.0
      %3144 = vmatprep.subr.mxu0 0.0
      %3145 = vmatpush2.msra.mxu0 0.0
      %3146 = vmatprep.subr.mxu0 0.0
      %3147 = vmatpush2.msra.mxu0 0.0
      %3148 = vmatprep.subr.mxu0 0.0
      %3149 = vmatpush2.msra.mxu0 0.0
      %3150 = vmatprep.subr.mxu0 0.0
      %3151 = vmatpush2.msra.mxu0 0.0
      %3152 = vmatprep.subr.mxu0 0.0
      %3153 = vmatpush2.msra.mxu0 0.0
      %3154 = vmatprep.subr.mxu0 0.0
      %3155 = vmatpush2.msra.mxu0 0.0
      %3156 = vmatprep.subr.mxu0 0.0
      %3157 = vmatpush2.msra.mxu0 0.0
      %3158 = vmatprep.subr.mxu0 0.0
      %3159 = vmatpush2.msra.mxu0 0.0
      %3160 = vmatprep.mubr.f32.mxu0 0.0
      %3161 = vmatmul.mubr.f32.gmra.mxu0 %v3000
      %v3162 = vpop.f32.mrf.mxu0
      %v3163 = vadd.f32 0.0, %v3162
      %v3164 = vpop.f32.mrf.mxu0
      %3165 = vmatprep.mubr.f32.mxu0 0.0
      %3166 = vmatmul.mubr.f32.gmra.mxu0 %v3003
      %v3167 = vpop.f32.mrf.mxu0
      %v3168 = vadd.f32 0.0, %v3167
      %v3169 = vpop.f32.mrf.mxu0
      %3170 = vmatprep.mubr.f32.mxu0 0.0
      %3171 = vmatmul.mubr.f32.gmra.mxu0 %v3006
      %v3172 = vpop.f32.mrf.mxu0
      %v3173 = vadd.f32 0.0, %v3172
      %v3174 = vpop.f32.mrf.mxu0
      %3175 = vmatprep.mubr.f32.mxu0 0.0
      %3176 = vmatmul.mubr.f32.gmra.mxu0 %v3009
      %v3177 = vpop.f32.mrf.mxu0
      %v3178 = vadd.f32 0.0, %v3177
      %v3179 = vpop.f32.mrf.mxu0
      %3180 = vdwg.mxu0
      %v3181 = vmul.f32 %v3078, %v3078
      %v3182 = vmul.f32 %v3083, %v3083
      %v3183 = vmul.f32 %v3088, %v3088
      %v3184 = vmul.f32 %v3093, %v3093
      %v3185 = vsub.f32 %v3163, %v3181
      %v3186 = vsub.f32 %v3168, %v3182
      %v3187 = vsub.f32 %v3173, %v3183
      %v3188 = vsub.f32 %v3178, %v3184
      %v3189 = vmax.f32 %v3185, 0.0
      %v3190 = vmax.f32 %v3186, 0.0
      %v3191 = vmax.f32 %v3187, 0.0
      %v3192 = vmax.f32 %v3188, 0.0
      %v3193 = vadd.f32 %v3189, 1e-05
      %v3194 = vadd.f32 %v3190, 1e-05
      %v3195 = vadd.f32 %v3191, 1e-05
      %v3196 = vadd.f32 %v3192, 1e-05
      %v3197 = vrsqrt.pop %v3193
      %v3198 = vrsqrt.pop %v3194
      %v3199 = vrsqrt.pop %v3195
      %v3200 = vrsqrt.pop %v3196
      %v3201 = vld [vmem:[%s6] sm:$0xff]
      %v3202 = vld [vmem:[%s6 + $0x8] sm:$0xff]
      %v3203 = vld [vmem:[%s6 + $0x10] sm:$0xff]
      %v3204 = vld [vmem:[%s6 + $0x18] sm:$0xff]
      %v3205 = vmul.f32 %v3197, %v3201
      %v3206 = vmul.f32 %v3198, %v3202
      %v3207 = vmul.f32 %v3199, %v3203
      %v3208 = vmul.f32 %v3200, %v3204
      %v3209 = vld [vmem:[%s7] sm:$0xff]
      %v3210 = vld [vmem:[%s7 + $0x8] sm:$0xff]
      %v3211 = vld [vmem:[%s7 + $0x10] sm:$0xff]
      %v3212 = vld [vmem:[%s7 + $0x18] sm:$0xff]
      %v3213 = vmul.f32 %v3078, %v3205
      %v3214 = vmul.f32 %v3083, %v3206
      %v3215 = vmul.f32 %v3088, %v3207
      %v3216 = vmul.f32 %v3093, %v3208
      %v3217 = vsub.f32 %v3209, %v3213
      %v3218 = vsub.f32 %v3210, %v3214
      %v3219 = vsub.f32 %v3211, %v3215
      %v3220 = vsub.f32 %v3212, %v3216
      %3222 = vset.pattern.permute.xlu0 0
      %3223 = vperm.xlu0 %3222, %v3205
      %v3224 = vpop.permute.xlu0 %3223
      %3227 = vset.pattern.permute.xlu0 0
      %3228 = vperm.xlu0 %3227, %v3206
      %v3229 = vpop.permute.xlu0 %3228
      %3232 = vset.pattern.permute.xlu0 0
      %3233 = vperm.xlu0 %3232, %v3207
      %v3234 = vpop.permute.xlu0 %3233
      %3237 = vset.pattern.permute.xlu0 0
      %3238 = vperm.xlu0 %3237, %v3208
      %v3239 = vpop.permute.xlu0 %3238
      %v3241 = vmul.f32 %v2941, %v3224
      %v3242 = vmul.f32 %v2943, %v3224
      %v3243 = vmul.f32 %v2947, %v3229
      %v3244 = vmul.f32 %v2949, %v3229
      %v3245 = vmul.f32 %v2953, %v3234
      %v3246 = vmul.f32 %v2955, %v3234
      %v3247 = vmul.f32 %v2959, %v3239
      %v3248 = vmul.f32 %v2961, %v3239
      %3250 = vset.pattern.permute.xlu0 0
      %3251 = vperm.xlu0 %3250, %v3217
      %v3252 = vpop.permute.xlu0 %3251
      %3255 = vset.pattern.permute.xlu0 0
      %3256 = vperm.xlu0 %3255, %v3218
      %v3257 = vpop.permute.xlu0 %3256
      %3260 = vset.pattern.permute.xlu0 0
      %3261 = vperm.xlu0 %3260, %v3219
      %v3262 = vpop.permute.xlu0 %3261
      %3265 = vset.pattern.permute.xlu0 0
      %3266 = vperm.xlu0 %3265, %v3220
      %v3267 = vpop.permute.xlu0 %3266
      %v3269 = vadd.f32 %v3241, %v3252
      %v3270 = vadd.f32 %v3242, %v3252
      %v3271 = vadd.f32 %v3243, %v3257
      %v3272 = vadd.f32 %v3244, %v3257
      %v3273 = vadd.f32 %v3245, %v3262
      %v3274 = vadd.f32 %v3246, %v3262
      %v3275 = vadd.f32 %v3247, %v3267
      %v3276 = vadd.f32 %v3248, %v3267
      %v3277 = vmax.f32 %v3269, 0.0
      %v3278 = vmax.f32 %v3270, 0.0
      %v3279 = vmax.f32 %v3271, 0.0
      %v3280 = vmax.f32 %v3272, 0.0
      %v3281 = vmax.f32 %v3273, 0.0
      %v3282 = vmax.f32 %v3274, 0.0
      %v3283 = vmax.f32 %v3275, 0.0
      %v3284 = vmax.f32 %v3276, 0.0
      %3285 = vst [vmem:[%s332] sm:$0xff] %v3277
      %3286 = vst [vmem:[%s332 + $0x8] sm:$0xff] %v3278
      %3287 = vst [vmem:[%s332 + $0x10] sm:$0xff] %v3279
      %3288 = vst [vmem:[%s332 + $0x18] sm:$0xff] %v3280
      %3289 = vst [vmem:[%s332 + $0x20] sm:$0xff] %v3281
      %3290 = vst [vmem:[%s332 + $0x28] sm:$0xff] %v3282
      %3291 = vst [vmem:[%s332 + $0x30] sm:$0xff] %v3283
      %3292 = vst [vmem:[%s332 + $0x38] sm:$0xff] %v3284
      %p3293 = scmp.lt.s32.totalorder %s20, 1
      %s3294 = scalar_select %p3293, %s20, 1
      %s3295 = smul.addr %s3294, 8
      %s3296 = smul.addr %s3295, 8
      %s3297 = scalar_lea.vmem %s9, %s3296
      // Predicated region
      $region57: #{double_conv.1} parent=55 // pred_check
        %p3298 = pneg %p232
      $region58: #{double_conv.1} parent=55 // pred_check_branch
        %3300 = sbr.rel (%p3298) target = $region60
      $region59: #{double_conv.1} parent=55 // pred_region
        _
      $region60: #{double_conv.1} parent=55 // pred_fallthru
        _
    $region56: #{double_conv.1} parent=5 // pred_fallthru
      _
    %p3301 = scmp.le.s32.totalorder 2, %s15
    // Predicated region
    $region61: #{double_conv.1} parent=5 // pred_check
      %p3302 = pneg %p3301
    $region62: #{double_conv.1} parent=5 // pred_check_branch
      %3304 = sbr.rel (%p3302) target = $region64
    $region63: #{double_conv.1} parent=5 // pred_region
      %s3305 = ssub.s32 %s15, 2
      // Predicated region
      $region65: #{double_conv.1} parent=63 // pred_check
        %p3306 = pneg %p238
      $region66: #{double_conv.1} parent=63 // pred_check_branch
        %3308 = sbr.rel (%p3306) target = $region68
      $region67: #{double_conv.1} parent=63 // pred_region
        %p3309 = scmp.lt.s32.totalorder %s21, 1
        %s3310 = scalar_select %p3309, %s21, 1
        %s3311 = smul.addr %s3310, 8
        %s3312 = smul.addr %s3311, 8
        %s3313 = scalar_lea.vmem %s9, %s3312
      $region68: #{double_conv.1} parent=63 // pred_fallthru
        _
    $region64: #{double_conv.1} parent=5 // pred_fallthru
      _
  $region6: #{double_conv.1} parent=0 // loop_footer
    %s19 = sadd.s32 1, %s15
  $region7: #{double_conv.1} parent=0 // loop_footer_branch
    %14 = sbr.rel target = $region3
  $region8: #{double_conv.1} parent=0 // loop_exit
    _

</llo_original>
